<compile_context>
chip_gen: v5e
topology: v5e:2x2
jax: 0.10.0
libtpu: 0.0.40
codegen_flags: <defaults>
</compile_context>

<pallas_src>
import numpy as np
import jax
import jax.numpy as jnp
from jax import lax
from jax.experimental import pallas as pl
from jax.experimental.pallas import tpu as pltpu

LLM_HIDDEN = 1536          # llm_hidden_size
N_CLASSES = 10
CONV_OUT = 128             # conv channels == "128" in 47*128
CONV_K = 16
CONV_STRIDE = 16
SEQ_T = 47                 # conv output length == "47" in 47*128
SIG_LEN = SEQ_T * CONV_STRIDE   # 752 -> (752 - 16)/16 + 1 = 47
FLAT = CONV_OUT * SEQ_T    # 6016 = 47*128
H1 = 128                   # linear1 out


def adapter_kernel(patches_ref, cw_ref, cb_ref, w1_ref, b1_ref,
                   w2_ref, b2_ref, w3_ref, b3_ref, o_ref):
    """Single invocation: everything resident in VMEM, fused matmuls."""
    T = w1_ref.shape[0]                       # 47
    BP = patches_ref.shape[0] // T            # padded batch (multiple of 8)

    # FeatureEncoder: Conv1d(1,128,16,stride=16) + ReLU  ==  one patch matmul.
    feat = jnp.dot(patches_ref[...], cw_ref[...],
                   preferred_element_type=jnp.float32) + cb_ref[...]
    feat = jnp.maximum(feat, 0.0)                                  # (T*BP, 128) f32

    # linear1 (6016 -> 128): batched matmul over windows t, reduced over t.
    # Reshape is (8,128)-tile aligned in f32 (BP is a multiple of 8), then cast to bf16.
    feat3 = feat.reshape(T, BP, CONV_OUT).astype(w1_ref.dtype)     # (T, BP, 128) bf16
    part = lax.dot_general(
        feat3, w1_ref[...],
        dimension_numbers=(((2,), (1,)), ((0,), (0,))),
        preferred_element_type=jnp.float32)                        # (T, BP, 128) f32
    h1 = jnp.maximum(jnp.sum(part, axis=0) + b1_ref[...], 0.0)     # (BP, 128)

    # linear2 + softmax(dim=1)
    h2 = jnp.dot(h1, w2_ref[...],
                 preferred_element_type=jnp.float32) + b2_ref[...]  # (BP, 10)
    m = jnp.max(h2, axis=-1, keepdims=True)
    e = jnp.exp(h2 - m)
    p = e * pl.reciprocal(jnp.sum(e, axis=-1, keepdims=True), approx=True)

    # linear3 (10 -> 1536), cast to bfloat16
    out = jnp.dot(p, w3_ref[...],
                  preferred_element_type=jnp.float32) + b3_ref[...]  # (BP, 1536)
    o_ref[...] = out.astype(o_ref.dtype)


def alignment_adapter(x, params):
    """x: (B, 1, SIG_LEN) float32 -> (B, 1, LLM_HIDDEN) bfloat16."""
    B = x.shape[0]
    BP = max(8, ((B + 7) // 8) * 8)           # pad batch to full sublane tiles

    # ---- glue: re-layout inputs / weights for the kernel (plain JAX) ----
    # non-overlapping conv windows -> (T*BP, K), row t*BP + b; padded rows are zero.
    patches = x.reshape(B, SEQ_T, CONV_K)
    patches = jnp.pad(patches, ((0, BP - B), (0, 0), (0, 0)))
    patches2d = jnp.transpose(patches, (1, 0, 2)).reshape(SEQ_T * BP, CONV_K)
    # conv weight (128,1,16) -> (16,128); bias -> (1,128)
    cw = jnp.transpose(params["conv_w"].reshape(CONV_OUT, CONV_K), (1, 0))
    cb = params["conv_b"][None, :]
    # linear1 weight (128, 6016), torch feature order c*47+t -> (47, 128, 128) bf16
    w1_3 = jnp.transpose(params["w1"].reshape(H1, CONV_OUT, SEQ_T),
                         (2, 1, 0)).astype(jnp.bfloat16)
    b1 = params["b1"][None, :]
    w2 = jnp.transpose(params["w2"], (1, 0))      # (128, 10)
    b2 = params["b2"][None, :]
    w3 = jnp.transpose(params["w3"], (1, 0))      # (10, 1536)
    b3 = params["b3"][None, :]

    vmem = pl.BlockSpec(memory_space=pltpu.MemorySpace.VMEM)
    out = pl.pallas_call(
        adapter_kernel,
        out_shape=jax.ShapeDtypeStruct((BP, LLM_HIDDEN), jnp.bfloat16),
        in_specs=[vmem] * 9,
        out_specs=vmem,
    )(patches2d, cw, cb, w1_3, b1, w2, b2, w3, b3)

    # drop batch padding; x.reshape(x.size(0), -1, llm_hidden_size): one "token" per sample
    return out[:B].reshape(B, 1, LLM_HIDDEN)


def init_params(key):
    """Deterministic synthetic parameters, PyTorch weight conventions."""
    ks = jax.random.split(key, 7)
    return dict(
        conv_w=jax.random.normal(ks[0], (CONV_OUT, 1, CONV_K), jnp.float32) * 0.05,
        conv_b=jax.random.normal(ks[1], (CONV_OUT,), jnp.float32) * 0.05,
        w1=jax.random.normal(ks[2], (H1, FLAT), jnp.float32) * 0.02,        # linear1.weight
        b1=jax.random.normal(ks[3], (H1,), jnp.float32) * 0.02,
        w2=jax.random.normal(ks[4], (N_CLASSES, H1), jnp.float32) * 0.05,   # linear2.weight
        b2=jax.random.normal(ks[5], (N_CLASSES,), jnp.float32) * 0.05,
        w3=jax.random.normal(ks[6], (LLM_HIDDEN, N_CLASSES), jnp.float32) * 0.05,  # linear3.weight
        b3=jnp.zeros((LLM_HIDDEN,), jnp.float32),
    )


def torch_reference(x, p):
    """Pure-JAX mirror of the PyTorch forward (NCL conv, channel-major flatten)."""
    B = x.shape[0]
    patches = x.reshape(B, SEQ_T, CONV_K)
    cw = p["conv_w"].reshape(CONV_OUT, CONV_K)
    feat = jnp.einsum("btk,ck->bct", patches, cw) + p["conv_b"][None, :, None]
    feat = jnp.maximum(feat, 0.0)                       # (B, 128, 47)  == NCL
    flat = feat.reshape(B, FLAT)                        # == x.view(-1, 47*128)
    h1 = jnp.maximum(flat @ p["w1"].T + p["b1"], 0.0)
    h2 = h1 @ p["w2"].T + p["b2"]
    prob = jax.nn.softmax(h2, axis=1)
    out = prob @ p["w3"].T + p["b3"]
    return out.reshape(B, 1, LLM_HIDDEN).astype(jnp.bfloat16)


if __name__ == "__main__":
    key = jax.random.PRNGKey(0)
    kx, kp = jax.random.split(key)
    B = 2
    x = jax.random.normal(kx, (B, 1, SIG_LEN), jnp.float32)
    params = init_params(kp)

    out = alignment_adapter(x, params)
    out = jax.block_until_ready(out)

    ref = torch_reference(x, params)
    assert out.shape == (B, 1, LLM_HIDDEN), out.shape
    assert out.dtype == jnp.bfloat16, out.dtype
    np.testing.assert_allclose(np.asarray(out, dtype=np.float32),
                               np.asarray(ref, dtype=np.float32),
                               rtol=2e-2, atol=2e-2)
    print("KERNEL_OK")
</pallas_src>

<mosaic_0001>
module attributes {stable_mosaic.version = 11 : i64} {
  func.func @adapter_kernel(%arg0: memref<376x16xf32, #tpu.memory_space<vmem>>, %arg1: memref<16x128xf32, #tpu.memory_space<vmem>>, %arg2: memref<1x128xf32, #tpu.memory_space<vmem>>, %arg3: memref<47x128x128xbf16, #tpu.memory_space<vmem>>, %arg4: memref<1x128xf32, #tpu.memory_space<vmem>>, %arg5: memref<128x10xf32, #tpu.memory_space<vmem>>, %arg6: memref<1x10xf32, #tpu.memory_space<vmem>>, %arg7: memref<10x1536xf32, #tpu.memory_space<vmem>>, %arg8: memref<1x1536xf32, #tpu.memory_space<vmem>>, %arg9: memref<8x1536xbf16, #tpu.memory_space<vmem>>) attributes {dimension_semantics = [], scalar_prefetch = 0 : i64, scratch_operands = 0 : i64, tpu.core_type = #tpu.core_type<tc>} {
    %c0 = arith.constant 0 : index
    %c0_0 = arith.constant 0 : index
    %0 = vector.load %arg0[%c0, %c0_0] : memref<376x16xf32, #tpu.memory_space<vmem>>, vector<376x16xf32>
    %c0_1 = arith.constant 0 : index
    %c0_2 = arith.constant 0 : index
    %1 = vector.load %arg1[%c0_1, %c0_2] : memref<16x128xf32, #tpu.memory_space<vmem>>, vector<16x128xf32>
    %cst = arith.constant dense<0.000000e+00> : vector<376x128xf32>
    %2 = tpu.matmul %0, %1, %cst {dimension_numbers = #tpu.dot_dimension_numbers<[1], [0], [0], [1], [0, 0, 1, 1], [], []>} : vector<376x16xf32>, vector<16x128xf32>, vector<376x128xf32> -> vector<376x128xf32>
    %c0_3 = arith.constant 0 : index
    %c0_4 = arith.constant 0 : index
    %3 = vector.load %arg2[%c0_3, %c0_4] : memref<1x128xf32, #tpu.memory_space<vmem>>, vector<1x128xf32>
    %4 = vector.broadcast %3 : vector<1x128xf32> to vector<376x128xf32>
    %5 = arith.addf %2, %4 : vector<376x128xf32>
    %cst_5 = arith.constant 0.000000e+00 : f32
    %6 = vector.broadcast %cst_5 : f32 to vector<376x128xf32>
    %7 = arith.maximumf %5, %6 : vector<376x128xf32>
    %8 = vector.shape_cast %7 : vector<376x128xf32> to vector<47x8x128xf32>
    %9 = arith.truncf %8 : vector<47x8x128xf32> to vector<47x8x128xbf16>
    %c0_6 = arith.constant 0 : index
    %c0_7 = arith.constant 0 : index
    %c0_8 = arith.constant 0 : index
    %10 = vector.load %arg3[%c0_6, %c0_7, %c0_8] : memref<47x128x128xbf16, #tpu.memory_space<vmem>>, vector<47x128x128xbf16>
    %cst_9 = arith.constant dense<0.000000e+00> : vector<47x8x128xf32>
    %11 = tpu.matmul %9, %10, %cst_9 {dimension_numbers = #tpu.dot_dimension_numbers<[2], [1], [1], [2], [0, 0, 0, 1, 1, 2], [0], [0]>} : vector<47x8x128xbf16>, vector<47x128x128xbf16>, vector<47x8x128xf32> -> vector<47x8x128xf32>
    %cst_10 = arith.constant dense<0.000000e+00> : vector<8x128xf32>
    %12 = vector.multi_reduction <add>, %11, %cst_10 [0] : vector<47x8x128xf32> to vector<8x128xf32>
    %c0_11 = arith.constant 0 : index
    %c0_12 = arith.constant 0 : index
    %13 = vector.load %arg4[%c0_11, %c0_12] : memref<1x128xf32, #tpu.memory_space<vmem>>, vector<1x128xf32>
    %14 = vector.broadcast %13 : vector<1x128xf32> to vector<8x128xf32>
    %15 = arith.addf %12, %14 : vector<8x128xf32>
    %cst_13 = arith.constant 0.000000e+00 : f32
    %16 = vector.broadcast %cst_13 : f32 to vector<8x128xf32>
    %17 = arith.maximumf %15, %16 : vector<8x128xf32>
    %c0_14 = arith.constant 0 : index
    %c0_15 = arith.constant 0 : index
    %18 = vector.load %arg5[%c0_14, %c0_15] : memref<128x10xf32, #tpu.memory_space<vmem>>, vector<128x10xf32>
    %cst_16 = arith.constant dense<0.000000e+00> : vector<8x10xf32>
    %19 = tpu.matmul %17, %18, %cst_16 {dimension_numbers = #tpu.dot_dimension_numbers<[1], [0], [0], [1], [0, 0, 1, 1], [], []>} : vector<8x128xf32>, vector<128x10xf32>, vector<8x10xf32> -> vector<8x10xf32>
    %c0_17 = arith.constant 0 : index
    %c0_18 = arith.constant 0 : index
    %20 = vector.load %arg6[%c0_17, %c0_18] : memref<1x10xf32, #tpu.memory_space<vmem>>, vector<1x10xf32>
    %21 = vector.broadcast %20 : vector<1x10xf32> to vector<8x10xf32>
    %22 = arith.addf %19, %21 : vector<8x10xf32>
    %cst_19 = arith.constant dense<0xFF800000> : vector<8xf32>
    %23 = vector.multi_reduction <maximumf>, %22, %cst_19 [1] : vector<8x10xf32> to vector<8xf32>
    %24 = vector.shape_cast %23 : vector<8xf32> to vector<8x1xf32>
    %25 = vector.broadcast %24 : vector<8x1xf32> to vector<8x10xf32>
    %26 = arith.subf %22, %25 : vector<8x10xf32>
    %27 = math.exp %26 : vector<8x10xf32>
    %cst_20 = arith.constant dense<0.000000e+00> : vector<8xf32>
    %28 = vector.multi_reduction <add>, %27, %cst_20 [1] : vector<8x10xf32> to vector<8xf32>
    %29 = vector.shape_cast %28 : vector<8xf32> to vector<8x1xf32>
    %30 = tpu.reciprocal %29 {approx = true} : vector<8x1xf32> -> vector<8x1xf32>
    %31 = vector.broadcast %30 : vector<8x1xf32> to vector<8x10xf32>
    %32 = arith.mulf %27, %31 : vector<8x10xf32>
    %c0_21 = arith.constant 0 : index
    %c0_22 = arith.constant 0 : index
    %33 = vector.load %arg7[%c0_21, %c0_22] : memref<10x1536xf32, #tpu.memory_space<vmem>>, vector<10x1536xf32>
    %cst_23 = arith.constant dense<0.000000e+00> : vector<8x1536xf32>
    %34 = tpu.matmul %32, %33, %cst_23 {dimension_numbers = #tpu.dot_dimension_numbers<[1], [0], [0], [1], [0, 0, 1, 1], [], []>} : vector<8x10xf32>, vector<10x1536xf32>, vector<8x1536xf32> -> vector<8x1536xf32>
    %c0_24 = arith.constant 0 : index
    %c0_25 = arith.constant 0 : index
    %35 = vector.load %arg8[%c0_24, %c0_25] : memref<1x1536xf32, #tpu.memory_space<vmem>>, vector<1x1536xf32>
    %36 = vector.broadcast %35 : vector<1x1536xf32> to vector<8x1536xf32>
    %37 = arith.addf %34, %36 : vector<8x1536xf32>
    %38 = arith.truncf %37 : vector<8x1536xf32> to vector<8x1536xbf16>
    %c0_26 = arith.constant 0 : index
    %c0_27 = arith.constant 0 : index
    %39 = vector.load %arg9[%c0_26, %c0_27] : memref<8x1536xbf16, #tpu.memory_space<vmem>>, vector<8x1536xbf16>
    tpu.vector_store %arg9[%c0_26, %c0_27], %38 {strides = array<i32>} : memref<8x1536xbf16, #tpu.memory_space<vmem>>, vector<8x1536xbf16>,
    return
  }
}

</mosaic_0001>

<llo_original>
// kernel: tpu_custom_call.1
$region0: #{tpu_custom_call.1}
  #allocation0 [shape = 'u32[]', space=smem, size = 0x4, offset = 0x4, fixed_abs, tag = 'smem constant byte address 0x4 - core index']
  #allocation1 [shape = 'u32[72,128]{1,0:T(1,128)}', space=vmem, size = 0x9000, scoped, tag = 'internal scratch']
  %s0 = inlined_call_operand.vmem [shape: f32[376,16], index: 0, kind: input, shape index: {}]
  %s1 = inlined_call_operand.hbm [shape: f32[16,128], index: 1, kind: input, shape index: {}]
  %s2 = inlined_call_operand.hbm [shape: f32[1,128], index: 2, kind: input, shape index: {}]
  %s3 = inlined_call_operand.hbm [shape: bf16[47,128,128], index: 3, kind: input, shape index: {}]
  %s4 = inlined_call_operand.hbm [shape: f32[1,128], index: 4, kind: input, shape index: {}]
  %s5 = inlined_call_operand.vmem [shape: f32[128,10], index: 5, kind: input, shape index: {}]
  %s6 = inlined_call_operand.hbm [shape: f32[1,10], index: 6, kind: input, shape index: {}]
  %s7 = inlined_call_operand.hbm [shape: f32[10,1536], index: 7, kind: input, shape index: {}]
  %s8 = inlined_call_operand.hbm [shape: f32[1,1536], index: 8, kind: input, shape index: {}]
  %s9 = inlined_call_operand.hbm [shape: bf16[8,1536], index: 9, kind: output, shape index: {}]
  %s10 = sld [smem:[#allocation0]]
  $region74: #{tpu_custom_call.1} parent=0
    _
  %s12 = ssub.s32 1, %s10
  %s13 = scalar_select 0, %s12, %s10
  $region1: #{tpu_custom_call.1} parent=0
    #allocation2 [shape = 'u8[8192]{0}', space=vmem, size = 0x2000, scoped, tag = 'input window, operand 1, single buffered']
    #allocation3 [shape = 's32[1]{0}', space=sflag, size = 0x4, scoped, tag = 'scoped memory for tpu_custom_call.1']
    #allocation4 [shape = 's32[1]{0}', space=sflag, size = 0x4, scoped, tag = 'scoped memory for tpu_custom_call.1']
    #allocation5 [shape = 'u8[512]{0}', space=vmem, size = 0x400, scoped, tag = 'input window, operand 2, single buffered']
    #allocation6 [shape = 's32[1]{0}', space=sflag, size = 0x4, scoped, tag = 'scoped memory for tpu_custom_call.1']
    #allocation7 [shape = 'u8[1540096]{0}', space=vmem, size = 0x178000, scoped, tag = 'input window, operand 3, single buffered']
    #allocation8 [shape = 'u8[512]{0}', space=vmem, size = 0x400, scoped, tag = 'input window, operand 4, single buffered']
    #allocation9 [shape = 's32[1]{0}', space=sflag, size = 0x4, scoped, tag = 'scoped memory for tpu_custom_call.1']
    #allocation10 [shape = 'u8[512]{0}', space=vmem, size = 0x400, scoped, tag = 'input window, operand 6, single buffered']
    #allocation11 [shape = 'u8[98304]{0}', space=vmem, size = 0x18000, scoped, tag = 'input window, operand 7, single buffered']
    #allocation12 [shape = 's32[1]{0}', space=sflag, size = 0x4, scoped, tag = 'scoped memory for tpu_custom_call.1']
    #allocation13 [shape = 'u8[6144]{0}', space=vmem, size = 0x1800, scoped, tag = 'input window, operand 8, single buffered']
    #allocation14 [shape = 'u8[24576]{0}', space=vmem, size = 0x6000, scoped, tag = 'output window, operand 0, single buffered']
    %14 = vsyncpa [#allocation3], 0
    %15 = vsyncpa [#allocation6], 0
    %16 = vsyncpa [#allocation9], 0
    %17 = vsyncpa [#allocation12], 0
    %18 = vsyncpa [#allocation4], 0
    // Predicated region
    $region2: #{tpu_custom_call.1} parent=1 // pred_check
      _
    $region3: #{tpu_custom_call.1} parent=1 // pred_check_branch
      %20 = sbr.rel (0) target = $region5
    $region4: #{tpu_custom_call.1} parent=1 // pred_region
      _
    $region5: #{tpu_custom_call.1} parent=1 // pred_fallthru
      _
    // Predicated region
    $region6: #{tpu_custom_call.1} parent=1 // pred_check
      _
    $region7: #{tpu_custom_call.1} parent=1 // pred_check_branch
      %22 = sbr.rel (0) target = $region9
    $region8: #{tpu_custom_call.1} parent=1 // pred_region
      %24 = vsyncadd [#allocation3], 0
      %s25 = sshll.u32 %s1, 4
      %s26 = int_to_ptr.hbm [resolvable:$true] %s25
      %s27 = sshll.u32 [#allocation2], 4
      %s28 = int_to_ptr.vmem [resolvable:$true] %s27
      %33 = dma.hbm_to_vmem [thread:$0]  %s26, 256, %s28, [#allocation3], 128, 128, 8
    $region9: #{tpu_custom_call.1} parent=1 // pred_fallthru
      _
    // Predicated region
    $region10: #{tpu_custom_call.1} parent=1 // pred_check
      _
    $region11: #{tpu_custom_call.1} parent=1 // pred_check_branch
      %35 = sbr.rel (0) target = $region13
    $region12: #{tpu_custom_call.1} parent=1 // pred_region
      %37 = vsyncadd [#allocation6], 0
      %s39 = sshll.u32 %s2, 4
      %s40 = int_to_ptr.hbm [resolvable:$true] %s39
      %s41 = sshll.u32 [#allocation5], 4
      %s42 = int_to_ptr.vmem [resolvable:$true] %s41
      %44 = dma.hbm_to_vmem [thread:$0]  %s40, 16, %s42, [#allocation6]
    $region13: #{tpu_custom_call.1} parent=1 // pred_fallthru
      _
    // Predicated region
    $region14: #{tpu_custom_call.1} parent=1 // pred_check
      _
    $region15: #{tpu_custom_call.1} parent=1 // pred_check_branch
      %46 = sbr.rel (0) target = $region17
    $region16: #{tpu_custom_call.1} parent=1 // pred_region
      %48 = vsyncadd [#allocation6], 0
      %s49 = sshll.u32 %s3, 4
      %s50 = int_to_ptr.hbm [resolvable:$true] %s49
      %s51 = sshll.u32 [#allocation7], 4
      %s52 = int_to_ptr.vmem [resolvable:$true] %s51
      %57 = dma.hbm_to_vmem [thread:$0]  %s50, 48128, %s52, [#allocation6], 64, 64, 4
    $region17: #{tpu_custom_call.1} parent=1 // pred_fallthru
      _
    // Predicated region
    $region18: #{tpu_custom_call.1} parent=1 // pred_check
      _
    $region19: #{tpu_custom_call.1} parent=1 // pred_check_branch
      %59 = sbr.rel (0) target = $region21
    $region20: #{tpu_custom_call.1} parent=1 // pred_region
      %61 = vsyncadd [#allocation9], 0
      %s63 = sshll.u32 %s4, 4
      %s64 = int_to_ptr.hbm [resolvable:$true] %s63
      %s65 = sshll.u32 [#allocation8], 4
      %s66 = int_to_ptr.vmem [resolvable:$true] %s65
      %68 = dma.hbm_to_vmem [thread:$0]  %s64, 16, %s66, [#allocation9]
    $region21: #{tpu_custom_call.1} parent=1 // pred_fallthru
      _
    // Predicated region
    $region22: #{tpu_custom_call.1} parent=1 // pred_check
      _
    $region23: #{tpu_custom_call.1} parent=1 // pred_check_branch
      %70 = sbr.rel (0) target = $region25
    $region24: #{tpu_custom_call.1} parent=1 // pred_region
      _
    $region25: #{tpu_custom_call.1} parent=1 // pred_fallthru
      _
    // Predicated region
    $region26: #{tpu_custom_call.1} parent=1 // pred_check
      _
    $region27: #{tpu_custom_call.1} parent=1 // pred_check_branch
      %72 = sbr.rel (0) target = $region29
    $region28: #{tpu_custom_call.1} parent=1 // pred_region
      %74 = vsyncadd [#allocation9], 0
      %s76 = sshll.u32 %s6, 4
      %s77 = int_to_ptr.hbm [resolvable:$true] %s76
      %s78 = sshll.u32 [#allocation10], 4
      %s79 = int_to_ptr.vmem [resolvable:$true] %s78
      %81 = dma.hbm_to_vmem [thread:$0]  %s77, 16, %s79, [#allocation9]
    $region29: #{tpu_custom_call.1} parent=1 // pred_fallthru
      _
    // Predicated region
    $region30: #{tpu_custom_call.1} parent=1 // pred_check
      _
    $region31: #{tpu_custom_call.1} parent=1 // pred_check_branch
      %83 = sbr.rel (0) target = $region33
    $region32: #{tpu_custom_call.1} parent=1 // pred_region
      %85 = vsyncadd [#allocation12], 0
      %s86 = sshll.u32 %s7, 4
      %s87 = int_to_ptr.hbm [resolvable:$true] %s86
      %s88 = sshll.u32 [#allocation11], 4
      %s89 = int_to_ptr.vmem [resolvable:$true] %s88
      %94 = dma.hbm_to_vmem [thread:$0]  %s87, 3072, %s89, [#allocation12], 1536, 1536, 96
    $region33: #{tpu_custom_call.1} parent=1 // pred_fallthru
      _
    // Predicated region
    $region34: #{tpu_custom_call.1} parent=1 // pred_check
      _
    $region35: #{tpu_custom_call.1} parent=1 // pred_check_branch
      %96 = sbr.rel (0) target = $region37
    $region36: #{tpu_custom_call.1} parent=1 // pred_region
      %98 = vsyncadd [#allocation12], 0
      %s100 = sshll.u32 %s8, 4
      %s101 = int_to_ptr.hbm [resolvable:$true] %s100
      %s102 = sshll.u32 [#allocation13], 4
      %s103 = int_to_ptr.vmem [resolvable:$true] %s102
      %105 = dma.hbm_to_vmem [thread:$0]  %s101, 192, %s103, [#allocation12]
    $region37: #{tpu_custom_call.1} parent=1 // pred_fallthru
      _
    // Predicated region
    $region38: #{tpu_custom_call.1} parent=1 // pred_check
      _
    $region39: #{tpu_custom_call.1} parent=1 // pred_check_branch
      %107 = sbr.rel (0) target = $region41
    $region40: #{tpu_custom_call.1} parent=1 // pred_region
      %109 = dma.done [#allocation3], 256
    $region41: #{tpu_custom_call.1} parent=1 // pred_fallthru
      _
    // Predicated region
    $region42: #{tpu_custom_call.1} parent=1 // pred_check
      _
    $region43: #{tpu_custom_call.1} parent=1 // pred_check_branch
      %111 = sbr.rel (0) target = $region45
    $region44: #{tpu_custom_call.1} parent=1 // pred_region
      %113 = dma.done [#allocation6], 16
    $region45: #{tpu_custom_call.1} parent=1 // pred_fallthru
      _
    // Predicated region
    $region46: #{tpu_custom_call.1} parent=1 // pred_check
      _
    $region47: #{tpu_custom_call.1} parent=1 // pred_check_branch
      %115 = sbr.rel (0) target = $region49
    $region48: #{tpu_custom_call.1} parent=1 // pred_region
      %117 = dma.done [#allocation6], 48128
    $region49: #{tpu_custom_call.1} parent=1 // pred_fallthru
      _
    // Predicated region
    $region50: #{tpu_custom_call.1} parent=1 // pred_check
      _
    $region51: #{tpu_custom_call.1} parent=1 // pred_check_branch
      %119 = sbr.rel (0) target = $region53
    $region52: #{tpu_custom_call.1} parent=1 // pred_region
      %121 = dma.done [#allocation9], 16
    $region53: #{tpu_custom_call.1} parent=1 // pred_fallthru
      _
    // Predicated region
    $region54: #{tpu_custom_call.1} parent=1 // pred_check
      _
    $region55: #{tpu_custom_call.1} parent=1 // pred_check_branch
      %123 = sbr.rel (0) target = $region57
    $region56: #{tpu_custom_call.1} parent=1 // pred_region
      %125 = dma.done [#allocation9], 16
    $region57: #{tpu_custom_call.1} parent=1 // pred_fallthru
      _
    // Predicated region
    $region58: #{tpu_custom_call.1} parent=1 // pred_check
      _
    $region59: #{tpu_custom_call.1} parent=1 // pred_check_branch
      %127 = sbr.rel (0) target = $region61
    $region60: #{tpu_custom_call.1} parent=1 // pred_region
      %129 = dma.done [#allocation12], 3072
    $region61: #{tpu_custom_call.1} parent=1 // pred_fallthru
      _
    // Predicated region
    $region62: #{tpu_custom_call.1} parent=1 // pred_check
      _
    $region63: #{tpu_custom_call.1} parent=1 // pred_check_branch
      %131 = sbr.rel (0) target = $region65
    $region64: #{tpu_custom_call.1} parent=1 // pred_region
      %133 = dma.done [#allocation12], 192
    $region65: #{tpu_custom_call.1} parent=1 // pred_fallthru
      _
    %v134 = vld [vmem:[%s0] sm:$0xff]
    %v135 = vld [vmem:[%s0 + $0x8] sm:$0xff]
    %v136 = vld [vmem:[%s0 + $0x10] sm:$0xff]
    %v137 = vld [vmem:[%s0 + $0x18] sm:$0xff]
    %v138 = vld [vmem:[%s0 + $0x20] sm:$0xff]
    %v139 = vld [vmem:[%s0 + $0x28] sm:$0xff]
    %v140 = vld [vmem:[%s0 + $0x30] sm:$0xff]
    %v141 = vld [vmem:[%s0 + $0x38] sm:$0xff]
    %v142 = vld [vmem:[%s0 + $0x40] sm:$0xff]
    %v143 = vld [vmem:[%s0 + $0x48] sm:$0xff]
    %v144 = vld [vmem:[%s0 + $0x50] sm:$0xff]
    %v145 = vld [vmem:[%s0 + $0x58] sm:$0xff]
    %v146 = vld [vmem:[%s0 + $0x60] sm:$0xff]
    %v147 = vld [vmem:[%s0 + $0x68] sm:$0xff]
    %v148 = vld [vmem:[%s0 + $0x70] sm:$0xff]
    %v149 = vld [vmem:[%s0 + $0x78] sm:$0xff]
    %v150 = vld [vmem:[%s0 + $0x80] sm:$0xff]
    %v151 = vld [vmem:[%s0 + $0x88] sm:$0xff]
    %v152 = vld [vmem:[%s0 + $0x90] sm:$0xff]
    %v153 = vld [vmem:[%s0 + $0x98] sm:$0xff]
    %v154 = vld [vmem:[%s0 + $0xa0] sm:$0xff]
    %v155 = vld [vmem:[%s0 + $0xa8] sm:$0xff]
    %v156 = vld [vmem:[%s0 + $0xb0] sm:$0xff]
    %v157 = vld [vmem:[%s0 + $0xb8] sm:$0xff]
    %v158 = vld [vmem:[%s0 + $0xc0] sm:$0xff]
    %v159 = vld [vmem:[%s0 + $0xc8] sm:$0xff]
    %v160 = vld [vmem:[%s0 + $0xd0] sm:$0xff]
    %v161 = vld [vmem:[%s0 + $0xd8] sm:$0xff]
    %v162 = vld [vmem:[%s0 + $0xe0] sm:$0xff]
    %v163 = vld [vmem:[%s0 + $0xe8] sm:$0xff]
    %v164 = vld [vmem:[%s0 + $0xf0] sm:$0xff]
    %v165 = vld [vmem:[%s0 + $0xf8] sm:$0xff]
    %v166 = vld [vmem:[%s0 + $0x100] sm:$0xff]
    %v167 = vld [vmem:[%s0 + $0x108] sm:$0xff]
    %v168 = vld [vmem:[%s0 + $0x110] sm:$0xff]
    %v169 = vld [vmem:[%s0 + $0x118] sm:$0xff]
    %v170 = vld [vmem:[%s0 + $0x120] sm:$0xff]
    %v171 = vld [vmem:[%s0 + $0x128] sm:$0xff]
    %v172 = vld [vmem:[%s0 + $0x130] sm:$0xff]
    %v173 = vld [vmem:[%s0 + $0x138] sm:$0xff]
    %v174 = vld [vmem:[%s0 + $0x140] sm:$0xff]
    %v175 = vld [vmem:[%s0 + $0x148] sm:$0xff]
    %v176 = vld [vmem:[%s0 + $0x150] sm:$0xff]
    %v177 = vld [vmem:[%s0 + $0x158] sm:$0xff]
    %v178 = vld [vmem:[%s0 + $0x160] sm:$0xff]
    %v179 = vld [vmem:[%s0 + $0x168] sm:$0xff]
    %v180 = vld [vmem:[%s0 + $0x170] sm:$0xff]
    %v181 = vld [vmem:[#allocation2] sm:$0xff]
    %v182 = vld [vmem:[#allocation2 + $0x8] sm:$0xff]
    %v183 = vld [vmem:[#allocation5] sm:$0x1]
    %v185 = vperm.slane %v183, 0
    %vm187 = vcmask 130048
    %v189 = vsel %vm187, %v134, 0
    %v192 = vsel %vm187, %v135, 0
    %v195 = vsel %vm187, %v136, 0
    %v198 = vsel %vm187, %v137, 0
    %v201 = vsel %vm187, %v138, 0
    %v204 = vsel %vm187, %v139, 0
    %v207 = vsel %vm187, %v140, 0
    %v210 = vsel %vm187, %v141, 0
    %v213 = vsel %vm187, %v142, 0
    %v216 = vsel %vm187, %v143, 0
    %v219 = vsel %vm187, %v144, 0
    %v222 = vsel %vm187, %v145, 0
    %v225 = vsel %vm187, %v146, 0
    %v228 = vsel %vm187, %v147, 0
    %v231 = vsel %vm187, %v148, 0
    %v234 = vsel %vm187, %v149, 0
    %v237 = vsel %vm187, %v150, 0
    %v240 = vsel %vm187, %v151, 0
    %v243 = vsel %vm187, %v152, 0
    %v246 = vsel %vm187, %v153, 0
    %v249 = vsel %vm187, %v154, 0
    %v252 = vsel %vm187, %v155, 0
    %v255 = vsel %vm187, %v156, 0
    %v258 = vsel %vm187, %v157, 0
    %v261 = vsel %vm187, %v158, 0
    %v264 = vsel %vm187, %v159, 0
    %v267 = vsel %vm187, %v160, 0
    %v270 = vsel %vm187, %v161, 0
    %v273 = vsel %vm187, %v162, 0
    %v276 = vsel %vm187, %v163, 0
    %v279 = vsel %vm187, %v164, 0
    %v282 = vsel %vm187, %v165, 0
    %v285 = vsel %vm187, %v166, 0
    %v288 = vsel %vm187, %v167, 0
    %v291 = vsel %vm187, %v168, 0
    %v294 = vsel %vm187, %v169, 0
    %v297 = vsel %vm187, %v170, 0
    %v300 = vsel %vm187, %v171, 0
    %v303 = vsel %vm187, %v172, 0
    %v306 = vsel %vm187, %v173, 0
    %v309 = vsel %vm187, %v174, 0
    %v312 = vsel %vm187, %v175, 0
    %v315 = vsel %vm187, %v176, 0
    %v318 = vsel %vm187, %v177, 0
    %v321 = vsel %vm187, %v178, 0
    %v324 = vsel %vm187, %v179, 0
    %v327 = vsel %vm187, %v180, 0
    %329 = vmatpush.msra.mxu0 0.0
    %330 = vmatpush.msra.mxu0 0.0
    %331 = vmatpush.msra.mxu0 0.0
    %332 = vmatpush.msra.mxu0 0.0
    %333 = vmatpush.msra.mxu0 0.0
    %334 = vmatpush.msra.mxu0 0.0
    %335 = vmatpush.msra.mxu0 0.0
    %336 = vmatpush.msra.mxu0 0.0
    %337 = vmatpush.msra.mxu0 0.0
    %338 = vmatpush.msra.mxu0 0.0
    %339 = vmatpush.msra.mxu0 0.0
    %340 = vmatpush.msra.mxu0 0.0
    %341 = vmatpush.msra.mxu0 0.0
    %342 = vmatpush.msra.mxu0 0.0
    %343 = vmatpush.msra.mxu0 %v182
    %344 = vmatpush.msra.mxu0 %v181
    %345 = vmatmul.f32.gmra.mxu0 %v189
    %v346 = vpop.f32.mrf.mxu0
    %v347 = vadd.f32 %v185, %v346
    %348 = vmatmul.f32.gmra.mxu0 %v192
    %v349 = vpop.f32.mrf.mxu0
    %v350 = vadd.f32 %v185, %v349
    %351 = vmatmul.f32.gmra.mxu0 %v195
    %v352 = vpop.f32.mrf.mxu0
    %v353 = vadd.f32 %v185, %v352
    %354 = vmatmul.f32.gmra.mxu0 %v198
    %v355 = vpop.f32.mrf.mxu0
    %v356 = vadd.f32 %v185, %v355
    %357 = vmatmul.f32.gmra.mxu0 %v201
    %v358 = vpop.f32.mrf.mxu0
    %v359 = vadd.f32 %v185, %v358
    %360 = vmatmul.f32.gmra.mxu0 %v204
    %v361 = vpop.f32.mrf.mxu0
    %v362 = vadd.f32 %v185, %v361
    %363 = vmatmul.f32.gmra.mxu0 %v207
    %v364 = vpop.f32.mrf.mxu0
    %v365 = vadd.f32 %v185, %v364
    %366 = vmatmul.f32.gmra.mxu0 %v210
    %v367 = vpop.f32.mrf.mxu0
    %v368 = vadd.f32 %v185, %v367
    %369 = vmatmul.f32.gmra.mxu0 %v213
    %v370 = vpop.f32.mrf.mxu0
    %v371 = vadd.f32 %v185, %v370
    %372 = vmatmul.f32.gmra.mxu0 %v216
    %v373 = vpop.f32.mrf.mxu0
    %v374 = vadd.f32 %v185, %v373
    %375 = vmatmul.f32.gmra.mxu0 %v219
    %v376 = vpop.f32.mrf.mxu0
    %v377 = vadd.f32 %v185, %v376
    %378 = vmatmul.f32.gmra.mxu0 %v222
    %v379 = vpop.f32.mrf.mxu0
    %v380 = vadd.f32 %v185, %v379
    %381 = vmatmul.f32.gmra.mxu0 %v225
    %v382 = vpop.f32.mrf.mxu0
    %v383 = vadd.f32 %v185, %v382
    %384 = vmatmul.f32.gmra.mxu0 %v228
    %v385 = vpop.f32.mrf.mxu0
    %v386 = vadd.f32 %v185, %v385
    %387 = vmatmul.f32.gmra.mxu0 %v231
    %v388 = vpop.f32.mrf.mxu0
    %v389 = vadd.f32 %v185, %v388
    %390 = vmatmul.f32.gmra.mxu0 %v234
    %v391 = vpop.f32.mrf.mxu0
    %v392 = vadd.f32 %v185, %v391
    %393 = vmatmul.f32.gmra.mxu0 %v237
    %v394 = vpop.f32.mrf.mxu0
    %v395 = vadd.f32 %v185, %v394
    %396 = vmatmul.f32.gmra.mxu0 %v240
    %v397 = vpop.f32.mrf.mxu0
    %v398 = vadd.f32 %v185, %v397
    %399 = vmatmul.f32.gmra.mxu0 %v243
    %v400 = vpop.f32.mrf.mxu0
    %v401 = vadd.f32 %v185, %v400
    %402 = vmatmul.f32.gmra.mxu0 %v246
    %v403 = vpop.f32.mrf.mxu0
    %v404 = vadd.f32 %v185, %v403
    %405 = vmatmul.f32.gmra.mxu0 %v249
    %v406 = vpop.f32.mrf.mxu0
    %v407 = vadd.f32 %v185, %v406
    %408 = vmatmul.f32.gmra.mxu0 %v252
    %v409 = vpop.f32.mrf.mxu0
    %v410 = vadd.f32 %v185, %v409
    %411 = vmatmul.f32.gmra.mxu0 %v255
    %v412 = vpop.f32.mrf.mxu0
    %v413 = vadd.f32 %v185, %v412
    %414 = vmatmul.f32.gmra.mxu0 %v258
    %v415 = vpop.f32.mrf.mxu0
    %v416 = vadd.f32 %v185, %v415
    %417 = vmatmul.f32.gmra.mxu0 %v261
    %v418 = vpop.f32.mrf.mxu0
    %v419 = vadd.f32 %v185, %v418
    %420 = vmatmul.f32.gmra.mxu0 %v264
    %v421 = vpop.f32.mrf.mxu0
    %v422 = vadd.f32 %v185, %v421
    %423 = vmatmul.f32.gmra.mxu0 %v267
    %v424 = vpop.f32.mrf.mxu0
    %v425 = vadd.f32 %v185, %v424
    %426 = vmatmul.f32.gmra.mxu0 %v270
    %v427 = vpop.f32.mrf.mxu0
    %v428 = vadd.f32 %v185, %v427
    %429 = vmatmul.f32.gmra.mxu0 %v273
    %v430 = vpop.f32.mrf.mxu0
    %v431 = vadd.f32 %v185, %v430
    %432 = vmatmul.f32.gmra.mxu0 %v276
    %v433 = vpop.f32.mrf.mxu0
    %v434 = vadd.f32 %v185, %v433
    %435 = vmatmul.f32.gmra.mxu0 %v279
    %v436 = vpop.f32.mrf.mxu0
    %v437 = vadd.f32 %v185, %v436
    %438 = vmatmul.f32.gmra.mxu0 %v282
    %v439 = vpop.f32.mrf.mxu0
    %v440 = vadd.f32 %v185, %v439
    %441 = vmatmul.f32.gmra.mxu0 %v285
    %v442 = vpop.f32.mrf.mxu0
    %v443 = vadd.f32 %v185, %v442
    %444 = vmatmul.f32.gmra.mxu0 %v288
    %v445 = vpop.f32.mrf.mxu0
    %v446 = vadd.f32 %v185, %v445
    %447 = vmatmul.f32.gmra.mxu0 %v291
    %v448 = vpop.f32.mrf.mxu0
    %v449 = vadd.f32 %v185, %v448
    %450 = vmatmul.f32.gmra.mxu0 %v294
    %v451 = vpop.f32.mrf.mxu0
    %v452 = vadd.f32 %v185, %v451
    %453 = vmatmul.f32.gmra.mxu0 %v297
    %v454 = vpop.f32.mrf.mxu0
    %v455 = vadd.f32 %v185, %v454
    %456 = vmatmul.f32.gmra.mxu0 %v300
    %v457 = vpop.f32.mrf.mxu0
    %v458 = vadd.f32 %v185, %v457
    %459 = vmatmul.f32.gmra.mxu0 %v303
    %v460 = vpop.f32.mrf.mxu0
    %v461 = vadd.f32 %v185, %v460
    %462 = vmatmul.f32.gmra.mxu0 %v306
    %v463 = vpop.f32.mrf.mxu0
    %v464 = vadd.f32 %v185, %v463
    %465 = vmatmul.f32.gmra.mxu0 %v309
    %v466 = vpop.f32.mrf.mxu0
    %v467 = vadd.f32 %v185, %v466
    %468 = vmatmul.f32.gmra.mxu0 %v312
    %v469 = vpop.f32.mrf.mxu0
    %v470 = vadd.f32 %v185, %v469
    %471 = vmatmul.f32.gmra.mxu0 %v315
    %v472 = vpop.f32.mrf.mxu0
    %v473 = vadd.f32 %v185, %v472
    %474 = vmatmul.f32.gmra.mxu0 %v318
    %v475 = vpop.f32.mrf.mxu0
    %v476 = vadd.f32 %v185, %v475
    %477 = vmatmul.f32.gmra.mxu0 %v321
    %v478 = vpop.f32.mrf.mxu0
    %v479 = vadd.f32 %v185, %v478
    %480 = vmatmul.f32.gmra.mxu0 %v324
    %v481 = vpop.f32.mrf.mxu0
    %v482 = vadd.f32 %v185, %v481
    %483 = vmatmul.f32.gmra.mxu0 %v327
    %v484 = vpop.f32.mrf.mxu0
    %v485 = vadd.f32 %v185, %v484
    %486 = vdwg.mxu0
    %v487 = vmax.f32 %v347, 0.0
    %v488 = vmax.f32 %v350, 0.0
    %v489 = vmax.f32 %v353, 0.0
    %v490 = vmax.f32 %v356, 0.0
    %v491 = vmax.f32 %v359, 0.0
    %v492 = vmax.f32 %v362, 0.0
    %v493 = vmax.f32 %v365, 0.0
    %v494 = vmax.f32 %v368, 0.0
    %v495 = vmax.f32 %v371, 0.0
    %v496 = vmax.f32 %v374, 0.0
    %v497 = vmax.f32 %v377, 0.0
    %v498 = vmax.f32 %v380, 0.0
    %v499 = vmax.f32 %v383, 0.0
    %v500 = vmax.f32 %v386, 0.0
    %v501 = vmax.f32 %v389, 0.0
    %v502 = vmax.f32 %v392, 0.0
    %v503 = vmax.f32 %v395, 0.0
    %v504 = vmax.f32 %v398, 0.0
    %v505 = vmax.f32 %v401, 0.0
    %v506 = vmax.f32 %v404, 0.0
    %v507 = vmax.f32 %v407, 0.0
    %v508 = vmax.f32 %v410, 0.0
    %v509 = vmax.f32 %v413, 0.0
    %v510 = vmax.f32 %v416, 0.0
    %v511 = vmax.f32 %v419, 0.0
    %v512 = vmax.f32 %v422, 0.0
    %v513 = vmax.f32 %v425, 0.0
    %v514 = vmax.f32 %v428, 0.0
    %v515 = vmax.f32 %v431, 0.0
    %v516 = vmax.f32 %v434, 0.0
    %v517 = vmax.f32 %v437, 0.0
    %v518 = vmax.f32 %v440, 0.0
    %v519 = vmax.f32 %v443, 0.0
    %v520 = vmax.f32 %v446, 0.0
    %v521 = vmax.f32 %v449, 0.0
    %v522 = vmax.f32 %v452, 0.0
    %v523 = vmax.f32 %v455, 0.0
    %v524 = vmax.f32 %v458, 0.0
    %v525 = vmax.f32 %v461, 0.0
    %v526 = vmax.f32 %v464, 0.0
    %v527 = vmax.f32 %v467, 0.0
    %v528 = vmax.f32 %v470, 0.0
    %v529 = vmax.f32 %v473, 0.0
    %v530 = vmax.f32 %v476, 0.0
    %v531 = vmax.f32 %v479, 0.0
    %v532 = vmax.f32 %v482, 0.0
    %v533 = vmax.f32 %v485, 0.0
    %v534 = vpack.c.bf16 %v487, %v487
    %v535 = vpack.c.bf16 %v488, %v488
    %v536 = vpack.c.bf16 %v489, %v489
    %v537 = vpack.c.bf16 %v490, %v490
    %v538 = vpack.c.bf16 %v491, %v491
    %v539 = vpack.c.bf16 %v492, %v492
    %v540 = vpack.c.bf16 %v493, %v493
    %v541 = vpack.c.bf16 %v494, %v494
    %v542 = vpack.c.bf16 %v495, %v495
    %v543 = vpack.c.bf16 %v496, %v496
    %v544 = vpack.c.bf16 %v497, %v497
    %v545 = vpack.c.bf16 %v498, %v498
    %v546 = vpack.c.bf16 %v499, %v499
    %v547 = vpack.c.bf16 %v500, %v500
    %v548 = vpack.c.bf16 %v501, %v501
    %v549 = vpack.c.bf16 %v502, %v502
    %v550 = vpack.c.bf16 %v503, %v503
    %v551 = vpack.c.bf16 %v504, %v504
    %v552 = vpack.c.bf16 %v505, %v505
    %v553 = vpack.c.bf16 %v506, %v506
    %v554 = vpack.c.bf16 %v507, %v507
    %v555 = vpack.c.bf16 %v508, %v508
    %v556 = vpack.c.bf16 %v509, %v509
    %v557 = vpack.c.bf16 %v510, %v510
    %v558 = vpack.c.bf16 %v511, %v511
    %v559 = vpack.c.bf16 %v512, %v512
    %v560 = vpack.c.bf16 %v513, %v513
    %v561 = vpack.c.bf16 %v514, %v514
    %v562 = vpack.c.bf16 %v515, %v515
    %v563 = vpack.c.bf16 %v516, %v516
    %v564 = vpack.c.bf16 %v517, %v517
    %v565 = vpack.c.bf16 %v518, %v518
    %v566 = vpack.c.bf16 %v519, %v519
    %v567 = vpack.c.bf16 %v520, %v520
    %v568 = vpack.c.bf16 %v521, %v521
    %v569 = vpack.c.bf16 %v522, %v522
    %v570 = vpack.c.bf16 %v523, %v523
    %v571 = vpack.c.bf16 %v524, %v524
    %v572 = vpack.c.bf16 %v525, %v525
    %v573 = vpack.c.bf16 %v526, %v526
    %v574 = vpack.c.bf16 %v527, %v527
    %v575 = vpack.c.bf16 %v528, %v528
    %v576 = vpack.c.bf16 %v529, %v529
    %v577 = vpack.c.bf16 %v530, %v530
    %v578 = vpack.c.bf16 %v531, %v531
    %v579 = vpack.c.bf16 %v532, %v532
    %v580 = vpack.c.bf16 %v533, %v533
    %v581 = vld [vmem:[#allocation7] sm:$0xf]
    %v582 = vld [vmem:[#allocation7 + $0x4] sm:$0xf]
    %v583 = vld [vmem:[#allocation7 + $0x8] sm:$0xf]
    %v584 = vld [vmem:[#allocation7 + $0xc] sm:$0xf]
    %v585 = vld [vmem:[#allocation7 + $0x10] sm:$0xf]
    %v586 = vld [vmem:[#allocation7 + $0x14] sm:$0xf]
    %v587 = vld [vmem:[#allocation7 + $0x18] sm:$0xf]
    %v588 = vld [vmem:[#allocation7 + $0x1c] sm:$0xf]
    %v589 = vld [vmem:[#allocation7 + $0x20] sm:$0xf]
    %v590 = vld [vmem:[#allocation7 + $0x24] sm:$0xf]
    %v591 = vld [vmem:[#allocation7 + $0x28] sm:$0xf]
    %v592 = vld [vmem:[#allocation7 + $0x2c] sm:$0xf]
    %v593 = vld [vmem:[#allocation7 + $0x30] sm:$0xf]
    %v594 = vld [vmem:[#allocation7 + $0x34] sm:$0xf]
    %v595 = vld [vmem:[#allocation7 + $0x38] sm:$0xf]
    %v596 = vld [vmem:[#allocation7 + $0x3c] sm:$0xf]
    %v597 = vld [vmem:[#allocation7 + $0x40] sm:$0xf]
    %v598 = vld [vmem:[#allocation7 + $0x44] sm:$0xf]
    %v599 = vld [vmem:[#allocation7 + $0x48] sm:$0xf]
    %v600 = vld [vmem:[#allocation7 + $0x4c] sm:$0xf]
    %v601 = vld [vmem:[#allocation7 + $0x50] sm:$0xf]
    %v602 = vld [vmem:[#allocation7 + $0x54] sm:$0xf]
    %v603 = vld [vmem:[#allocation7 + $0x58] sm:$0xf]
    %v604 = vld [vmem:[#allocation7 + $0x5c] sm:$0xf]
    %v605 = vld [vmem:[#allocation7 + $0x60] sm:$0xf]
    %v606 = vld [vmem:[#allocation7 + $0x64] sm:$0xf]
    %v607 = vld [vmem:[#allocation7 + $0x68] sm:$0xf]
    %v608 = vld [vmem:[#allocation7 + $0x6c] sm:$0xf]
    %v609 = vld [vmem:[#allocation7 + $0x70] sm:$0xf]
    %v610 = vld [vmem:[#allocation7 + $0x74] sm:$0xf]
    %v611 = vld [vmem:[#allocation7 + $0x78] sm:$0xf]
    %v612 = vld [vmem:[#allocation7 + $0x7c] sm:$0xf]
    %v613 = vld [vmem:[#allocation7 + $0x80] sm:$0xf]
    %v614 = vld [vmem:[#allocation7 + $0x84] sm:$0xf]
    %v615 = vld [vmem:[#allocation7 + $0x88] sm:$0xf]
    %v616 = vld [vmem:[#allocation7 + $0x8c] sm:$0xf]
    %v617 = vld [vmem:[#allocation7 + $0x90] sm:$0xf]
    %v618 = vld [vmem:[#allocation7 + $0x94] sm:$0xf]
    %v619 = vld [vmem:[#allocation7 + $0x98] sm:$0xf]
    %v620 = vld [vmem:[#allocation7 + $0x9c] sm:$0xf]
    %v621 = vld [vmem:[#allocation7 + $0xa0] sm:$0xf]
    %v622 = vld [vmem:[#allocation7 + $0xa4] sm:$0xf]
    %v623 = vld [vmem:[#allocation7 + $0xa8] sm:$0xf]
    %v624 = vld [vmem:[#allocation7 + $0xac] sm:$0xf]
    %v625 = vld [vmem:[#allocation7 + $0xb0] sm:$0xf]
    %v626 = vld [vmem:[#allocation7 + $0xb4] sm:$0xf]
    %v627 = vld [vmem:[#allocation7 + $0xb8] sm:$0xf]
    %v628 = vld [vmem:[#allocation7 + $0xbc] sm:$0xf]
    %v629 = vld [vmem:[#allocation7 + $0xc0] sm:$0xf]
    %v630 = vld [vmem:[#allocation7 + $0xc4] sm:$0xf]
    %v631 = vld [vmem:[#allocation7 + $0xc8] sm:$0xf]
    %v632 = vld [vmem:[#allocation7 + $0xcc] sm:$0xf]
    %v633 = vld [vmem:[#allocation7 + $0xd0] sm:$0xf]
    %v634 = vld [vmem:[#allocation7 + $0xd4] sm:$0xf]
    %v635 = vld [vmem:[#allocation7 + $0xd8] sm:$0xf]
    %v636 = vld [vmem:[#allocation7 + $0xdc] sm:$0xf]
    %v637 = vld [vmem:[#allocation7 + $0xe0] sm:$0xf]
    %v638 = vld [vmem:[#allocation7 + $0xe4] sm:$0xf]
    %v639 = vld [vmem:[#allocation7 + $0xe8] sm:$0xf]
    %v640 = vld [vmem:[#allocation7 + $0xec] sm:$0xf]
    %v641 = vld [vmem:[#allocation7 + $0xf0] sm:$0xf]
    %v642 = vld [vmem:[#allocation7 + $0xf4] sm:$0xf]
    %v643 = vld [vmem:[#allocation7 + $0xf8] sm:$0xf]
    %v644 = vld [vmem:[#allocation7 + $0xfc] sm:$0xf]
    %v645 = vld [vmem:[#allocation7 + $0x100] sm:$0xf]
    %v646 = vld [vmem:[#allocation7 + $0x104] sm:$0xf]
    %v647 = vld [vmem:[#allocation7 + $0x108] sm:$0xf]
    %v648 = vld [vmem:[#allocation7 + $0x10c] sm:$0xf]
    %v649 = vld [vmem:[#allocation7 + $0x110] sm:$0xf]
    %v650 = vld [vmem:[#allocation7 + $0x114] sm:$0xf]
    %v651 = vld [vmem:[#allocation7 + $0x118] sm:$0xf]
    %v652 = vld [vmem:[#allocation7 + $0x11c] sm:$0xf]
    %v653 = vld [vmem:[#allocation7 + $0x120] sm:$0xf]
    %v654 = vld [vmem:[#allocation7 + $0x124] sm:$0xf]
    %v655 = vld [vmem:[#allocation7 + $0x128] sm:$0xf]
    %v656 = vld [vmem:[#allocation7 + $0x12c] sm:$0xf]
    %v657 = vld [vmem:[#allocation7 + $0x130] sm:$0xf]
    %v658 = vld [vmem:[#allocation7 + $0x134] sm:$0xf]
    %v659 = vld [vmem:[#allocation7 + $0x138] sm:$0xf]
    %v660 = vld [vmem:[#allocation7 + $0x13c] sm:$0xf]
    %v661 = vld [vmem:[#allocation7 + $0x140] sm:$0xf]
    %v662 = vld [vmem:[#allocation7 + $0x144] sm:$0xf]
    %v663 = vld [vmem:[#allocation7 + $0x148] sm:$0xf]
    %v664 = vld [vmem:[#allocation7 + $0x14c] sm:$0xf]
    %v665 = vld [vmem:[#allocation7 + $0x150] sm:$0xf]
    %v666 = vld [vmem:[#allocation7 + $0x154] sm:$0xf]
    %v667 = vld [vmem:[#allocation7 + $0x158] sm:$0xf]
    %v668 = vld [vmem:[#allocation7 + $0x15c] sm:$0xf]
    %v669 = vld [vmem:[#allocation7 + $0x160] sm:$0xf]
    %v670 = vld [vmem:[#allocation7 + $0x164] sm:$0xf]
    %v671 = vld [vmem:[#allocation7 + $0x168] sm:$0xf]
    %v672 = vld [vmem:[#allocation7 + $0x16c] sm:$0xf]
    %v673 = vld [vmem:[#allocation7 + $0x170] sm:$0xf]
    %v674 = vld [vmem:[#allocation7 + $0x174] sm:$0xf]
    %v675 = vld [vmem:[#allocation7 + $0x178] sm:$0xf]
    %v676 = vld [vmem:[#allocation7 + $0x17c] sm:$0xf]
    %v677 = vld [vmem:[#allocation7 + $0x180] sm:$0xf]
    %v678 = vld [vmem:[#allocation7 + $0x184] sm:$0xf]
    %v679 = vld [vmem:[#allocation7 + $0x188] sm:$0xf]
    %v680 = vld [vmem:[#allocation7 + $0x18c] sm:$0xf]
    %v681 = vld [vmem:[#allocation7 + $0x190] sm:$0xf]
    %v682 = vld [vmem:[#allocation7 + $0x194] sm:$0xf]
    %v683 = vld [vmem:[#allocation7 + $0x198] sm:$0xf]
    %v684 = vld [vmem:[#allocation7 + $0x19c] sm:$0xf]
    %v685 = vld [vmem:[#allocation7 + $0x1a0] sm:$0xf]
    %v686 = vld [vmem:[#allocation7 + $0x1a4] sm:$0xf]
    %v687 = vld [vmem:[#allocation7 + $0x1a8] sm:$0xf]
    %v688 = vld [vmem:[#allocation7 + $0x1ac] sm:$0xf]
    %v689 = vld [vmem:[#allocation7 + $0x1b0] sm:$0xf]
    %v690 = vld [vmem:[#allocation7 + $0x1b4] sm:$0xf]
    %v691 = vld [vmem:[#allocation7 + $0x1b8] sm:$0xf]
    %v692 = vld [vmem:[#allocation7 + $0x1bc] sm:$0xf]
    %v693 = vld [vmem:[#allocation7 + $0x1c0] sm:$0xf]
    %v694 = vld [vmem:[#allocation7 + $0x1c4] sm:$0xf]
    %v695 = vld [vmem:[#allocation7 + $0x1c8] sm:$0xf]
    %v696 = vld [vmem:[#allocation7 + $0x1cc] sm:$0xf]
    %v697 = vld [vmem:[#allocation7 + $0x1d0] sm:$0xf]
    %v698 = vld [vmem:[#allocation7 + $0x1d4] sm:$0xf]
    %v699 = vld [vmem:[#allocation7 + $0x1d8] sm:$0xf]
    %v700 = vld [vmem:[#allocation7 + $0x1dc] sm:$0xf]
    %v701 = vld [vmem:[#allocation7 + $0x1e0] sm:$0xf]
    %v702 = vld [vmem:[#allocation7 + $0x1e4] sm:$0xf]
    %v703 = vld [vmem:[#allocation7 + $0x1e8] sm:$0xf]
    %v704 = vld [vmem:[#allocation7 + $0x1ec] sm:$0xf]
    %v705 = vld [vmem:[#allocation7 + $0x1f0] sm:$0xf]
    %v706 = vld [vmem:[#allocation7 + $0x1f4] sm:$0xf]
    %v707 = vld [vmem:[#allocation7 + $0x1f8] sm:$0xf]
    %v708 = vld [vmem:[#allocation7 + $0x1fc] sm:$0xf]
    %v709 = vld [vmem:[#allocation7 + $0x200] sm:$0xf]
    %v710 = vld [vmem:[#allocation7 + $0x204] sm:$0xf]
    %v711 = vld [vmem:[#allocation7 + $0x208] sm:$0xf]
    %v712 = vld [vmem:[#allocation7 + $0x20c] sm:$0xf]
    %v713 = vld [vmem:[#allocation7 + $0x210] sm:$0xf]
    %v714 = vld [vmem:[#allocation7 + $0x214] sm:$0xf]
    %v715 = vld [vmem:[#allocation7 + $0x218] sm:$0xf]
    %v716 = vld [vmem:[#allocation7 + $0x21c] sm:$0xf]
    %v717 = vld [vmem:[#allocation7 + $0x220] sm:$0xf]
    %v718 = vld [vmem:[#allocation7 + $0x224] sm:$0xf]
    %v719 = vld [vmem:[#allocation7 + $0x228] sm:$0xf]
    %v720 = vld [vmem:[#allocation7 + $0x22c] sm:$0xf]
    %v721 = vld [vmem:[#allocation7 + $0x230] sm:$0xf]
    %v722 = vld [vmem:[#allocation7 + $0x234] sm:$0xf]
    %v723 = vld [vmem:[#allocation7 + $0x238] sm:$0xf]
    %v724 = vld [vmem:[#allocation7 + $0x23c] sm:$0xf]
    %v725 = vld [vmem:[#allocation7 + $0x240] sm:$0xf]
    %v726 = vld [vmem:[#allocation7 + $0x244] sm:$0xf]
    %v727 = vld [vmem:[#allocation7 + $0x248] sm:$0xf]
    %v728 = vld [vmem:[#allocation7 + $0x24c] sm:$0xf]
    %v729 = vld [vmem:[#allocation7 + $0x250] sm:$0xf]
    %v730 = vld [vmem:[#allocation7 + $0x254] sm:$0xf]
    %v731 = vld [vmem:[#allocation7 + $0x258] sm:$0xf]
    %v732 = vld [vmem:[#allocation7 + $0x25c] sm:$0xf]
    %v733 = vld [vmem:[#allocation7 + $0x260] sm:$0xf]
    %v734 = vld [vmem:[#allocation7 + $0x264] sm:$0xf]
    %v735 = vld [vmem:[#allocation7 + $0x268] sm:$0xf]
    %v736 = vld [vmem:[#allocation7 + $0x26c] sm:$0xf]
    %v737 = vld [vmem:[#allocation7 + $0x270] sm:$0xf]
    %v738 = vld [vmem:[#allocation7 + $0x274] sm:$0xf]
    %v739 = vld [vmem:[#allocation7 + $0x278] sm:$0xf]
    %v740 = vld [vmem:[#allocation7 + $0x27c] sm:$0xf]
    %v741 = vld [vmem:[#allocation7 + $0x280] sm:$0xf]
    %v742 = vld [vmem:[#allocation7 + $0x284] sm:$0xf]
    %v743 = vld [vmem:[#allocation7 + $0x288] sm:$0xf]
    %v744 = vld [vmem:[#allocation7 + $0x28c] sm:$0xf]
    %v745 = vld [vmem:[#allocation7 + $0x290] sm:$0xf]
    %v746 = vld [vmem:[#allocation7 + $0x294] sm:$0xf]
    %v747 = vld [vmem:[#allocation7 + $0x298] sm:$0xf]
    %v748 = vld [vmem:[#allocation7 + $0x29c] sm:$0xf]
    %v749 = vld [vmem:[#allocation7 + $0x2a0] sm:$0xf]
    %v750 = vld [vmem:[#allocation7 + $0x2a4] sm:$0xf]
    %v751 = vld [vmem:[#allocation7 + $0x2a8] sm:$0xf]
    %v752 = vld [vmem:[#allocation7 + $0x2ac] sm:$0xf]
    %v753 = vld [vmem:[#allocation7 + $0x2b0] sm:$0xf]
    %v754 = vld [vmem:[#allocation7 + $0x2b4] sm:$0xf]
    %v755 = vld [vmem:[#allocation7 + $0x2b8] sm:$0xf]
    %v756 = vld [vmem:[#allocation7 + $0x2bc] sm:$0xf]
    %v757 = vld [vmem:[#allocation7 + $0x2c0] sm:$0xf]
    %v758 = vld [vmem:[#allocation7 + $0x2c4] sm:$0xf]
    %v759 = vld [vmem:[#allocation7 + $0x2c8] sm:$0xf]
    %v760 = vld [vmem:[#allocation7 + $0x2cc] sm:$0xf]
    %v761 = vld [vmem:[#allocation7 + $0x2d0] sm:$0xf]
    %v762 = vld [vmem:[#allocation7 + $0x2d4] sm:$0xf]
    %v763 = vld [vmem:[#allocation7 + $0x2d8] sm:$0xf]
    %v764 = vld [vmem:[#allocation7 + $0x2dc] sm:$0xf]
    %v765 = vld [vmem:[#allocation7 + $0x2e0] sm:$0xf]
    %v766 = vld [vmem:[#allocation7 + $0x2e4] sm:$0xf]
    %v767 = vld [vmem:[#allocation7 + $0x2e8] sm:$0xf]
    %v768 = vld [vmem:[#allocation7 + $0x2ec] sm:$0xf]
    %v769 = vld [vmem:[#allocation7 + $0x2f0] sm:$0xf]
    %v770 = vld [vmem:[#allocation7 + $0x2f4] sm:$0xf]
    %v771 = vld [vmem:[#allocation7 + $0x2f8] sm:$0xf]
    %v772 = vld [vmem:[#allocation7 + $0x2fc] sm:$0xf]
    %v773 = vld [vmem:[#allocation7 + $0x300] sm:$0xf]
    %v774 = vld [vmem:[#allocation7 + $0x304] sm:$0xf]
    %v775 = vld [vmem:[#allocation7 + $0x308] sm:$0xf]
    %v776 = vld [vmem:[#allocation7 + $0x30c] sm:$0xf]
    %v777 = vld [vmem:[#allocation7 + $0x310] sm:$0xf]
    %v778 = vld [vmem:[#allocation7 + $0x314] sm:$0xf]
    %v779 = vld [vmem:[#allocation7 + $0x318] sm:$0xf]
    %v780 = vld [vmem:[#allocation7 + $0x31c] sm:$0xf]
    %v781 = vld [vmem:[#allocation7 + $0x320] sm:$0xf]
    %v782 = vld [vmem:[#allocation7 + $0x324] sm:$0xf]
    %v783 = vld [vmem:[#allocation7 + $0x328] sm:$0xf]
    %v784 = vld [vmem:[#allocation7 + $0x32c] sm:$0xf]
    %v785 = vld [vmem:[#allocation7 + $0x330] sm:$0xf]
    %v786 = vld [vmem:[#allocation7 + $0x334] sm:$0xf]
    %v787 = vld [vmem:[#allocation7 + $0x338] sm:$0xf]
    %v788 = vld [vmem:[#allocation7 + $0x33c] sm:$0xf]
    %v789 = vld [vmem:[#allocation7 + $0x340] sm:$0xf]
    %v790 = vld [vmem:[#allocation7 + $0x344] sm:$0xf]
    %v791 = vld [vmem:[#allocation7 + $0x348] sm:$0xf]
    %v792 = vld [vmem:[#allocation7 + $0x34c] sm:$0xf]
    %v793 = vld [vmem:[#allocation7 + $0x350] sm:$0xf]
    %v794 = vld [vmem:[#allocation7 + $0x354] sm:$0xf]
    %v795 = vld [vmem:[#allocation7 + $0x358] sm:$0xf]
    %v796 = vld [vmem:[#allocation7 + $0x35c] sm:$0xf]
    %v797 = vld [vmem:[#allocation7 + $0x360] sm:$0xf]
    %v798 = vld [vmem:[#allocation7 + $0x364] sm:$0xf]
    %v799 = vld [vmem:[#allocation7 + $0x368] sm:$0xf]
    %v800 = vld [vmem:[#allocation7 + $0x36c] sm:$0xf]
    %v801 = vld [vmem:[#allocation7 + $0x370] sm:$0xf]
    %v802 = vld [vmem:[#allocation7 + $0x374] sm:$0xf]
    %v803 = vld [vmem:[#allocation7 + $0x378] sm:$0xf]
    %v804 = vld [vmem:[#allocation7 + $0x37c] sm:$0xf]
    %v805 = vld [vmem:[#allocation7 + $0x380] sm:$0xf]
    %v806 = vld [vmem:[#allocation7 + $0x384] sm:$0xf]
    %v807 = vld [vmem:[#allocation7 + $0x388] sm:$0xf]
    %v808 = vld [vmem:[#allocation7 + $0x38c] sm:$0xf]
    %v809 = vld [vmem:[#allocation7 + $0x390] sm:$0xf]
    %v810 = vld [vmem:[#allocation7 + $0x394] sm:$0xf]
    %v811 = vld [vmem:[#allocation7 + $0x398] sm:$0xf]
    %v812 = vld [vmem:[#allocation7 + $0x39c] sm:$0xf]
    %v813 = vld [vmem:[#allocation7 + $0x3a0] sm:$0xf]
    %v814 = vld [vmem:[#allocation7 + $0x3a4] sm:$0xf]
    %v815 = vld [vmem:[#allocation7 + $0x3a8] sm:$0xf]
    %v816 = vld [vmem:[#allocation7 + $0x3ac] sm:$0xf]
    %v817 = vld [vmem:[#allocation7 + $0x3b0] sm:$0xf]
    %v818 = vld [vmem:[#allocation7 + $0x3b4] sm:$0xf]
    %v819 = vld [vmem:[#allocation7 + $0x3b8] sm:$0xf]
    %v820 = vld [vmem:[#allocation7 + $0x3bc] sm:$0xf]
    %v821 = vld [vmem:[#allocation7 + $0x3c0] sm:$0xf]
    %v822 = vld [vmem:[#allocation7 + $0x3c4] sm:$0xf]
    %v823 = vld [vmem:[#allocation7 + $0x3c8] sm:$0xf]
    %v824 = vld [vmem:[#allocation7 + $0x3cc] sm:$0xf]
    %v825 = vld [vmem:[#allocation7 + $0x3d0] sm:$0xf]
    %v826 = vld [vmem:[#allocation7 + $0x3d4] sm:$0xf]
    %v827 = vld [vmem:[#allocation7 + $0x3d8] sm:$0xf]
    %v828 = vld [vmem:[#allocation7 + $0x3dc] sm:$0xf]
    %v829 = vld [vmem:[#allocation7 + $0x3e0] sm:$0xf]
    %v830 = vld [vmem:[#allocation7 + $0x3e4] sm:$0xf]
    %v831 = vld [vmem:[#allocation7 + $0x3e8] sm:$0xf]
    %v832 = vld [vmem:[#allocation7 + $0x3ec] sm:$0xf]
    %v833 = vld [vmem:[#allocation7 + $0x3f0] sm:$0xf]
    %v834 = vld [vmem:[#allocation7 + $0x3f4] sm:$0xf]
    %v835 = vld [vmem:[#allocation7 + $0x3f8] sm:$0xf]
    %v836 = vld [vmem:[#allocation7 + $0x3fc] sm:$0xf]
    %v837 = vld [vmem:[#allocation7 + $0x400] sm:$0xf]
    %v838 = vld [vmem:[#allocation7 + $0x404] sm:$0xf]
    %v839 = vld [vmem:[#allocation7 + $0x408] sm:$0xf]
    %v840 = vld [vmem:[#allocation7 + $0x40c] sm:$0xf]
    %v841 = vld [vmem:[#allocation7 + $0x410] sm:$0xf]
    %v842 = vld [vmem:[#allocation7 + $0x414] sm:$0xf]
    %v843 = vld [vmem:[#allocation7 + $0x418] sm:$0xf]
    %v844 = vld [vmem:[#allocation7 + $0x41c] sm:$0xf]
    %v845 = vld [vmem:[#allocation7 + $0x420] sm:$0xf]
    %v846 = vld [vmem:[#allocation7 + $0x424] sm:$0xf]
    %v847 = vld [vmem:[#allocation7 + $0x428] sm:$0xf]
    %v848 = vld [vmem:[#allocation7 + $0x42c] sm:$0xf]
    %v849 = vld [vmem:[#allocation7 + $0x430] sm:$0xf]
    %v850 = vld [vmem:[#allocation7 + $0x434] sm:$0xf]
    %v851 = vld [vmem:[#allocation7 + $0x438] sm:$0xf]
    %v852 = vld [vmem:[#allocation7 + $0x43c] sm:$0xf]
    %v853 = vld [vmem:[#allocation7 + $0x440] sm:$0xf]
    %v854 = vld [vmem:[#allocation7 + $0x444] sm:$0xf]
    %v855 = vld [vmem:[#allocation7 + $0x448] sm:$0xf]
    %v856 = vld [vmem:[#allocation7 + $0x44c] sm:$0xf]
    %v857 = vld [vmem:[#allocation7 + $0x450] sm:$0xf]
    %v858 = vld [vmem:[#allocation7 + $0x454] sm:$0xf]
    %v859 = vld [vmem:[#allocation7 + $0x458] sm:$0xf]
    %v860 = vld [vmem:[#allocation7 + $0x45c] sm:$0xf]
    %v861 = vld [vmem:[#allocation7 + $0x460] sm:$0xf]
    %v862 = vld [vmem:[#allocation7 + $0x464] sm:$0xf]
    %v863 = vld [vmem:[#allocation7 + $0x468] sm:$0xf]
    %v864 = vld [vmem:[#allocation7 + $0x46c] sm:$0xf]
    %v865 = vld [vmem:[#allocation7 + $0x470] sm:$0xf]
    %v866 = vld [vmem:[#allocation7 + $0x474] sm:$0xf]
    %v867 = vld [vmem:[#allocation7 + $0x478] sm:$0xf]
    %v868 = vld [vmem:[#allocation7 + $0x47c] sm:$0xf]
    %v869 = vld [vmem:[#allocation7 + $0x480] sm:$0xf]
    %v870 = vld [vmem:[#allocation7 + $0x484] sm:$0xf]
    %v871 = vld [vmem:[#allocation7 + $0x488] sm:$0xf]
    %v872 = vld [vmem:[#allocation7 + $0x48c] sm:$0xf]
    %v873 = vld [vmem:[#allocation7 + $0x490] sm:$0xf]
    %v874 = vld [vmem:[#allocation7 + $0x494] sm:$0xf]
    %v875 = vld [vmem:[#allocation7 + $0x498] sm:$0xf]
    %v876 = vld [vmem:[#allocation7 + $0x49c] sm:$0xf]
    %v877 = vld [vmem:[#allocation7 + $0x4a0] sm:$0xf]
    %v878 = vld [vmem:[#allocation7 + $0x4a4] sm:$0xf]
    %v879 = vld [vmem:[#allocation7 + $0x4a8] sm:$0xf]
    %v880 = vld [vmem:[#allocation7 + $0x4ac] sm:$0xf]
    %v881 = vld [vmem:[#allocation7 + $0x4b0] sm:$0xf]
    %v882 = vld [vmem:[#allocation7 + $0x4b4] sm:$0xf]
    %v883 = vld [vmem:[#allocation7 + $0x4b8] sm:$0xf]
    %v884 = vld [vmem:[#allocation7 + $0x4bc] sm:$0xf]
    %v885 = vld [vmem:[#allocation7 + $0x4c0] sm:$0xf]
    %v886 = vld [vmem:[#allocation7 + $0x4c4] sm:$0xf]
    %v887 = vld [vmem:[#allocation7 + $0x4c8] sm:$0xf]
    %v888 = vld [vmem:[#allocation7 + $0x4cc] sm:$0xf]
    %v889 = vld [vmem:[#allocation7 + $0x4d0] sm:$0xf]
    %v890 = vld [vmem:[#allocation7 + $0x4d4] sm:$0xf]
    %v891 = vld [vmem:[#allocation7 + $0x4d8] sm:$0xf]
    %v892 = vld [vmem:[#allocation7 + $0x4dc] sm:$0xf]
    %v893 = vld [vmem:[#allocation7 + $0x4e0] sm:$0xf]
    %v894 = vld [vmem:[#allocation7 + $0x4e4] sm:$0xf]
    %v895 = vld [vmem:[#allocation7 + $0x4e8] sm:$0xf]
    %v896 = vld [vmem:[#allocation7 + $0x4ec] sm:$0xf]
    %v897 = vld [vmem:[#allocation7 + $0x4f0] sm:$0xf]
    %v898 = vld [vmem:[#allocation7 + $0x4f4] sm:$0xf]
    %v899 = vld [vmem:[#allocation7 + $0x4f8] sm:$0xf]
    %v900 = vld [vmem:[#allocation7 + $0x4fc] sm:$0xf]
    %v901 = vld [vmem:[#allocation7 + $0x500] sm:$0xf]
    %v902 = vld [vmem:[#allocation7 + $0x504] sm:$0xf]
    %v903 = vld [vmem:[#allocation7 + $0x508] sm:$0xf]
    %v904 = vld [vmem:[#allocation7 + $0x50c] sm:$0xf]
    %v905 = vld [vmem:[#allocation7 + $0x510] sm:$0xf]
    %v906 = vld [vmem:[#allocation7 + $0x514] sm:$0xf]
    %v907 = vld [vmem:[#allocation7 + $0x518] sm:$0xf]
    %v908 = vld [vmem:[#allocation7 + $0x51c] sm:$0xf]
    %v909 = vld [vmem:[#allocation7 + $0x520] sm:$0xf]
    %v910 = vld [vmem:[#allocation7 + $0x524] sm:$0xf]
    %v911 = vld [vmem:[#allocation7 + $0x528] sm:$0xf]
    %v912 = vld [vmem:[#allocation7 + $0x52c] sm:$0xf]
    %v913 = vld [vmem:[#allocation7 + $0x530] sm:$0xf]
    %v914 = vld [vmem:[#allocation7 + $0x534] sm:$0xf]
    %v915 = vld [vmem:[#allocation7 + $0x538] sm:$0xf]
    %v916 = vld [vmem:[#allocation7 + $0x53c] sm:$0xf]
    %v917 = vld [vmem:[#allocation7 + $0x540] sm:$0xf]
    %v918 = vld [vmem:[#allocation7 + $0x544] sm:$0xf]
    %v919 = vld [vmem:[#allocation7 + $0x548] sm:$0xf]
    %v920 = vld [vmem:[#allocation7 + $0x54c] sm:$0xf]
    %v921 = vld [vmem:[#allocation7 + $0x550] sm:$0xf]
    %v922 = vld [vmem:[#allocation7 + $0x554] sm:$0xf]
    %v923 = vld [vmem:[#allocation7 + $0x558] sm:$0xf]
    %v924 = vld [vmem:[#allocation7 + $0x55c] sm:$0xf]
    %v925 = vld [vmem:[#allocation7 + $0x560] sm:$0xf]
    %v926 = vld [vmem:[#allocation7 + $0x564] sm:$0xf]
    %v927 = vld [vmem:[#allocation7 + $0x568] sm:$0xf]
    %v928 = vld [vmem:[#allocation7 + $0x56c] sm:$0xf]
    %v929 = vld [vmem:[#allocation7 + $0x570] sm:$0xf]
    %v930 = vld [vmem:[#allocation7 + $0x574] sm:$0xf]
    %v931 = vld [vmem:[#allocation7 + $0x578] sm:$0xf]
    %v932 = vld [vmem:[#allocation7 + $0x57c] sm:$0xf]
    %v933 = vld [vmem:[#allocation7 + $0x580] sm:$0xf]
    %v934 = vld [vmem:[#allocation7 + $0x584] sm:$0xf]
    %v935 = vld [vmem:[#allocation7 + $0x588] sm:$0xf]
    %v936 = vld [vmem:[#allocation7 + $0x58c] sm:$0xf]
    %v937 = vld [vmem:[#allocation7 + $0x590] sm:$0xf]
    %v938 = vld [vmem:[#allocation7 + $0x594] sm:$0xf]
    %v939 = vld [vmem:[#allocation7 + $0x598] sm:$0xf]
    %v940 = vld [vmem:[#allocation7 + $0x59c] sm:$0xf]
    %v941 = vld [vmem:[#allocation7 + $0x5a0] sm:$0xf]
    %v942 = vld [vmem:[#allocation7 + $0x5a4] sm:$0xf]
    %v943 = vld [vmem:[#allocation7 + $0x5a8] sm:$0xf]
    %v944 = vld [vmem:[#allocation7 + $0x5ac] sm:$0xf]
    %v945 = vld [vmem:[#allocation7 + $0x5b0] sm:$0xf]
    %v946 = vld [vmem:[#allocation7 + $0x5b4] sm:$0xf]
    %v947 = vld [vmem:[#allocation7 + $0x5b8] sm:$0xf]
    %v948 = vld [vmem:[#allocation7 + $0x5bc] sm:$0xf]
    %v949 = vld [vmem:[#allocation7 + $0x5c0] sm:$0xf]
    %v950 = vld [vmem:[#allocation7 + $0x5c4] sm:$0xf]
    %v951 = vld [vmem:[#allocation7 + $0x5c8] sm:$0xf]
    %v952 = vld [vmem:[#allocation7 + $0x5cc] sm:$0xf]
    %v953 = vld [vmem:[#allocation7 + $0x5d0] sm:$0xf]
    %v954 = vld [vmem:[#allocation7 + $0x5d4] sm:$0xf]
    %v955 = vld [vmem:[#allocation7 + $0x5d8] sm:$0xf]
    %v956 = vld [vmem:[#allocation7 + $0x5dc] sm:$0xf]
    %v957 = vld [vmem:[#allocation7 + $0x5e0] sm:$0xf]
    %v958 = vld [vmem:[#allocation7 + $0x5e4] sm:$0xf]
    %v959 = vld [vmem:[#allocation7 + $0x5e8] sm:$0xf]
    %v960 = vld [vmem:[#allocation7 + $0x5ec] sm:$0xf]
    %v961 = vld [vmem:[#allocation7 + $0x5f0] sm:$0xf]
    %v962 = vld [vmem:[#allocation7 + $0x5f4] sm:$0xf]
    %v963 = vld [vmem:[#allocation7 + $0x5f8] sm:$0xf]
    %v964 = vld [vmem:[#allocation7 + $0x5fc] sm:$0xf]
    %v965 = vld [vmem:[#allocation7 + $0x600] sm:$0xf]
    %v966 = vld [vmem:[#allocation7 + $0x604] sm:$0xf]
    %v967 = vld [vmem:[#allocation7 + $0x608] sm:$0xf]
    %v968 = vld [vmem:[#allocation7 + $0x60c] sm:$0xf]
    %v969 = vld [vmem:[#allocation7 + $0x610] sm:$0xf]
    %v970 = vld [vmem:[#allocation7 + $0x614] sm:$0xf]
    %v971 = vld [vmem:[#allocation7 + $0x618] sm:$0xf]
    %v972 = vld [vmem:[#allocation7 + $0x61c] sm:$0xf]
    %v973 = vld [vmem:[#allocation7 + $0x620] sm:$0xf]
    %v974 = vld [vmem:[#allocation7 + $0x624] sm:$0xf]
    %v975 = vld [vmem:[#allocation7 + $0x628] sm:$0xf]
    %v976 = vld [vmem:[#allocation7 + $0x62c] sm:$0xf]
    %v977 = vld [vmem:[#allocation7 + $0x630] sm:$0xf]
    %v978 = vld [vmem:[#allocation7 + $0x634] sm:$0xf]
    %v979 = vld [vmem:[#allocation7 + $0x638] sm:$0xf]
    %v980 = vld [vmem:[#allocation7 + $0x63c] sm:$0xf]
    %v981 = vld [vmem:[#allocation7 + $0x640] sm:$0xf]
    %v982 = vld [vmem:[#allocation7 + $0x644] sm:$0xf]
    %v983 = vld [vmem:[#allocation7 + $0x648] sm:$0xf]
    %v984 = vld [vmem:[#allocation7 + $0x64c] sm:$0xf]
    %v985 = vld [vmem:[#allocation7 + $0x650] sm:$0xf]
    %v986 = vld [vmem:[#allocation7 + $0x654] sm:$0xf]
    %v987 = vld [vmem:[#allocation7 + $0x658] sm:$0xf]
    %v988 = vld [vmem:[#allocation7 + $0x65c] sm:$0xf]
    %v989 = vld [vmem:[#allocation7 + $0x660] sm:$0xf]
    %v990 = vld [vmem:[#allocation7 + $0x664] sm:$0xf]
    %v991 = vld [vmem:[#allocation7 + $0x668] sm:$0xf]
    %v992 = vld [vmem:[#allocation7 + $0x66c] sm:$0xf]
    %v993 = vld [vmem:[#allocation7 + $0x670] sm:$0xf]
    %v994 = vld [vmem:[#allocation7 + $0x674] sm:$0xf]
    %v995 = vld [vmem:[#allocation7 + $0x678] sm:$0xf]
    %v996 = vld [vmem:[#allocation7 + $0x67c] sm:$0xf]
    %v997 = vld [vmem:[#allocation7 + $0x680] sm:$0xf]
    %v998 = vld [vmem:[#allocation7 + $0x684] sm:$0xf]
    %v999 = vld [vmem:[#allocation7 + $0x688] sm:$0xf]
    %v1000 = vld [vmem:[#allocation7 + $0x68c] sm:$0xf]
    %v1001 = vld [vmem:[#allocation7 + $0x690] sm:$0xf]
    %v1002 = vld [vmem:[#allocation7 + $0x694] sm:$0xf]
    %v1003 = vld [vmem:[#allocation7 + $0x698] sm:$0xf]
    %v1004 = vld [vmem:[#allocation7 + $0x69c] sm:$0xf]
    %v1005 = vld [vmem:[#allocation7 + $0x6a0] sm:$0xf]
    %v1006 = vld [vmem:[#allocation7 + $0x6a4] sm:$0xf]
    %v1007 = vld [vmem:[#allocation7 + $0x6a8] sm:$0xf]
    %v1008 = vld [vmem:[#allocation7 + $0x6ac] sm:$0xf]
    %v1009 = vld [vmem:[#allocation7 + $0x6b0] sm:$0xf]
    %v1010 = vld [vmem:[#allocation7 + $0x6b4] sm:$0xf]
    %v1011 = vld [vmem:[#allocation7 + $0x6b8] sm:$0xf]
    %v1012 = vld [vmem:[#allocation7 + $0x6bc] sm:$0xf]
    %v1013 = vld [vmem:[#allocation7 + $0x6c0] sm:$0xf]
    %v1014 = vld [vmem:[#allocation7 + $0x6c4] sm:$0xf]
    %v1015 = vld [vmem:[#allocation7 + $0x6c8] sm:$0xf]
    %v1016 = vld [vmem:[#allocation7 + $0x6cc] sm:$0xf]
    %v1017 = vld [vmem:[#allocation7 + $0x6d0] sm:$0xf]
    %v1018 = vld [vmem:[#allocation7 + $0x6d4] sm:$0xf]
    %v1019 = vld [vmem:[#allocation7 + $0x6d8] sm:$0xf]
    %v1020 = vld [vmem:[#allocation7 + $0x6dc] sm:$0xf]
    %v1021 = vld [vmem:[#allocation7 + $0x6e0] sm:$0xf]
    %v1022 = vld [vmem:[#allocation7 + $0x6e4] sm:$0xf]
    %v1023 = vld [vmem:[#allocation7 + $0x6e8] sm:$0xf]
    %v1024 = vld [vmem:[#allocation7 + $0x6ec] sm:$0xf]
    %v1025 = vld [vmem:[#allocation7 + $0x6f0] sm:$0xf]
    %v1026 = vld [vmem:[#allocation7 + $0x6f4] sm:$0xf]
    %v1027 = vld [vmem:[#allocation7 + $0x6f8] sm:$0xf]
    %v1028 = vld [vmem:[#allocation7 + $0x6fc] sm:$0xf]
    %v1029 = vld [vmem:[#allocation7 + $0x700] sm:$0xf]
    %v1030 = vld [vmem:[#allocation7 + $0x704] sm:$0xf]
    %v1031 = vld [vmem:[#allocation7 + $0x708] sm:$0xf]
    %v1032 = vld [vmem:[#allocation7 + $0x70c] sm:$0xf]
    %v1033 = vld [vmem:[#allocation7 + $0x710] sm:$0xf]
    %v1034 = vld [vmem:[#allocation7 + $0x714] sm:$0xf]
    %v1035 = vld [vmem:[#allocation7 + $0x718] sm:$0xf]
    %v1036 = vld [vmem:[#allocation7 + $0x71c] sm:$0xf]
    %v1037 = vld [vmem:[#allocation7 + $0x720] sm:$0xf]
    %v1038 = vld [vmem:[#allocation7 + $0x724] sm:$0xf]
    %v1039 = vld [vmem:[#allocation7 + $0x728] sm:$0xf]
    %v1040 = vld [vmem:[#allocation7 + $0x72c] sm:$0xf]
    %v1041 = vld [vmem:[#allocation7 + $0x730] sm:$0xf]
    %v1042 = vld [vmem:[#allocation7 + $0x734] sm:$0xf]
    %v1043 = vld [vmem:[#allocation7 + $0x738] sm:$0xf]
    %v1044 = vld [vmem:[#allocation7 + $0x73c] sm:$0xf]
    %v1045 = vld [vmem:[#allocation7 + $0x740] sm:$0xf]
    %v1046 = vld [vmem:[#allocation7 + $0x744] sm:$0xf]
    %v1047 = vld [vmem:[#allocation7 + $0x748] sm:$0xf]
    %v1048 = vld [vmem:[#allocation7 + $0x74c] sm:$0xf]
    %v1049 = vld [vmem:[#allocation7 + $0x750] sm:$0xf]
    %v1050 = vld [vmem:[#allocation7 + $0x754] sm:$0xf]
    %v1051 = vld [vmem:[#allocation7 + $0x758] sm:$0xf]
    %v1052 = vld [vmem:[#allocation7 + $0x75c] sm:$0xf]
    %v1053 = vld [vmem:[#allocation7 + $0x760] sm:$0xf]
    %v1054 = vld [vmem:[#allocation7 + $0x764] sm:$0xf]
    %v1055 = vld [vmem:[#allocation7 + $0x768] sm:$0xf]
    %v1056 = vld [vmem:[#allocation7 + $0x76c] sm:$0xf]
    %v1057 = vld [vmem:[#allocation7 + $0x770] sm:$0xf]
    %v1058 = vld [vmem:[#allocation7 + $0x774] sm:$0xf]
    %v1059 = vld [vmem:[#allocation7 + $0x778] sm:$0xf]
    %v1060 = vld [vmem:[#allocation7 + $0x77c] sm:$0xf]
    %v1061 = vld [vmem:[#allocation7 + $0x780] sm:$0xf]
    %v1062 = vld [vmem:[#allocation7 + $0x784] sm:$0xf]
    %v1063 = vld [vmem:[#allocation7 + $0x788] sm:$0xf]
    %v1064 = vld [vmem:[#allocation7 + $0x78c] sm:$0xf]
    %v1065 = vld [vmem:[#allocation7 + $0x790] sm:$0xf]
    %v1066 = vld [vmem:[#allocation7 + $0x794] sm:$0xf]
    %v1067 = vld [vmem:[#allocation7 + $0x798] sm:$0xf]
    %v1068 = vld [vmem:[#allocation7 + $0x79c] sm:$0xf]
    %v1069 = vld [vmem:[#allocation7 + $0x7a0] sm:$0xf]
    %v1070 = vld [vmem:[#allocation7 + $0x7a4] sm:$0xf]
    %v1071 = vld [vmem:[#allocation7 + $0x7a8] sm:$0xf]
    %v1072 = vld [vmem:[#allocation7 + $0x7ac] sm:$0xf]
    %v1073 = vld [vmem:[#allocation7 + $0x7b0] sm:$0xf]
    %v1074 = vld [vmem:[#allocation7 + $0x7b4] sm:$0xf]
    %v1075 = vld [vmem:[#allocation7 + $0x7b8] sm:$0xf]
    %v1076 = vld [vmem:[#allocation7 + $0x7bc] sm:$0xf]
    %v1077 = vld [vmem:[#allocation7 + $0x7c0] sm:$0xf]
    %v1078 = vld [vmem:[#allocation7 + $0x7c4] sm:$0xf]
    %v1079 = vld [vmem:[#allocation7 + $0x7c8] sm:$0xf]
    %v1080 = vld [vmem:[#allocation7 + $0x7cc] sm:$0xf]
    %v1081 = vld [vmem:[#allocation7 + $0x7d0] sm:$0xf]
    %v1082 = vld [vmem:[#allocation7 + $0x7d4] sm:$0xf]
    %v1083 = vld [vmem:[#allocation7 + $0x7d8] sm:$0xf]
    %v1084 = vld [vmem:[#allocation7 + $0x7dc] sm:$0xf]
    %v1085 = vld [vmem:[#allocation7 + $0x7e0] sm:$0xf]
    %v1086 = vld [vmem:[#allocation7 + $0x7e4] sm:$0xf]
    %v1087 = vld [vmem:[#allocation7 + $0x7e8] sm:$0xf]
    %v1088 = vld [vmem:[#allocation7 + $0x7ec] sm:$0xf]
    %v1089 = vld [vmem:[#allocation7 + $0x7f0] sm:$0xf]
    %v1090 = vld [vmem:[#allocation7 + $0x7f4] sm:$0xf]
    %v1091 = vld [vmem:[#allocation7 + $0x7f8] sm:$0xf]
    %v1092 = vld [vmem:[#allocation7 + $0x7fc] sm:$0xf]
    %v1093 = vld [vmem:[#allocation7 + $0x800] sm:$0xf]
    %v1094 = vld [vmem:[#allocation7 + $0x804] sm:$0xf]
    %v1095 = vld [vmem:[#allocation7 + $0x808] sm:$0xf]
    %v1096 = vld [vmem:[#allocation7 + $0x80c] sm:$0xf]
    %v1097 = vld [vmem:[#allocation7 + $0x810] sm:$0xf]
    %v1098 = vld [vmem:[#allocation7 + $0x814] sm:$0xf]
    %v1099 = vld [vmem:[#allocation7 + $0x818] sm:$0xf]
    %v1100 = vld [vmem:[#allocation7 + $0x81c] sm:$0xf]
    %v1101 = vld [vmem:[#allocation7 + $0x820] sm:$0xf]
    %v1102 = vld [vmem:[#allocation7 + $0x824] sm:$0xf]
    %v1103 = vld [vmem:[#allocation7 + $0x828] sm:$0xf]
    %v1104 = vld [vmem:[#allocation7 + $0x82c] sm:$0xf]
    %v1105 = vld [vmem:[#allocation7 + $0x830] sm:$0xf]
    %v1106 = vld [vmem:[#allocation7 + $0x834] sm:$0xf]
    %v1107 = vld [vmem:[#allocation7 + $0x838] sm:$0xf]
    %v1108 = vld [vmem:[#allocation7 + $0x83c] sm:$0xf]
    %v1109 = vld [vmem:[#allocation7 + $0x840] sm:$0xf]
    %v1110 = vld [vmem:[#allocation7 + $0x844] sm:$0xf]
    %v1111 = vld [vmem:[#allocation7 + $0x848] sm:$0xf]
    %v1112 = vld [vmem:[#allocation7 + $0x84c] sm:$0xf]
    %v1113 = vld [vmem:[#allocation7 + $0x850] sm:$0xf]
    %v1114 = vld [vmem:[#allocation7 + $0x854] sm:$0xf]
    %v1115 = vld [vmem:[#allocation7 + $0x858] sm:$0xf]
    %v1116 = vld [vmem:[#allocation7 + $0x85c] sm:$0xf]
    %v1117 = vld [vmem:[#allocation7 + $0x860] sm:$0xf]
    %v1118 = vld [vmem:[#allocation7 + $0x864] sm:$0xf]
    %v1119 = vld [vmem:[#allocation7 + $0x868] sm:$0xf]
    %v1120 = vld [vmem:[#allocation7 + $0x86c] sm:$0xf]
    %v1121 = vld [vmem:[#allocation7 + $0x870] sm:$0xf]
    %v1122 = vld [vmem:[#allocation7 + $0x874] sm:$0xf]
    %v1123 = vld [vmem:[#allocation7 + $0x878] sm:$0xf]
    %v1124 = vld [vmem:[#allocation7 + $0x87c] sm:$0xf]
    %v1125 = vld [vmem:[#allocation7 + $0x880] sm:$0xf]
    %v1126 = vld [vmem:[#allocation7 + $0x884] sm:$0xf]
    %v1127 = vld [vmem:[#allocation7 + $0x888] sm:$0xf]
    %v1128 = vld [vmem:[#allocation7 + $0x88c] sm:$0xf]
    %v1129 = vld [vmem:[#allocation7 + $0x890] sm:$0xf]
    %v1130 = vld [vmem:[#allocation7 + $0x894] sm:$0xf]
    %v1131 = vld [vmem:[#allocation7 + $0x898] sm:$0xf]
    %v1132 = vld [vmem:[#allocation7 + $0x89c] sm:$0xf]
    %v1133 = vld [vmem:[#allocation7 + $0x8a0] sm:$0xf]
    %v1134 = vld [vmem:[#allocation7 + $0x8a4] sm:$0xf]
    %v1135 = vld [vmem:[#allocation7 + $0x8a8] sm:$0xf]
    %v1136 = vld [vmem:[#allocation7 + $0x8ac] sm:$0xf]
    %v1137 = vld [vmem:[#allocation7 + $0x8b0] sm:$0xf]
    %v1138 = vld [vmem:[#allocation7 + $0x8b4] sm:$0xf]
    %v1139 = vld [vmem:[#allocation7 + $0x8b8] sm:$0xf]
    %v1140 = vld [vmem:[#allocation7 + $0x8bc] sm:$0xf]
    %v1141 = vld [vmem:[#allocation7 + $0x8c0] sm:$0xf]
    %v1142 = vld [vmem:[#allocation7 + $0x8c4] sm:$0xf]
    %v1143 = vld [vmem:[#allocation7 + $0x8c8] sm:$0xf]
    %v1144 = vld [vmem:[#allocation7 + $0x8cc] sm:$0xf]
    %v1145 = vld [vmem:[#allocation7 + $0x8d0] sm:$0xf]
    %v1146 = vld [vmem:[#allocation7 + $0x8d4] sm:$0xf]
    %v1147 = vld [vmem:[#allocation7 + $0x8d8] sm:$0xf]
    %v1148 = vld [vmem:[#allocation7 + $0x8dc] sm:$0xf]
    %v1149 = vld [vmem:[#allocation7 + $0x8e0] sm:$0xf]
    %v1150 = vld [vmem:[#allocation7 + $0x8e4] sm:$0xf]
    %v1151 = vld [vmem:[#allocation7 + $0x8e8] sm:$0xf]
    %v1152 = vld [vmem:[#allocation7 + $0x8ec] sm:$0xf]
    %v1153 = vld [vmem:[#allocation7 + $0x8f0] sm:$0xf]
    %v1154 = vld [vmem:[#allocation7 + $0x8f4] sm:$0xf]
    %v1155 = vld [vmem:[#allocation7 + $0x8f8] sm:$0xf]
    %v1156 = vld [vmem:[#allocation7 + $0x8fc] sm:$0xf]
    %v1157 = vld [vmem:[#allocation7 + $0x900] sm:$0xf]
    %v1158 = vld [vmem:[#allocation7 + $0x904] sm:$0xf]
    %v1159 = vld [vmem:[#allocation7 + $0x908] sm:$0xf]
    %v1160 = vld [vmem:[#allocation7 + $0x90c] sm:$0xf]
    %v1161 = vld [vmem:[#allocation7 + $0x910] sm:$0xf]
    %v1162 = vld [vmem:[#allocation7 + $0x914] sm:$0xf]
    %v1163 = vld [vmem:[#allocation7 + $0x918] sm:$0xf]
    %v1164 = vld [vmem:[#allocation7 + $0x91c] sm:$0xf]
    %v1165 = vld [vmem:[#allocation7 + $0x920] sm:$0xf]
    %v1166 = vld [vmem:[#allocation7 + $0x924] sm:$0xf]
    %v1167 = vld [vmem:[#allocation7 + $0x928] sm:$0xf]
    %v1168 = vld [vmem:[#allocation7 + $0x92c] sm:$0xf]
    %v1169 = vld [vmem:[#allocation7 + $0x930] sm:$0xf]
    %v1170 = vld [vmem:[#allocation7 + $0x934] sm:$0xf]
    %v1171 = vld [vmem:[#allocation7 + $0x938] sm:$0xf]
    %v1172 = vld [vmem:[#allocation7 + $0x93c] sm:$0xf]
    %v1173 = vld [vmem:[#allocation7 + $0x940] sm:$0xf]
    %v1174 = vld [vmem:[#allocation7 + $0x944] sm:$0xf]
    %v1175 = vld [vmem:[#allocation7 + $0x948] sm:$0xf]
    %v1176 = vld [vmem:[#allocation7 + $0x94c] sm:$0xf]
    %v1177 = vld [vmem:[#allocation7 + $0x950] sm:$0xf]
    %v1178 = vld [vmem:[#allocation7 + $0x954] sm:$0xf]
    %v1179 = vld [vmem:[#allocation7 + $0x958] sm:$0xf]
    %v1180 = vld [vmem:[#allocation7 + $0x95c] sm:$0xf]
    %v1181 = vld [vmem:[#allocation7 + $0x960] sm:$0xf]
    %v1182 = vld [vmem:[#allocation7 + $0x964] sm:$0xf]
    %v1183 = vld [vmem:[#allocation7 + $0x968] sm:$0xf]
    %v1184 = vld [vmem:[#allocation7 + $0x96c] sm:$0xf]
    %v1185 = vld [vmem:[#allocation7 + $0x970] sm:$0xf]
    %v1186 = vld [vmem:[#allocation7 + $0x974] sm:$0xf]
    %v1187 = vld [vmem:[#allocation7 + $0x978] sm:$0xf]
    %v1188 = vld [vmem:[#allocation7 + $0x97c] sm:$0xf]
    %v1189 = vld [vmem:[#allocation7 + $0x980] sm:$0xf]
    %v1190 = vld [vmem:[#allocation7 + $0x984] sm:$0xf]
    %v1191 = vld [vmem:[#allocation7 + $0x988] sm:$0xf]
    %v1192 = vld [vmem:[#allocation7 + $0x98c] sm:$0xf]
    %v1193 = vld [vmem:[#allocation7 + $0x990] sm:$0xf]
    %v1194 = vld [vmem:[#allocation7 + $0x994] sm:$0xf]
    %v1195 = vld [vmem:[#allocation7 + $0x998] sm:$0xf]
    %v1196 = vld [vmem:[#allocation7 + $0x99c] sm:$0xf]
    %v1197 = vld [vmem:[#allocation7 + $0x9a0] sm:$0xf]
    %v1198 = vld [vmem:[#allocation7 + $0x9a4] sm:$0xf]
    %v1199 = vld [vmem:[#allocation7 + $0x9a8] sm:$0xf]
    %v1200 = vld [vmem:[#allocation7 + $0x9ac] sm:$0xf]
    %v1201 = vld [vmem:[#allocation7 + $0x9b0] sm:$0xf]
    %v1202 = vld [vmem:[#allocation7 + $0x9b4] sm:$0xf]
    %v1203 = vld [vmem:[#allocation7 + $0x9b8] sm:$0xf]
    %v1204 = vld [vmem:[#allocation7 + $0x9bc] sm:$0xf]
    %v1205 = vld [vmem:[#allocation7 + $0x9c0] sm:$0xf]
    %v1206 = vld [vmem:[#allocation7 + $0x9c4] sm:$0xf]
    %v1207 = vld [vmem:[#allocation7 + $0x9c8] sm:$0xf]
    %v1208 = vld [vmem:[#allocation7 + $0x9cc] sm:$0xf]
    %v1209 = vld [vmem:[#allocation7 + $0x9d0] sm:$0xf]
    %v1210 = vld [vmem:[#allocation7 + $0x9d4] sm:$0xf]
    %v1211 = vld [vmem:[#allocation7 + $0x9d8] sm:$0xf]
    %v1212 = vld [vmem:[#allocation7 + $0x9dc] sm:$0xf]
    %v1213 = vld [vmem:[#allocation7 + $0x9e0] sm:$0xf]
    %v1214 = vld [vmem:[#allocation7 + $0x9e4] sm:$0xf]
    %v1215 = vld [vmem:[#allocation7 + $0x9e8] sm:$0xf]
    %v1216 = vld [vmem:[#allocation7 + $0x9ec] sm:$0xf]
    %v1217 = vld [vmem:[#allocation7 + $0x9f0] sm:$0xf]
    %v1218 = vld [vmem:[#allocation7 + $0x9f4] sm:$0xf]
    %v1219 = vld [vmem:[#allocation7 + $0x9f8] sm:$0xf]
    %v1220 = vld [vmem:[#allocation7 + $0x9fc] sm:$0xf]
    %v1221 = vld [vmem:[#allocation7 + $0xa00] sm:$0xf]
    %v1222 = vld [vmem:[#allocation7 + $0xa04] sm:$0xf]
    %v1223 = vld [vmem:[#allocation7 + $0xa08] sm:$0xf]
    %v1224 = vld [vmem:[#allocation7 + $0xa0c] sm:$0xf]
    %v1225 = vld [vmem:[#allocation7 + $0xa10] sm:$0xf]
    %v1226 = vld [vmem:[#allocation7 + $0xa14] sm:$0xf]
    %v1227 = vld [vmem:[#allocation7 + $0xa18] sm:$0xf]
    %v1228 = vld [vmem:[#allocation7 + $0xa1c] sm:$0xf]
    %v1229 = vld [vmem:[#allocation7 + $0xa20] sm:$0xf]
    %v1230 = vld [vmem:[#allocation7 + $0xa24] sm:$0xf]
    %v1231 = vld [vmem:[#allocation7 + $0xa28] sm:$0xf]
    %v1232 = vld [vmem:[#allocation7 + $0xa2c] sm:$0xf]
    %v1233 = vld [vmem:[#allocation7 + $0xa30] sm:$0xf]
    %v1234 = vld [vmem:[#allocation7 + $0xa34] sm:$0xf]
    %v1235 = vld [vmem:[#allocation7 + $0xa38] sm:$0xf]
    %v1236 = vld [vmem:[#allocation7 + $0xa3c] sm:$0xf]
    %v1237 = vld [vmem:[#allocation7 + $0xa40] sm:$0xf]
    %v1238 = vld [vmem:[#allocation7 + $0xa44] sm:$0xf]
    %v1239 = vld [vmem:[#allocation7 + $0xa48] sm:$0xf]
    %v1240 = vld [vmem:[#allocation7 + $0xa4c] sm:$0xf]
    %v1241 = vld [vmem:[#allocation7 + $0xa50] sm:$0xf]
    %v1242 = vld [vmem:[#allocation7 + $0xa54] sm:$0xf]
    %v1243 = vld [vmem:[#allocation7 + $0xa58] sm:$0xf]
    %v1244 = vld [vmem:[#allocation7 + $0xa5c] sm:$0xf]
    %v1245 = vld [vmem:[#allocation7 + $0xa60] sm:$0xf]
    %v1246 = vld [vmem:[#allocation7 + $0xa64] sm:$0xf]
    %v1247 = vld [vmem:[#allocation7 + $0xa68] sm:$0xf]
    %v1248 = vld [vmem:[#allocation7 + $0xa6c] sm:$0xf]
    %v1249 = vld [vmem:[#allocation7 + $0xa70] sm:$0xf]
    %v1250 = vld [vmem:[#allocation7 + $0xa74] sm:$0xf]
    %v1251 = vld [vmem:[#allocation7 + $0xa78] sm:$0xf]
    %v1252 = vld [vmem:[#allocation7 + $0xa7c] sm:$0xf]
    %v1253 = vld [vmem:[#allocation7 + $0xa80] sm:$0xf]
    %v1254 = vld [vmem:[#allocation7 + $0xa84] sm:$0xf]
    %v1255 = vld [vmem:[#allocation7 + $0xa88] sm:$0xf]
    %v1256 = vld [vmem:[#allocation7 + $0xa8c] sm:$0xf]
    %v1257 = vld [vmem:[#allocation7 + $0xa90] sm:$0xf]
    %v1258 = vld [vmem:[#allocation7 + $0xa94] sm:$0xf]
    %v1259 = vld [vmem:[#allocation7 + $0xa98] sm:$0xf]
    %v1260 = vld [vmem:[#allocation7 + $0xa9c] sm:$0xf]
    %v1261 = vld [vmem:[#allocation7 + $0xaa0] sm:$0xf]
    %v1262 = vld [vmem:[#allocation7 + $0xaa4] sm:$0xf]
    %v1263 = vld [vmem:[#allocation7 + $0xaa8] sm:$0xf]
    %v1264 = vld [vmem:[#allocation7 + $0xaac] sm:$0xf]
    %v1265 = vld [vmem:[#allocation7 + $0xab0] sm:$0xf]
    %v1266 = vld [vmem:[#allocation7 + $0xab4] sm:$0xf]
    %v1267 = vld [vmem:[#allocation7 + $0xab8] sm:$0xf]
    %v1268 = vld [vmem:[#allocation7 + $0xabc] sm:$0xf]
    %v1269 = vld [vmem:[#allocation7 + $0xac0] sm:$0xf]
    %v1270 = vld [vmem:[#allocation7 + $0xac4] sm:$0xf]
    %v1271 = vld [vmem:[#allocation7 + $0xac8] sm:$0xf]
    %v1272 = vld [vmem:[#allocation7 + $0xacc] sm:$0xf]
    %v1273 = vld [vmem:[#allocation7 + $0xad0] sm:$0xf]
    %v1274 = vld [vmem:[#allocation7 + $0xad4] sm:$0xf]
    %v1275 = vld [vmem:[#allocation7 + $0xad8] sm:$0xf]
    %v1276 = vld [vmem:[#allocation7 + $0xadc] sm:$0xf]
    %v1277 = vld [vmem:[#allocation7 + $0xae0] sm:$0xf]
    %v1278 = vld [vmem:[#allocation7 + $0xae4] sm:$0xf]
    %v1279 = vld [vmem:[#allocation7 + $0xae8] sm:$0xf]
    %v1280 = vld [vmem:[#allocation7 + $0xaec] sm:$0xf]
    %v1281 = vld [vmem:[#allocation7 + $0xaf0] sm:$0xf]
    %v1282 = vld [vmem:[#allocation7 + $0xaf4] sm:$0xf]
    %v1283 = vld [vmem:[#allocation7 + $0xaf8] sm:$0xf]
    %v1284 = vld [vmem:[#allocation7 + $0xafc] sm:$0xf]
    %v1285 = vld [vmem:[#allocation7 + $0xb00] sm:$0xf]
    %v1286 = vld [vmem:[#allocation7 + $0xb04] sm:$0xf]
    %v1287 = vld [vmem:[#allocation7 + $0xb08] sm:$0xf]
    %v1288 = vld [vmem:[#allocation7 + $0xb0c] sm:$0xf]
    %v1289 = vld [vmem:[#allocation7 + $0xb10] sm:$0xf]
    %v1290 = vld [vmem:[#allocation7 + $0xb14] sm:$0xf]
    %v1291 = vld [vmem:[#allocation7 + $0xb18] sm:$0xf]
    %v1292 = vld [vmem:[#allocation7 + $0xb1c] sm:$0xf]
    %v1293 = vld [vmem:[#allocation7 + $0xb20] sm:$0xf]
    %v1294 = vld [vmem:[#allocation7 + $0xb24] sm:$0xf]
    %v1295 = vld [vmem:[#allocation7 + $0xb28] sm:$0xf]
    %v1296 = vld [vmem:[#allocation7 + $0xb2c] sm:$0xf]
    %v1297 = vld [vmem:[#allocation7 + $0xb30] sm:$0xf]
    %v1298 = vld [vmem:[#allocation7 + $0xb34] sm:$0xf]
    %v1299 = vld [vmem:[#allocation7 + $0xb38] sm:$0xf]
    %v1300 = vld [vmem:[#allocation7 + $0xb3c] sm:$0xf]
    %v1301 = vld [vmem:[#allocation7 + $0xb40] sm:$0xf]
    %v1302 = vld [vmem:[#allocation7 + $0xb44] sm:$0xf]
    %v1303 = vld [vmem:[#allocation7 + $0xb48] sm:$0xf]
    %v1304 = vld [vmem:[#allocation7 + $0xb4c] sm:$0xf]
    %v1305 = vld [vmem:[#allocation7 + $0xb50] sm:$0xf]
    %v1306 = vld [vmem:[#allocation7 + $0xb54] sm:$0xf]
    %v1307 = vld [vmem:[#allocation7 + $0xb58] sm:$0xf]
    %v1308 = vld [vmem:[#allocation7 + $0xb5c] sm:$0xf]
    %v1309 = vld [vmem:[#allocation7 + $0xb60] sm:$0xf]
    %v1310 = vld [vmem:[#allocation7 + $0xb64] sm:$0xf]
    %v1311 = vld [vmem:[#allocation7 + $0xb68] sm:$0xf]
    %v1312 = vld [vmem:[#allocation7 + $0xb6c] sm:$0xf]
    %v1313 = vld [vmem:[#allocation7 + $0xb70] sm:$0xf]
    %v1314 = vld [vmem:[#allocation7 + $0xb74] sm:$0xf]
    %v1315 = vld [vmem:[#allocation7 + $0xb78] sm:$0xf]
    %v1316 = vld [vmem:[#allocation7 + $0xb7c] sm:$0xf]
    %v1317 = vld [vmem:[#allocation7 + $0xb80] sm:$0xf]
    %v1318 = vld [vmem:[#allocation7 + $0xb84] sm:$0xf]
    %v1319 = vld [vmem:[#allocation7 + $0xb88] sm:$0xf]
    %v1320 = vld [vmem:[#allocation7 + $0xb8c] sm:$0xf]
    %v1321 = vld [vmem:[#allocation7 + $0xb90] sm:$0xf]
    %v1322 = vld [vmem:[#allocation7 + $0xb94] sm:$0xf]
    %v1323 = vld [vmem:[#allocation7 + $0xb98] sm:$0xf]
    %v1324 = vld [vmem:[#allocation7 + $0xb9c] sm:$0xf]
    %v1325 = vld [vmem:[#allocation7 + $0xba0] sm:$0xf]
    %v1326 = vld [vmem:[#allocation7 + $0xba4] sm:$0xf]
    %v1327 = vld [vmem:[#allocation7 + $0xba8] sm:$0xf]
    %v1328 = vld [vmem:[#allocation7 + $0xbac] sm:$0xf]
    %v1329 = vld [vmem:[#allocation7 + $0xbb0] sm:$0xf]
    %v1330 = vld [vmem:[#allocation7 + $0xbb4] sm:$0xf]
    %v1331 = vld [vmem:[#allocation7 + $0xbb8] sm:$0xf]
    %v1332 = vld [vmem:[#allocation7 + $0xbbc] sm:$0xf]
    %v1349 = vunpack.c.l.b16 %v581
    %v1350 = vunpack.c.l.b16 %v582
    %v1351 = vunpack.c.l.b16 %v583
    %v1352 = vunpack.c.l.b16 %v584
    %v1353 = vunpack.c.l.b16 %v585
    %v1354 = vunpack.c.l.b16 %v586
    %v1355 = vunpack.c.l.b16 %v587
    %v1356 = vunpack.c.l.b16 %v588
    %v1357 = vunpack.c.l.b16 %v589
    %v1358 = vunpack.c.l.b16 %v590
    %v1359 = vunpack.c.l.b16 %v591
    %v1360 = vunpack.c.l.b16 %v592
    %v1361 = vunpack.c.l.b16 %v593
    %v1362 = vunpack.c.l.b16 %v594
    %v1363 = vunpack.c.l.b16 %v595
    %v1364 = vunpack.c.l.b16 %v596
    %v1365 = vpack.c.b16 %v1350, %v1349
    %v1366 = vpack.c.b16 %v1352, %v1351
    %v1367 = vpack.c.b16 %v1354, %v1353
    %v1368 = vpack.c.b16 %v1356, %v1355
    %v1369 = vpack.c.b16 %v1358, %v1357
    %v1370 = vpack.c.b16 %v1360, %v1359
    %v1371 = vpack.c.b16 %v1362, %v1361
    %v1372 = vpack.c.b16 %v1364, %v1363
    %1381 = vmatpush.bf16.msra.mxu0 %v1372
    %1382 = vmatpush.bf16.msra.mxu0 %v1371
    %1383 = vmatpush.bf16.msra.mxu0 %v1370
    %1384 = vmatpush.bf16.msra.mxu0 %v1369
    %1385 = vmatpush.bf16.msra.mxu0 %v1368
    %1386 = vmatpush.bf16.msra.mxu0 %v1367
    %1387 = vmatpush.bf16.msra.mxu0 %v1366
    %1388 = vmatpush.bf16.msra.mxu0 %v1365
    %1389 = vmatmul.bf16.gmra.mxu0 %v534
    %v1390 = vpop.f32.mrf.mxu0
    %v1391 = vadd.f32 0.0, %v1390
    %v1392 = vpop.f32.mrf.mxu0
    %1393 = vdwg.mxu0
    %v1410 = vunpack.c.l.b16 %v597
    %v1411 = vunpack.c.l.b16 %v598
    %v1412 = vunpack.c.l.b16 %v599
    %v1413 = vunpack.c.l.b16 %v600
    %v1414 = vunpack.c.l.b16 %v601
    %v1415 = vunpack.c.l.b16 %v602
    %v1416 = vunpack.c.l.b16 %v603
    %v1417 = vunpack.c.l.b16 %v604
    %v1418 = vunpack.c.l.b16 %v605
    %v1419 = vunpack.c.l.b16 %v606
    %v1420 = vunpack.c.l.b16 %v607
    %v1421 = vunpack.c.l.b16 %v608
    %v1422 = vunpack.c.l.b16 %v609
    %v1423 = vunpack.c.l.b16 %v610
    %v1424 = vunpack.c.l.b16 %v611
    %v1425 = vunpack.c.l.b16 %v612
    %v1426 = vpack.c.b16 %v1411, %v1410
    %v1427 = vpack.c.b16 %v1413, %v1412
    %v1428 = vpack.c.b16 %v1415, %v1414
    %v1429 = vpack.c.b16 %v1417, %v1416
    %v1430 = vpack.c.b16 %v1419, %v1418
    %v1431 = vpack.c.b16 %v1421, %v1420
    %v1432 = vpack.c.b16 %v1423, %v1422
    %v1433 = vpack.c.b16 %v1425, %v1424
    %1442 = vmatpush.bf16.msra.mxu0 %v1433
    %1443 = vmatpush.bf16.msra.mxu0 %v1432
    %1444 = vmatpush.bf16.msra.mxu0 %v1431
    %1445 = vmatpush.bf16.msra.mxu0 %v1430
    %1446 = vmatpush.bf16.msra.mxu0 %v1429
    %1447 = vmatpush.bf16.msra.mxu0 %v1428
    %1448 = vmatpush.bf16.msra.mxu0 %v1427
    %1449 = vmatpush.bf16.msra.mxu0 %v1426
    %1450 = vmatmul.bf16.gmra.mxu0 %v535
    %v1451 = vpop.f32.mrf.mxu0
    %v1452 = vadd.f32 0.0, %v1451
    %v1453 = vpop.f32.mrf.mxu0
    %1454 = vdwg.mxu0
    %v1471 = vunpack.c.l.b16 %v613
    %v1472 = vunpack.c.l.b16 %v614
    %v1473 = vunpack.c.l.b16 %v615
    %v1474 = vunpack.c.l.b16 %v616
    %v1475 = vunpack.c.l.b16 %v617
    %v1476 = vunpack.c.l.b16 %v618
    %v1477 = vunpack.c.l.b16 %v619
    %v1478 = vunpack.c.l.b16 %v620
    %v1479 = vunpack.c.l.b16 %v621
    %v1480 = vunpack.c.l.b16 %v622
    %v1481 = vunpack.c.l.b16 %v623
    %v1482 = vunpack.c.l.b16 %v624
    %v1483 = vunpack.c.l.b16 %v625
    %v1484 = vunpack.c.l.b16 %v626
    %v1485 = vunpack.c.l.b16 %v627
    %v1486 = vunpack.c.l.b16 %v628
    %v1487 = vpack.c.b16 %v1472, %v1471
    %v1488 = vpack.c.b16 %v1474, %v1473
    %v1489 = vpack.c.b16 %v1476, %v1475
    %v1490 = vpack.c.b16 %v1478, %v1477
    %v1491 = vpack.c.b16 %v1480, %v1479
    %v1492 = vpack.c.b16 %v1482, %v1481
    %v1493 = vpack.c.b16 %v1484, %v1483
    %v1494 = vpack.c.b16 %v1486, %v1485
    %1503 = vmatpush.bf16.msra.mxu0 %v1494
    %1504 = vmatpush.bf16.msra.mxu0 %v1493
    %1505 = vmatpush.bf16.msra.mxu0 %v1492
    %1506 = vmatpush.bf16.msra.mxu0 %v1491
    %1507 = vmatpush.bf16.msra.mxu0 %v1490
    %1508 = vmatpush.bf16.msra.mxu0 %v1489
    %1509 = vmatpush.bf16.msra.mxu0 %v1488
    %1510 = vmatpush.bf16.msra.mxu0 %v1487
    %1511 = vmatmul.bf16.gmra.mxu0 %v536
    %v1512 = vpop.f32.mrf.mxu0
    %v1513 = vadd.f32 0.0, %v1512
    %v1514 = vpop.f32.mrf.mxu0
    %1515 = vdwg.mxu0
    %v1532 = vunpack.c.l.b16 %v629
    %v1533 = vunpack.c.l.b16 %v630
    %v1534 = vunpack.c.l.b16 %v631
    %v1535 = vunpack.c.l.b16 %v632
    %v1536 = vunpack.c.l.b16 %v633
    %v1537 = vunpack.c.l.b16 %v634
    %v1538 = vunpack.c.l.b16 %v635
    %v1539 = vunpack.c.l.b16 %v636
    %v1540 = vunpack.c.l.b16 %v637
    %v1541 = vunpack.c.l.b16 %v638
    %v1542 = vunpack.c.l.b16 %v639
    %v1543 = vunpack.c.l.b16 %v640
    %v1544 = vunpack.c.l.b16 %v641
    %v1545 = vunpack.c.l.b16 %v642
    %v1546 = vunpack.c.l.b16 %v643
    %v1547 = vunpack.c.l.b16 %v644
    %v1548 = vpack.c.b16 %v1533, %v1532
    %v1549 = vpack.c.b16 %v1535, %v1534
    %v1550 = vpack.c.b16 %v1537, %v1536
    %v1551 = vpack.c.b16 %v1539, %v1538
    %v1552 = vpack.c.b16 %v1541, %v1540
    %v1553 = vpack.c.b16 %v1543, %v1542
    %v1554 = vpack.c.b16 %v1545, %v1544
    %v1555 = vpack.c.b16 %v1547, %v1546
    %1564 = vmatpush.bf16.msra.mxu0 %v1555
    %1565 = vmatpush.bf16.msra.mxu0 %v1554
    %1566 = vmatpush.bf16.msra.mxu0 %v1553
    %1567 = vmatpush.bf16.msra.mxu0 %v1552
    %1568 = vmatpush.bf16.msra.mxu0 %v1551
    %1569 = vmatpush.bf16.msra.mxu0 %v1550
    %1570 = vmatpush.bf16.msra.mxu0 %v1549
    %1571 = vmatpush.bf16.msra.mxu0 %v1548
    %1572 = vmatmul.bf16.gmra.mxu0 %v537
    %v1573 = vpop.f32.mrf.mxu0
    %v1574 = vadd.f32 0.0, %v1573
    %v1575 = vpop.f32.mrf.mxu0
    %1576 = vdwg.mxu0
    %v1593 = vunpack.c.l.b16 %v645
    %v1594 = vunpack.c.l.b16 %v646
    %v1595 = vunpack.c.l.b16 %v647
    %v1596 = vunpack.c.l.b16 %v648
    %v1597 = vunpack.c.l.b16 %v649
    %v1598 = vunpack.c.l.b16 %v650
    %v1599 = vunpack.c.l.b16 %v651
    %v1600 = vunpack.c.l.b16 %v652
    %v1601 = vunpack.c.l.b16 %v653
    %v1602 = vunpack.c.l.b16 %v654
    %v1603 = vunpack.c.l.b16 %v655
    %v1604 = vunpack.c.l.b16 %v656
    %v1605 = vunpack.c.l.b16 %v657
    %v1606 = vunpack.c.l.b16 %v658
    %v1607 = vunpack.c.l.b16 %v659
    %v1608 = vunpack.c.l.b16 %v660
    %v1609 = vpack.c.b16 %v1594, %v1593
    %v1610 = vpack.c.b16 %v1596, %v1595
    %v1611 = vpack.c.b16 %v1598, %v1597
    %v1612 = vpack.c.b16 %v1600, %v1599
    %v1613 = vpack.c.b16 %v1602, %v1601
    %v1614 = vpack.c.b16 %v1604, %v1603
    %v1615 = vpack.c.b16 %v1606, %v1605
    %v1616 = vpack.c.b16 %v1608, %v1607
    %1625 = vmatpush.bf16.msra.mxu0 %v1616
    %1626 = vmatpush.bf16.msra.mxu0 %v1615
    %1627 = vmatpush.bf16.msra.mxu0 %v1614
    %1628 = vmatpush.bf16.msra.mxu0 %v1613
    %1629 = vmatpush.bf16.msra.mxu0 %v1612
    %1630 = vmatpush.bf16.msra.mxu0 %v1611
    %1631 = vmatpush.bf16.msra.mxu0 %v1610
    %1632 = vmatpush.bf16.msra.mxu0 %v1609
    %1633 = vmatmul.bf16.gmra.mxu0 %v538
    %v1634 = vpop.f32.mrf.mxu0
    %v1635 = vadd.f32 0.0, %v1634
    %v1636 = vpop.f32.mrf.mxu0
    %1637 = vdwg.mxu0
    %v1654 = vunpack.c.l.b16 %v661
    %v1655 = vunpack.c.l.b16 %v662
    %v1656 = vunpack.c.l.b16 %v663
    %v1657 = vunpack.c.l.b16 %v664
    %v1658 = vunpack.c.l.b16 %v665
    %v1659 = vunpack.c.l.b16 %v666
    %v1660 = vunpack.c.l.b16 %v667
    %v1661 = vunpack.c.l.b16 %v668
    %v1662 = vunpack.c.l.b16 %v669
    %v1663 = vunpack.c.l.b16 %v670
    %v1664 = vunpack.c.l.b16 %v671
    %v1665 = vunpack.c.l.b16 %v672
    %v1666 = vunpack.c.l.b16 %v673
    %v1667 = vunpack.c.l.b16 %v674
    %v1668 = vunpack.c.l.b16 %v675
    %v1669 = vunpack.c.l.b16 %v676
    %v1670 = vpack.c.b16 %v1655, %v1654
    %v1671 = vpack.c.b16 %v1657, %v1656
    %v1672 = vpack.c.b16 %v1659, %v1658
    %v1673 = vpack.c.b16 %v1661, %v1660
    %v1674 = vpack.c.b16 %v1663, %v1662
    %v1675 = vpack.c.b16 %v1665, %v1664
    %v1676 = vpack.c.b16 %v1667, %v1666
    %v1677 = vpack.c.b16 %v1669, %v1668
    %1686 = vmatpush.bf16.msra.mxu0 %v1677
    %1687 = vmatpush.bf16.msra.mxu0 %v1676
    %1688 = vmatpush.bf16.msra.mxu0 %v1675
    %1689 = vmatpush.bf16.msra.mxu0 %v1674
    %1690 = vmatpush.bf16.msra.mxu0 %v1673
    %1691 = vmatpush.bf16.msra.mxu0 %v1672
    %1692 = vmatpush.bf16.msra.mxu0 %v1671
    %1693 = vmatpush.bf16.msra.mxu0 %v1670
    %1694 = vmatmul.bf16.gmra.mxu0 %v539
    %v1695 = vpop.f32.mrf.mxu0
    %v1696 = vadd.f32 0.0, %v1695
    %v1697 = vpop.f32.mrf.mxu0
    %1698 = vdwg.mxu0
    %v1715 = vunpack.c.l.b16 %v677
    %v1716 = vunpack.c.l.b16 %v678
    %v1717 = vunpack.c.l.b16 %v679
    %v1718 = vunpack.c.l.b16 %v680
    %v1719 = vunpack.c.l.b16 %v681
    %v1720 = vunpack.c.l.b16 %v682
    %v1721 = vunpack.c.l.b16 %v683
    %v1722 = vunpack.c.l.b16 %v684
    %v1723 = vunpack.c.l.b16 %v685
    %v1724 = vunpack.c.l.b16 %v686
    %v1725 = vunpack.c.l.b16 %v687
    %v1726 = vunpack.c.l.b16 %v688
    %v1727 = vunpack.c.l.b16 %v689
    %v1728 = vunpack.c.l.b16 %v690
    %v1729 = vunpack.c.l.b16 %v691
    %v1730 = vunpack.c.l.b16 %v692
    %v1731 = vpack.c.b16 %v1716, %v1715
    %v1732 = vpack.c.b16 %v1718, %v1717
    %v1733 = vpack.c.b16 %v1720, %v1719
    %v1734 = vpack.c.b16 %v1722, %v1721
    %v1735 = vpack.c.b16 %v1724, %v1723
    %v1736 = vpack.c.b16 %v1726, %v1725
    %v1737 = vpack.c.b16 %v1728, %v1727
    %v1738 = vpack.c.b16 %v1730, %v1729
    %1747 = vmatpush.bf16.msra.mxu0 %v1738
    %1748 = vmatpush.bf16.msra.mxu0 %v1737
    %1749 = vmatpush.bf16.msra.mxu0 %v1736
    %1750 = vmatpush.bf16.msra.mxu0 %v1735
    %1751 = vmatpush.bf16.msra.mxu0 %v1734
    %1752 = vmatpush.bf16.msra.mxu0 %v1733
    %1753 = vmatpush.bf16.msra.mxu0 %v1732
    %1754 = vmatpush.bf16.msra.mxu0 %v1731
    %1755 = vmatmul.bf16.gmra.mxu0 %v540
    %v1756 = vpop.f32.mrf.mxu0
    %v1757 = vadd.f32 0.0, %v1756
    %v1758 = vpop.f32.mrf.mxu0
    %1759 = vdwg.mxu0
    %v1776 = vunpack.c.l.b16 %v693
    %v1777 = vunpack.c.l.b16 %v694
    %v1778 = vunpack.c.l.b16 %v695
    %v1779 = vunpack.c.l.b16 %v696
    %v1780 = vunpack.c.l.b16 %v697
    %v1781 = vunpack.c.l.b16 %v698
    %v1782 = vunpack.c.l.b16 %v699
    %v1783 = vunpack.c.l.b16 %v700
    %v1784 = vunpack.c.l.b16 %v701
    %v1785 = vunpack.c.l.b16 %v702
    %v1786 = vunpack.c.l.b16 %v703
    %v1787 = vunpack.c.l.b16 %v704
    %v1788 = vunpack.c.l.b16 %v705
    %v1789 = vunpack.c.l.b16 %v706
    %v1790 = vunpack.c.l.b16 %v707
    %v1791 = vunpack.c.l.b16 %v708
    %v1792 = vpack.c.b16 %v1777, %v1776
    %v1793 = vpack.c.b16 %v1779, %v1778
    %v1794 = vpack.c.b16 %v1781, %v1780
    %v1795 = vpack.c.b16 %v1783, %v1782
    %v1796 = vpack.c.b16 %v1785, %v1784
    %v1797 = vpack.c.b16 %v1787, %v1786
    %v1798 = vpack.c.b16 %v1789, %v1788
    %v1799 = vpack.c.b16 %v1791, %v1790
    %1808 = vmatpush.bf16.msra.mxu0 %v1799
    %1809 = vmatpush.bf16.msra.mxu0 %v1798
    %1810 = vmatpush.bf16.msra.mxu0 %v1797
    %1811 = vmatpush.bf16.msra.mxu0 %v1796
    %1812 = vmatpush.bf16.msra.mxu0 %v1795
    %1813 = vmatpush.bf16.msra.mxu0 %v1794
    %1814 = vmatpush.bf16.msra.mxu0 %v1793
    %1815 = vmatpush.bf16.msra.mxu0 %v1792
    %1816 = vmatmul.bf16.gmra.mxu0 %v541
    %v1817 = vpop.f32.mrf.mxu0
    %v1818 = vadd.f32 0.0, %v1817
    %v1819 = vpop.f32.mrf.mxu0
    %1820 = vdwg.mxu0
    %v1837 = vunpack.c.l.b16 %v709
    %v1838 = vunpack.c.l.b16 %v710
    %v1839 = vunpack.c.l.b16 %v711
    %v1840 = vunpack.c.l.b16 %v712
    %v1841 = vunpack.c.l.b16 %v713
    %v1842 = vunpack.c.l.b16 %v714
    %v1843 = vunpack.c.l.b16 %v715
    %v1844 = vunpack.c.l.b16 %v716
    %v1845 = vunpack.c.l.b16 %v717
    %v1846 = vunpack.c.l.b16 %v718
    %v1847 = vunpack.c.l.b16 %v719
    %v1848 = vunpack.c.l.b16 %v720
    %v1849 = vunpack.c.l.b16 %v721
    %v1850 = vunpack.c.l.b16 %v722
    %v1851 = vunpack.c.l.b16 %v723
    %v1852 = vunpack.c.l.b16 %v724
    %v1853 = vpack.c.b16 %v1838, %v1837
    %v1854 = vpack.c.b16 %v1840, %v1839
    %v1855 = vpack.c.b16 %v1842, %v1841
    %v1856 = vpack.c.b16 %v1844, %v1843
    %v1857 = vpack.c.b16 %v1846, %v1845
    %v1858 = vpack.c.b16 %v1848, %v1847
    %v1859 = vpack.c.b16 %v1850, %v1849
    %v1860 = vpack.c.b16 %v1852, %v1851
    %1869 = vmatpush.bf16.msra.mxu0 %v1860
    %1870 = vmatpush.bf16.msra.mxu0 %v1859
    %1871 = vmatpush.bf16.msra.mxu0 %v1858
    %1872 = vmatpush.bf16.msra.mxu0 %v1857
    %1873 = vmatpush.bf16.msra.mxu0 %v1856
    %1874 = vmatpush.bf16.msra.mxu0 %v1855
    %1875 = vmatpush.bf16.msra.mxu0 %v1854
    %1876 = vmatpush.bf16.msra.mxu0 %v1853
    %1877 = vmatmul.bf16.gmra.mxu0 %v542
    %v1878 = vpop.f32.mrf.mxu0
    %v1879 = vadd.f32 0.0, %v1878
    %v1880 = vpop.f32.mrf.mxu0
    %1881 = vdwg.mxu0
    %v1898 = vunpack.c.l.b16 %v725
    %v1899 = vunpack.c.l.b16 %v726
    %v1900 = vunpack.c.l.b16 %v727
    %v1901 = vunpack.c.l.b16 %v728
    %v1902 = vunpack.c.l.b16 %v729
    %v1903 = vunpack.c.l.b16 %v730
    %v1904 = vunpack.c.l.b16 %v731
    %v1905 = vunpack.c.l.b16 %v732
    %v1906 = vunpack.c.l.b16 %v733
    %v1907 = vunpack.c.l.b16 %v734
    %v1908 = vunpack.c.l.b16 %v735
    %v1909 = vunpack.c.l.b16 %v736
    %v1910 = vunpack.c.l.b16 %v737
    %v1911 = vunpack.c.l.b16 %v738
    %v1912 = vunpack.c.l.b16 %v739
    %v1913 = vunpack.c.l.b16 %v740
    %v1914 = vpack.c.b16 %v1899, %v1898
    %v1915 = vpack.c.b16 %v1901, %v1900
    %v1916 = vpack.c.b16 %v1903, %v1902
    %v1917 = vpack.c.b16 %v1905, %v1904
    %v1918 = vpack.c.b16 %v1907, %v1906
    %v1919 = vpack.c.b16 %v1909, %v1908
    %v1920 = vpack.c.b16 %v1911, %v1910
    %v1921 = vpack.c.b16 %v1913, %v1912
    %1930 = vmatpush.bf16.msra.mxu0 %v1921
    %1931 = vmatpush.bf16.msra.mxu0 %v1920
    %1932 = vmatpush.bf16.msra.mxu0 %v1919
    %1933 = vmatpush.bf16.msra.mxu0 %v1918
    %1934 = vmatpush.bf16.msra.mxu0 %v1917
    %1935 = vmatpush.bf16.msra.mxu0 %v1916
    %1936 = vmatpush.bf16.msra.mxu0 %v1915
    %1937 = vmatpush.bf16.msra.mxu0 %v1914
    %1938 = vmatmul.bf16.gmra.mxu0 %v543
    %v1939 = vpop.f32.mrf.mxu0
    %v1940 = vadd.f32 0.0, %v1939
    %v1941 = vpop.f32.mrf.mxu0
    %1942 = vdwg.mxu0
    %v1959 = vunpack.c.l.b16 %v741
    %v1960 = vunpack.c.l.b16 %v742
    %v1961 = vunpack.c.l.b16 %v743
    %v1962 = vunpack.c.l.b16 %v744
    %v1963 = vunpack.c.l.b16 %v745
    %v1964 = vunpack.c.l.b16 %v746
    %v1965 = vunpack.c.l.b16 %v747
    %v1966 = vunpack.c.l.b16 %v748
    %v1967 = vunpack.c.l.b16 %v749
    %v1968 = vunpack.c.l.b16 %v750
    %v1969 = vunpack.c.l.b16 %v751
    %v1970 = vunpack.c.l.b16 %v752
    %v1971 = vunpack.c.l.b16 %v753
    %v1972 = vunpack.c.l.b16 %v754
    %v1973 = vunpack.c.l.b16 %v755
    %v1974 = vunpack.c.l.b16 %v756
    %v1975 = vpack.c.b16 %v1960, %v1959
    %v1976 = vpack.c.b16 %v1962, %v1961
    %v1977 = vpack.c.b16 %v1964, %v1963
    %v1978 = vpack.c.b16 %v1966, %v1965
    %v1979 = vpack.c.b16 %v1968, %v1967
    %v1980 = vpack.c.b16 %v1970, %v1969
    %v1981 = vpack.c.b16 %v1972, %v1971
    %v1982 = vpack.c.b16 %v1974, %v1973
    %1991 = vmatpush.bf16.msra.mxu0 %v1982
    %1992 = vmatpush.bf16.msra.mxu0 %v1981
    %1993 = vmatpush.bf16.msra.mxu0 %v1980
    %1994 = vmatpush.bf16.msra.mxu0 %v1979
    %1995 = vmatpush.bf16.msra.mxu0 %v1978
    %1996 = vmatpush.bf16.msra.mxu0 %v1977
    %1997 = vmatpush.bf16.msra.mxu0 %v1976
    %1998 = vmatpush.bf16.msra.mxu0 %v1975
    %1999 = vmatmul.bf16.gmra.mxu0 %v544
    %v2000 = vpop.f32.mrf.mxu0
    %v2001 = vadd.f32 0.0, %v2000
    %v2002 = vpop.f32.mrf.mxu0
    %2003 = vdwg.mxu0
    %v2020 = vunpack.c.l.b16 %v757
    %v2021 = vunpack.c.l.b16 %v758
    %v2022 = vunpack.c.l.b16 %v759
    %v2023 = vunpack.c.l.b16 %v760
    %v2024 = vunpack.c.l.b16 %v761
    %v2025 = vunpack.c.l.b16 %v762
    %v2026 = vunpack.c.l.b16 %v763
    %v2027 = vunpack.c.l.b16 %v764
    %v2028 = vunpack.c.l.b16 %v765
    %v2029 = vunpack.c.l.b16 %v766
    %v2030 = vunpack.c.l.b16 %v767
    %v2031 = vunpack.c.l.b16 %v768
    %v2032 = vunpack.c.l.b16 %v769
    %v2033 = vunpack.c.l.b16 %v770
    %v2034 = vunpack.c.l.b16 %v771
    %v2035 = vunpack.c.l.b16 %v772
    %v2036 = vpack.c.b16 %v2021, %v2020
    %v2037 = vpack.c.b16 %v2023, %v2022
    %v2038 = vpack.c.b16 %v2025, %v2024
    %v2039 = vpack.c.b16 %v2027, %v2026
    %v2040 = vpack.c.b16 %v2029, %v2028
    %v2041 = vpack.c.b16 %v2031, %v2030
    %v2042 = vpack.c.b16 %v2033, %v2032
    %v2043 = vpack.c.b16 %v2035, %v2034
    %2052 = vmatpush.bf16.msra.mxu0 %v2043
    %2053 = vmatpush.bf16.msra.mxu0 %v2042
    %2054 = vmatpush.bf16.msra.mxu0 %v2041
    %2055 = vmatpush.bf16.msra.mxu0 %v2040
    %2056 = vmatpush.bf16.msra.mxu0 %v2039
    %2057 = vmatpush.bf16.msra.mxu0 %v2038
    %2058 = vmatpush.bf16.msra.mxu0 %v2037
    %2059 = vmatpush.bf16.msra.mxu0 %v2036
    %2060 = vmatmul.bf16.gmra.mxu0 %v545
    %v2061 = vpop.f32.mrf.mxu0
    %v2062 = vadd.f32 0.0, %v2061
    %v2063 = vpop.f32.mrf.mxu0
    %2064 = vdwg.mxu0
    %v2081 = vunpack.c.l.b16 %v773
    %v2082 = vunpack.c.l.b16 %v774
    %v2083 = vunpack.c.l.b16 %v775
    %v2084 = vunpack.c.l.b16 %v776
    %v2085 = vunpack.c.l.b16 %v777
    %v2086 = vunpack.c.l.b16 %v778
    %v2087 = vunpack.c.l.b16 %v779
    %v2088 = vunpack.c.l.b16 %v780
    %v2089 = vunpack.c.l.b16 %v781
    %v2090 = vunpack.c.l.b16 %v782
    %v2091 = vunpack.c.l.b16 %v783
    %v2092 = vunpack.c.l.b16 %v784
    %v2093 = vunpack.c.l.b16 %v785
    %v2094 = vunpack.c.l.b16 %v786
    %v2095 = vunpack.c.l.b16 %v787
    %v2096 = vunpack.c.l.b16 %v788
    %v2097 = vpack.c.b16 %v2082, %v2081
    %v2098 = vpack.c.b16 %v2084, %v2083
    %v2099 = vpack.c.b16 %v2086, %v2085
    %v2100 = vpack.c.b16 %v2088, %v2087
    %v2101 = vpack.c.b16 %v2090, %v2089
    %v2102 = vpack.c.b16 %v2092, %v2091
    %v2103 = vpack.c.b16 %v2094, %v2093
    %v2104 = vpack.c.b16 %v2096, %v2095
    %2113 = vmatpush.bf16.msra.mxu0 %v2104
    %2114 = vmatpush.bf16.msra.mxu0 %v2103
    %2115 = vmatpush.bf16.msra.mxu0 %v2102
    %2116 = vmatpush.bf16.msra.mxu0 %v2101
    %2117 = vmatpush.bf16.msra.mxu0 %v2100
    %2118 = vmatpush.bf16.msra.mxu0 %v2099
    %2119 = vmatpush.bf16.msra.mxu0 %v2098
    %2120 = vmatpush.bf16.msra.mxu0 %v2097
    %2121 = vmatmul.bf16.gmra.mxu0 %v546
    %v2122 = vpop.f32.mrf.mxu0
    %v2123 = vadd.f32 0.0, %v2122
    %v2124 = vpop.f32.mrf.mxu0
    %2125 = vdwg.mxu0
    %v2142 = vunpack.c.l.b16 %v789
    %v2143 = vunpack.c.l.b16 %v790
    %v2144 = vunpack.c.l.b16 %v791
    %v2145 = vunpack.c.l.b16 %v792
    %v2146 = vunpack.c.l.b16 %v793
    %v2147 = vunpack.c.l.b16 %v794
    %v2148 = vunpack.c.l.b16 %v795
    %v2149 = vunpack.c.l.b16 %v796
    %v2150 = vunpack.c.l.b16 %v797
    %v2151 = vunpack.c.l.b16 %v798
    %v2152 = vunpack.c.l.b16 %v799
    %v2153 = vunpack.c.l.b16 %v800
    %v2154 = vunpack.c.l.b16 %v801
    %v2155 = vunpack.c.l.b16 %v802
    %v2156 = vunpack.c.l.b16 %v803
    %v2157 = vunpack.c.l.b16 %v804
    %v2158 = vpack.c.b16 %v2143, %v2142
    %v2159 = vpack.c.b16 %v2145, %v2144
    %v2160 = vpack.c.b16 %v2147, %v2146
    %v2161 = vpack.c.b16 %v2149, %v2148
    %v2162 = vpack.c.b16 %v2151, %v2150
    %v2163 = vpack.c.b16 %v2153, %v2152
    %v2164 = vpack.c.b16 %v2155, %v2154
    %v2165 = vpack.c.b16 %v2157, %v2156
    %2174 = vmatpush.bf16.msra.mxu0 %v2165
    %2175 = vmatpush.bf16.msra.mxu0 %v2164
    %2176 = vmatpush.bf16.msra.mxu0 %v2163
    %2177 = vmatpush.bf16.msra.mxu0 %v2162
    %2178 = vmatpush.bf16.msra.mxu0 %v2161
    %2179 = vmatpush.bf16.msra.mxu0 %v2160
    %2180 = vmatpush.bf16.msra.mxu0 %v2159
    %2181 = vmatpush.bf16.msra.mxu0 %v2158
    %2182 = vmatmul.bf16.gmra.mxu0 %v547
    %v2183 = vpop.f32.mrf.mxu0
    %v2184 = vadd.f32 0.0, %v2183
    %v2185 = vpop.f32.mrf.mxu0
    %2186 = vdwg.mxu0
    %v2203 = vunpack.c.l.b16 %v805
    %v2204 = vunpack.c.l.b16 %v806
    %v2205 = vunpack.c.l.b16 %v807
    %v2206 = vunpack.c.l.b16 %v808
    %v2207 = vunpack.c.l.b16 %v809
    %v2208 = vunpack.c.l.b16 %v810
    %v2209 = vunpack.c.l.b16 %v811
    %v2210 = vunpack.c.l.b16 %v812
    %v2211 = vunpack.c.l.b16 %v813
    %v2212 = vunpack.c.l.b16 %v814
    %v2213 = vunpack.c.l.b16 %v815
    %v2214 = vunpack.c.l.b16 %v816
    %v2215 = vunpack.c.l.b16 %v817
    %v2216 = vunpack.c.l.b16 %v818
    %v2217 = vunpack.c.l.b16 %v819
    %v2218 = vunpack.c.l.b16 %v820
    %v2219 = vpack.c.b16 %v2204, %v2203
    %v2220 = vpack.c.b16 %v2206, %v2205
    %v2221 = vpack.c.b16 %v2208, %v2207
    %v2222 = vpack.c.b16 %v2210, %v2209
    %v2223 = vpack.c.b16 %v2212, %v2211
    %v2224 = vpack.c.b16 %v2214, %v2213
    %v2225 = vpack.c.b16 %v2216, %v2215
    %v2226 = vpack.c.b16 %v2218, %v2217
    %2235 = vmatpush.bf16.msra.mxu0 %v2226
    %2236 = vmatpush.bf16.msra.mxu0 %v2225
    %2237 = vmatpush.bf16.msra.mxu0 %v2224
    %2238 = vmatpush.bf16.msra.mxu0 %v2223
    %2239 = vmatpush.bf16.msra.mxu0 %v2222
    %2240 = vmatpush.bf16.msra.mxu0 %v2221
    %2241 = vmatpush.bf16.msra.mxu0 %v2220
    %2242 = vmatpush.bf16.msra.mxu0 %v2219
    %2243 = vmatmul.bf16.gmra.mxu0 %v548
    %v2244 = vpop.f32.mrf.mxu0
    %v2245 = vadd.f32 0.0, %v2244
    %v2246 = vpop.f32.mrf.mxu0
    %2247 = vdwg.mxu0
    %v2264 = vunpack.c.l.b16 %v821
    %v2265 = vunpack.c.l.b16 %v822
    %v2266 = vunpack.c.l.b16 %v823
    %v2267 = vunpack.c.l.b16 %v824
    %v2268 = vunpack.c.l.b16 %v825
    %v2269 = vunpack.c.l.b16 %v826
    %v2270 = vunpack.c.l.b16 %v827
    %v2271 = vunpack.c.l.b16 %v828
    %v2272 = vunpack.c.l.b16 %v829
    %v2273 = vunpack.c.l.b16 %v830
    %v2274 = vunpack.c.l.b16 %v831
    %v2275 = vunpack.c.l.b16 %v832
    %v2276 = vunpack.c.l.b16 %v833
    %v2277 = vunpack.c.l.b16 %v834
    %v2278 = vunpack.c.l.b16 %v835
    %v2279 = vunpack.c.l.b16 %v836
    %v2280 = vpack.c.b16 %v2265, %v2264
    %v2281 = vpack.c.b16 %v2267, %v2266
    %v2282 = vpack.c.b16 %v2269, %v2268
    %v2283 = vpack.c.b16 %v2271, %v2270
    %v2284 = vpack.c.b16 %v2273, %v2272
    %v2285 = vpack.c.b16 %v2275, %v2274
    %v2286 = vpack.c.b16 %v2277, %v2276
    %v2287 = vpack.c.b16 %v2279, %v2278
    %2296 = vmatpush.bf16.msra.mxu0 %v2287
    %2297 = vmatpush.bf16.msra.mxu0 %v2286
    %2298 = vmatpush.bf16.msra.mxu0 %v2285
    %2299 = vmatpush.bf16.msra.mxu0 %v2284
    %2300 = vmatpush.bf16.msra.mxu0 %v2283
    %2301 = vmatpush.bf16.msra.mxu0 %v2282
    %2302 = vmatpush.bf16.msra.mxu0 %v2281
    %2303 = vmatpush.bf16.msra.mxu0 %v2280
    %2304 = vmatmul.bf16.gmra.mxu0 %v549
    %v2305 = vpop.f32.mrf.mxu0
    %v2306 = vadd.f32 0.0, %v2305
    %v2307 = vpop.f32.mrf.mxu0
    %2308 = vdwg.mxu0
    %v2325 = vunpack.c.l.b16 %v837
    %v2326 = vunpack.c.l.b16 %v838
    %v2327 = vunpack.c.l.b16 %v839
    %v2328 = vunpack.c.l.b16 %v840
    %v2329 = vunpack.c.l.b16 %v841
    %v2330 = vunpack.c.l.b16 %v842
    %v2331 = vunpack.c.l.b16 %v843
    %v2332 = vunpack.c.l.b16 %v844
    %v2333 = vunpack.c.l.b16 %v845
    %v2334 = vunpack.c.l.b16 %v846
    %v2335 = vunpack.c.l.b16 %v847
    %v2336 = vunpack.c.l.b16 %v848
    %v2337 = vunpack.c.l.b16 %v849
    %v2338 = vunpack.c.l.b16 %v850
    %v2339 = vunpack.c.l.b16 %v851
    %v2340 = vunpack.c.l.b16 %v852
    %v2341 = vpack.c.b16 %v2326, %v2325
    %v2342 = vpack.c.b16 %v2328, %v2327
    %v2343 = vpack.c.b16 %v2330, %v2329
    %v2344 = vpack.c.b16 %v2332, %v2331
    %v2345 = vpack.c.b16 %v2334, %v2333
    %v2346 = vpack.c.b16 %v2336, %v2335
    %v2347 = vpack.c.b16 %v2338, %v2337
    %v2348 = vpack.c.b16 %v2340, %v2339
    %2357 = vmatpush.bf16.msra.mxu0 %v2348
    %2358 = vmatpush.bf16.msra.mxu0 %v2347
    %2359 = vmatpush.bf16.msra.mxu0 %v2346
    %2360 = vmatpush.bf16.msra.mxu0 %v2345
    %2361 = vmatpush.bf16.msra.mxu0 %v2344
    %2362 = vmatpush.bf16.msra.mxu0 %v2343
    %2363 = vmatpush.bf16.msra.mxu0 %v2342
    %2364 = vmatpush.bf16.msra.mxu0 %v2341
    %2365 = vmatmul.bf16.gmra.mxu0 %v550
    %v2366 = vpop.f32.mrf.mxu0
    %v2367 = vadd.f32 0.0, %v2366
    %v2368 = vpop.f32.mrf.mxu0
    %2369 = vdwg.mxu0
    %v2386 = vunpack.c.l.b16 %v853
    %v2387 = vunpack.c.l.b16 %v854
    %v2388 = vunpack.c.l.b16 %v855
    %v2389 = vunpack.c.l.b16 %v856
    %v2390 = vunpack.c.l.b16 %v857
    %v2391 = vunpack.c.l.b16 %v858
    %v2392 = vunpack.c.l.b16 %v859
    %v2393 = vunpack.c.l.b16 %v860
    %v2394 = vunpack.c.l.b16 %v861
    %v2395 = vunpack.c.l.b16 %v862
    %v2396 = vunpack.c.l.b16 %v863
    %v2397 = vunpack.c.l.b16 %v864
    %v2398 = vunpack.c.l.b16 %v865
    %v2399 = vunpack.c.l.b16 %v866
    %v2400 = vunpack.c.l.b16 %v867
    %v2401 = vunpack.c.l.b16 %v868
    %v2402 = vpack.c.b16 %v2387, %v2386
    %v2403 = vpack.c.b16 %v2389, %v2388
    %v2404 = vpack.c.b16 %v2391, %v2390
    %v2405 = vpack.c.b16 %v2393, %v2392
    %v2406 = vpack.c.b16 %v2395, %v2394
    %v2407 = vpack.c.b16 %v2397, %v2396
    %v2408 = vpack.c.b16 %v2399, %v2398
    %v2409 = vpack.c.b16 %v2401, %v2400
    %2418 = vmatpush.bf16.msra.mxu0 %v2409
    %2419 = vmatpush.bf16.msra.mxu0 %v2408
    %2420 = vmatpush.bf16.msra.mxu0 %v2407
    %2421 = vmatpush.bf16.msra.mxu0 %v2406
    %2422 = vmatpush.bf16.msra.mxu0 %v2405
    %2423 = vmatpush.bf16.msra.mxu0 %v2404
    %2424 = vmatpush.bf16.msra.mxu0 %v2403
    %2425 = vmatpush.bf16.msra.mxu0 %v2402
    %2426 = vmatmul.bf16.gmra.mxu0 %v551
    %v2427 = vpop.f32.mrf.mxu0
    %v2428 = vadd.f32 0.0, %v2427
    %v2429 = vpop.f32.mrf.mxu0
    %2430 = vdwg.mxu0
    %v2447 = vunpack.c.l.b16 %v869
    %v2448 = vunpack.c.l.b16 %v870
    %v2449 = vunpack.c.l.b16 %v871
    %v2450 = vunpack.c.l.b16 %v872
    %v2451 = vunpack.c.l.b16 %v873
    %v2452 = vunpack.c.l.b16 %v874
    %v2453 = vunpack.c.l.b16 %v875
    %v2454 = vunpack.c.l.b16 %v876
    %v2455 = vunpack.c.l.b16 %v877
    %v2456 = vunpack.c.l.b16 %v878
    %v2457 = vunpack.c.l.b16 %v879
    %v2458 = vunpack.c.l.b16 %v880
    %v2459 = vunpack.c.l.b16 %v881
    %v2460 = vunpack.c.l.b16 %v882
    %v2461 = vunpack.c.l.b16 %v883
    %v2462 = vunpack.c.l.b16 %v884
    %v2463 = vpack.c.b16 %v2448, %v2447
    %v2464 = vpack.c.b16 %v2450, %v2449
    %v2465 = vpack.c.b16 %v2452, %v2451
    %v2466 = vpack.c.b16 %v2454, %v2453
    %v2467 = vpack.c.b16 %v2456, %v2455
    %v2468 = vpack.c.b16 %v2458, %v2457
    %v2469 = vpack.c.b16 %v2460, %v2459
    %v2470 = vpack.c.b16 %v2462, %v2461
    %2479 = vmatpush.bf16.msra.mxu0 %v2470
    %2480 = vmatpush.bf16.msra.mxu0 %v2469
    %2481 = vmatpush.bf16.msra.mxu0 %v2468
    %2482 = vmatpush.bf16.msra.mxu0 %v2467
    %2483 = vmatpush.bf16.msra.mxu0 %v2466
    %2484 = vmatpush.bf16.msra.mxu0 %v2465
    %2485 = vmatpush.bf16.msra.mxu0 %v2464
    %2486 = vmatpush.bf16.msra.mxu0 %v2463
    %2487 = vmatmul.bf16.gmra.mxu0 %v552
    %v2488 = vpop.f32.mrf.mxu0
    %v2489 = vadd.f32 0.0, %v2488
    %v2490 = vpop.f32.mrf.mxu0
    %2491 = vdwg.mxu0
    %v2508 = vunpack.c.l.b16 %v885
    %v2509 = vunpack.c.l.b16 %v886
    %v2510 = vunpack.c.l.b16 %v887
    %v2511 = vunpack.c.l.b16 %v888
    %v2512 = vunpack.c.l.b16 %v889
    %v2513 = vunpack.c.l.b16 %v890
    %v2514 = vunpack.c.l.b16 %v891
    %v2515 = vunpack.c.l.b16 %v892
    %v2516 = vunpack.c.l.b16 %v893
    %v2517 = vunpack.c.l.b16 %v894
    %v2518 = vunpack.c.l.b16 %v895
    %v2519 = vunpack.c.l.b16 %v896
    %v2520 = vunpack.c.l.b16 %v897
    %v2521 = vunpack.c.l.b16 %v898
    %v2522 = vunpack.c.l.b16 %v899
    %v2523 = vunpack.c.l.b16 %v900
    %v2524 = vpack.c.b16 %v2509, %v2508
    %v2525 = vpack.c.b16 %v2511, %v2510
    %v2526 = vpack.c.b16 %v2513, %v2512
    %v2527 = vpack.c.b16 %v2515, %v2514
    %v2528 = vpack.c.b16 %v2517, %v2516
    %v2529 = vpack.c.b16 %v2519, %v2518
    %v2530 = vpack.c.b16 %v2521, %v2520
    %v2531 = vpack.c.b16 %v2523, %v2522
    %2540 = vmatpush.bf16.msra.mxu0 %v2531
    %2541 = vmatpush.bf16.msra.mxu0 %v2530
    %2542 = vmatpush.bf16.msra.mxu0 %v2529
    %2543 = vmatpush.bf16.msra.mxu0 %v2528
    %2544 = vmatpush.bf16.msra.mxu0 %v2527
    %2545 = vmatpush.bf16.msra.mxu0 %v2526
    %2546 = vmatpush.bf16.msra.mxu0 %v2525
    %2547 = vmatpush.bf16.msra.mxu0 %v2524
    %2548 = vmatmul.bf16.gmra.mxu0 %v553
    %v2549 = vpop.f32.mrf.mxu0
    %v2550 = vadd.f32 0.0, %v2549
    %v2551 = vpop.f32.mrf.mxu0
    %2552 = vdwg.mxu0
    %v2569 = vunpack.c.l.b16 %v901
    %v2570 = vunpack.c.l.b16 %v902
    %v2571 = vunpack.c.l.b16 %v903
    %v2572 = vunpack.c.l.b16 %v904
    %v2573 = vunpack.c.l.b16 %v905
    %v2574 = vunpack.c.l.b16 %v906
    %v2575 = vunpack.c.l.b16 %v907
    %v2576 = vunpack.c.l.b16 %v908
    %v2577 = vunpack.c.l.b16 %v909
    %v2578 = vunpack.c.l.b16 %v910
    %v2579 = vunpack.c.l.b16 %v911
    %v2580 = vunpack.c.l.b16 %v912
    %v2581 = vunpack.c.l.b16 %v913
    %v2582 = vunpack.c.l.b16 %v914
    %v2583 = vunpack.c.l.b16 %v915
    %v2584 = vunpack.c.l.b16 %v916
    %v2585 = vpack.c.b16 %v2570, %v2569
    %v2586 = vpack.c.b16 %v2572, %v2571
    %v2587 = vpack.c.b16 %v2574, %v2573
    %v2588 = vpack.c.b16 %v2576, %v2575
    %v2589 = vpack.c.b16 %v2578, %v2577
    %v2590 = vpack.c.b16 %v2580, %v2579
    %v2591 = vpack.c.b16 %v2582, %v2581
    %v2592 = vpack.c.b16 %v2584, %v2583
    %2601 = vmatpush.bf16.msra.mxu0 %v2592
    %2602 = vmatpush.bf16.msra.mxu0 %v2591
    %2603 = vmatpush.bf16.msra.mxu0 %v2590
    %2604 = vmatpush.bf16.msra.mxu0 %v2589
    %2605 = vmatpush.bf16.msra.mxu0 %v2588
    %2606 = vmatpush.bf16.msra.mxu0 %v2587
    %2607 = vmatpush.bf16.msra.mxu0 %v2586
    %2608 = vmatpush.bf16.msra.mxu0 %v2585
    %2609 = vmatmul.bf16.gmra.mxu0 %v554
    %v2610 = vpop.f32.mrf.mxu0
    %v2611 = vadd.f32 0.0, %v2610
    %v2612 = vpop.f32.mrf.mxu0
    %2613 = vdwg.mxu0
    %v2630 = vunpack.c.l.b16 %v917
    %v2631 = vunpack.c.l.b16 %v918
    %v2632 = vunpack.c.l.b16 %v919
    %v2633 = vunpack.c.l.b16 %v920
    %v2634 = vunpack.c.l.b16 %v921
    %v2635 = vunpack.c.l.b16 %v922
    %v2636 = vunpack.c.l.b16 %v923
    %v2637 = vunpack.c.l.b16 %v924
    %v2638 = vunpack.c.l.b16 %v925
    %v2639 = vunpack.c.l.b16 %v926
    %v2640 = vunpack.c.l.b16 %v927
    %v2641 = vunpack.c.l.b16 %v928
    %v2642 = vunpack.c.l.b16 %v929
    %v2643 = vunpack.c.l.b16 %v930
    %v2644 = vunpack.c.l.b16 %v931
    %v2645 = vunpack.c.l.b16 %v932
    %v2646 = vpack.c.b16 %v2631, %v2630
    %v2647 = vpack.c.b16 %v2633, %v2632
    %v2648 = vpack.c.b16 %v2635, %v2634
    %v2649 = vpack.c.b16 %v2637, %v2636
    %v2650 = vpack.c.b16 %v2639, %v2638
    %v2651 = vpack.c.b16 %v2641, %v2640
    %v2652 = vpack.c.b16 %v2643, %v2642
    %v2653 = vpack.c.b16 %v2645, %v2644
    %2662 = vmatpush.bf16.msra.mxu0 %v2653
    %2663 = vmatpush.bf16.msra.mxu0 %v2652
    %2664 = vmatpush.bf16.msra.mxu0 %v2651
    %2665 = vmatpush.bf16.msra.mxu0 %v2650
    %2666 = vmatpush.bf16.msra.mxu0 %v2649
    %2667 = vmatpush.bf16.msra.mxu0 %v2648
    %2668 = vmatpush.bf16.msra.mxu0 %v2647
    %2669 = vmatpush.bf16.msra.mxu0 %v2646
    %2670 = vmatmul.bf16.gmra.mxu0 %v555
    %v2671 = vpop.f32.mrf.mxu0
    %v2672 = vadd.f32 0.0, %v2671
    %v2673 = vpop.f32.mrf.mxu0
    %2674 = vdwg.mxu0
    %v2691 = vunpack.c.l.b16 %v933
    %v2692 = vunpack.c.l.b16 %v934
    %v2693 = vunpack.c.l.b16 %v935
    %v2694 = vunpack.c.l.b16 %v936
    %v2695 = vunpack.c.l.b16 %v937
    %v2696 = vunpack.c.l.b16 %v938
    %v2697 = vunpack.c.l.b16 %v939
    %v2698 = vunpack.c.l.b16 %v940
    %v2699 = vunpack.c.l.b16 %v941
    %v2700 = vunpack.c.l.b16 %v942
    %v2701 = vunpack.c.l.b16 %v943
    %v2702 = vunpack.c.l.b16 %v944
    %v2703 = vunpack.c.l.b16 %v945
    %v2704 = vunpack.c.l.b16 %v946
    %v2705 = vunpack.c.l.b16 %v947
    %v2706 = vunpack.c.l.b16 %v948
    %v2707 = vpack.c.b16 %v2692, %v2691
    %v2708 = vpack.c.b16 %v2694, %v2693
    %v2709 = vpack.c.b16 %v2696, %v2695
    %v2710 = vpack.c.b16 %v2698, %v2697
    %v2711 = vpack.c.b16 %v2700, %v2699
    %v2712 = vpack.c.b16 %v2702, %v2701
    %v2713 = vpack.c.b16 %v2704, %v2703
    %v2714 = vpack.c.b16 %v2706, %v2705
    %2723 = vmatpush.bf16.msra.mxu0 %v2714
    %2724 = vmatpush.bf16.msra.mxu0 %v2713
    %2725 = vmatpush.bf16.msra.mxu0 %v2712
    %2726 = vmatpush.bf16.msra.mxu0 %v2711
    %2727 = vmatpush.bf16.msra.mxu0 %v2710
    %2728 = vmatpush.bf16.msra.mxu0 %v2709
    %2729 = vmatpush.bf16.msra.mxu0 %v2708
    %2730 = vmatpush.bf16.msra.mxu0 %v2707
    %2731 = vmatmul.bf16.gmra.mxu0 %v556
    %v2732 = vpop.f32.mrf.mxu0
    %v2733 = vadd.f32 0.0, %v2732
    %v2734 = vpop.f32.mrf.mxu0
    %2735 = vdwg.mxu0
    %v2752 = vunpack.c.l.b16 %v949
    %v2753 = vunpack.c.l.b16 %v950
    %v2754 = vunpack.c.l.b16 %v951
    %v2755 = vunpack.c.l.b16 %v952
    %v2756 = vunpack.c.l.b16 %v953
    %v2757 = vunpack.c.l.b16 %v954
    %v2758 = vunpack.c.l.b16 %v955
    %v2759 = vunpack.c.l.b16 %v956
    %v2760 = vunpack.c.l.b16 %v957
    %v2761 = vunpack.c.l.b16 %v958
    %v2762 = vunpack.c.l.b16 %v959
    %v2763 = vunpack.c.l.b16 %v960
    %v2764 = vunpack.c.l.b16 %v961
    %v2765 = vunpack.c.l.b16 %v962
    %v2766 = vunpack.c.l.b16 %v963
    %v2767 = vunpack.c.l.b16 %v964
    %v2768 = vpack.c.b16 %v2753, %v2752
    %v2769 = vpack.c.b16 %v2755, %v2754
    %v2770 = vpack.c.b16 %v2757, %v2756
    %v2771 = vpack.c.b16 %v2759, %v2758
    %v2772 = vpack.c.b16 %v2761, %v2760
    %v2773 = vpack.c.b16 %v2763, %v2762
    %v2774 = vpack.c.b16 %v2765, %v2764
    %v2775 = vpack.c.b16 %v2767, %v2766
    %2784 = vmatpush.bf16.msra.mxu0 %v2775
    %2785 = vmatpush.bf16.msra.mxu0 %v2774
    %2786 = vmatpush.bf16.msra.mxu0 %v2773
    %2787 = vmatpush.bf16.msra.mxu0 %v2772
    %2788 = vmatpush.bf16.msra.mxu0 %v2771
    %2789 = vmatpush.bf16.msra.mxu0 %v2770
    %2790 = vmatpush.bf16.msra.mxu0 %v2769
    %2791 = vmatpush.bf16.msra.mxu0 %v2768
    %2792 = vmatmul.bf16.gmra.mxu0 %v557
    %v2793 = vpop.f32.mrf.mxu0
    %v2794 = vadd.f32 0.0, %v2793
    %v2795 = vpop.f32.mrf.mxu0
    %2796 = vdwg.mxu0
    %v2813 = vunpack.c.l.b16 %v965
    %v2814 = vunpack.c.l.b16 %v966
    %v2815 = vunpack.c.l.b16 %v967
    %v2816 = vunpack.c.l.b16 %v968
    %v2817 = vunpack.c.l.b16 %v969
    %v2818 = vunpack.c.l.b16 %v970
    %v2819 = vunpack.c.l.b16 %v971
    %v2820 = vunpack.c.l.b16 %v972
    %v2821 = vunpack.c.l.b16 %v973
    %v2822 = vunpack.c.l.b16 %v974
    %v2823 = vunpack.c.l.b16 %v975
    %v2824 = vunpack.c.l.b16 %v976
    %v2825 = vunpack.c.l.b16 %v977
    %v2826 = vunpack.c.l.b16 %v978
    %v2827 = vunpack.c.l.b16 %v979
    %v2828 = vunpack.c.l.b16 %v980
    %v2829 = vpack.c.b16 %v2814, %v2813
    %v2830 = vpack.c.b16 %v2816, %v2815
    %v2831 = vpack.c.b16 %v2818, %v2817
    %v2832 = vpack.c.b16 %v2820, %v2819
    %v2833 = vpack.c.b16 %v2822, %v2821
    %v2834 = vpack.c.b16 %v2824, %v2823
    %v2835 = vpack.c.b16 %v2826, %v2825
    %v2836 = vpack.c.b16 %v2828, %v2827
    %2845 = vmatpush.bf16.msra.mxu0 %v2836
    %2846 = vmatpush.bf16.msra.mxu0 %v2835
    %2847 = vmatpush.bf16.msra.mxu0 %v2834
    %2848 = vmatpush.bf16.msra.mxu0 %v2833
    %2849 = vmatpush.bf16.msra.mxu0 %v2832
    %2850 = vmatpush.bf16.msra.mxu0 %v2831
    %2851 = vmatpush.bf16.msra.mxu0 %v2830
    %2852 = vmatpush.bf16.msra.mxu0 %v2829
    %2853 = vmatmul.bf16.gmra.mxu0 %v558
    %v2854 = vpop.f32.mrf.mxu0
    %v2855 = vadd.f32 0.0, %v2854
    %v2856 = vpop.f32.mrf.mxu0
    %2857 = vdwg.mxu0
    %v2874 = vunpack.c.l.b16 %v981
    %v2875 = vunpack.c.l.b16 %v982
    %v2876 = vunpack.c.l.b16 %v983
    %v2877 = vunpack.c.l.b16 %v984
    %v2878 = vunpack.c.l.b16 %v985
    %v2879 = vunpack.c.l.b16 %v986
    %v2880 = vunpack.c.l.b16 %v987
    %v2881 = vunpack.c.l.b16 %v988
    %v2882 = vunpack.c.l.b16 %v989
    %v2883 = vunpack.c.l.b16 %v990
    %v2884 = vunpack.c.l.b16 %v991
    %v2885 = vunpack.c.l.b16 %v992
    %v2886 = vunpack.c.l.b16 %v993
    %v2887 = vunpack.c.l.b16 %v994
    %v2888 = vunpack.c.l.b16 %v995
    %v2889 = vunpack.c.l.b16 %v996
    %v2890 = vpack.c.b16 %v2875, %v2874
    %v2891 = vpack.c.b16 %v2877, %v2876
    %v2892 = vpack.c.b16 %v2879, %v2878
    %v2893 = vpack.c.b16 %v2881, %v2880
    %v2894 = vpack.c.b16 %v2883, %v2882
    %v2895 = vpack.c.b16 %v2885, %v2884
    %v2896 = vpack.c.b16 %v2887, %v2886
    %v2897 = vpack.c.b16 %v2889, %v2888
    %2906 = vmatpush.bf16.msra.mxu0 %v2897
    %2907 = vmatpush.bf16.msra.mxu0 %v2896
    %2908 = vmatpush.bf16.msra.mxu0 %v2895
    %2909 = vmatpush.bf16.msra.mxu0 %v2894
    %2910 = vmatpush.bf16.msra.mxu0 %v2893
    %2911 = vmatpush.bf16.msra.mxu0 %v2892
    %2912 = vmatpush.bf16.msra.mxu0 %v2891
    %2913 = vmatpush.bf16.msra.mxu0 %v2890
    %2914 = vmatmul.bf16.gmra.mxu0 %v559
    %v2915 = vpop.f32.mrf.mxu0
    %v2916 = vadd.f32 0.0, %v2915
    %v2917 = vpop.f32.mrf.mxu0
    %2918 = vdwg.mxu0
    %v2935 = vunpack.c.l.b16 %v997
    %v2936 = vunpack.c.l.b16 %v998
    %v2937 = vunpack.c.l.b16 %v999
    %v2938 = vunpack.c.l.b16 %v1000
    %v2939 = vunpack.c.l.b16 %v1001
    %v2940 = vunpack.c.l.b16 %v1002
    %v2941 = vunpack.c.l.b16 %v1003
    %v2942 = vunpack.c.l.b16 %v1004
    %v2943 = vunpack.c.l.b16 %v1005
    %v2944 = vunpack.c.l.b16 %v1006
    %v2945 = vunpack.c.l.b16 %v1007
    %v2946 = vunpack.c.l.b16 %v1008
    %v2947 = vunpack.c.l.b16 %v1009
    %v2948 = vunpack.c.l.b16 %v1010
    %v2949 = vunpack.c.l.b16 %v1011
    %v2950 = vunpack.c.l.b16 %v1012
    %v2951 = vpack.c.b16 %v2936, %v2935
    %v2952 = vpack.c.b16 %v2938, %v2937
    %v2953 = vpack.c.b16 %v2940, %v2939
    %v2954 = vpack.c.b16 %v2942, %v2941
    %v2955 = vpack.c.b16 %v2944, %v2943
    %v2956 = vpack.c.b16 %v2946, %v2945
    %v2957 = vpack.c.b16 %v2948, %v2947
    %v2958 = vpack.c.b16 %v2950, %v2949
    %2967 = vmatpush.bf16.msra.mxu0 %v2958
    %2968 = vmatpush.bf16.msra.mxu0 %v2957
    %2969 = vmatpush.bf16.msra.mxu0 %v2956
    %2970 = vmatpush.bf16.msra.mxu0 %v2955
    %2971 = vmatpush.bf16.msra.mxu0 %v2954
    %2972 = vmatpush.bf16.msra.mxu0 %v2953
    %2973 = vmatpush.bf16.msra.mxu0 %v2952
    %2974 = vmatpush.bf16.msra.mxu0 %v2951
    %2975 = vmatmul.bf16.gmra.mxu0 %v560
    %v2976 = vpop.f32.mrf.mxu0
    %v2977 = vadd.f32 0.0, %v2976
    %v2978 = vpop.f32.mrf.mxu0
    %2979 = vdwg.mxu0
    %v2996 = vunpack.c.l.b16 %v1013
    %v2997 = vunpack.c.l.b16 %v1014
    %v2998 = vunpack.c.l.b16 %v1015
    %v2999 = vunpack.c.l.b16 %v1016
    %v3000 = vunpack.c.l.b16 %v1017
    %v3001 = vunpack.c.l.b16 %v1018
    %v3002 = vunpack.c.l.b16 %v1019
    %v3003 = vunpack.c.l.b16 %v1020
    %v3004 = vunpack.c.l.b16 %v1021
    %v3005 = vunpack.c.l.b16 %v1022
    %v3006 = vunpack.c.l.b16 %v1023
    %v3007 = vunpack.c.l.b16 %v1024
    %v3008 = vunpack.c.l.b16 %v1025
    %v3009 = vunpack.c.l.b16 %v1026
    %v3010 = vunpack.c.l.b16 %v1027
    %v3011 = vunpack.c.l.b16 %v1028
    %v3012 = vpack.c.b16 %v2997, %v2996
    %v3013 = vpack.c.b16 %v2999, %v2998
    %v3014 = vpack.c.b16 %v3001, %v3000
    %v3015 = vpack.c.b16 %v3003, %v3002
    %v3016 = vpack.c.b16 %v3005, %v3004
    %v3017 = vpack.c.b16 %v3007, %v3006
    %v3018 = vpack.c.b16 %v3009, %v3008
    %v3019 = vpack.c.b16 %v3011, %v3010
    %3028 = vmatpush.bf16.msra.mxu0 %v3019
    %3029 = vmatpush.bf16.msra.mxu0 %v3018
    %3030 = vmatpush.bf16.msra.mxu0 %v3017
    %3031 = vmatpush.bf16.msra.mxu0 %v3016
    %3032 = vmatpush.bf16.msra.mxu0 %v3015
    %3033 = vmatpush.bf16.msra.mxu0 %v3014
    %3034 = vmatpush.bf16.msra.mxu0 %v3013
    %3035 = vmatpush.bf16.msra.mxu0 %v3012
    %3036 = vmatmul.bf16.gmra.mxu0 %v561
    %v3037 = vpop.f32.mrf.mxu0
    %v3038 = vadd.f32 0.0, %v3037
    %v3039 = vpop.f32.mrf.mxu0
    %3040 = vdwg.mxu0
    %v3057 = vunpack.c.l.b16 %v1029
    %v3058 = vunpack.c.l.b16 %v1030
    %v3059 = vunpack.c.l.b16 %v1031
    %v3060 = vunpack.c.l.b16 %v1032
    %v3061 = vunpack.c.l.b16 %v1033
    %v3062 = vunpack.c.l.b16 %v1034
    %v3063 = vunpack.c.l.b16 %v1035
    %v3064 = vunpack.c.l.b16 %v1036
    %v3065 = vunpack.c.l.b16 %v1037
    %v3066 = vunpack.c.l.b16 %v1038
    %v3067 = vunpack.c.l.b16 %v1039
    %v3068 = vunpack.c.l.b16 %v1040
    %v3069 = vunpack.c.l.b16 %v1041
    %v3070 = vunpack.c.l.b16 %v1042
    %v3071 = vunpack.c.l.b16 %v1043
    %v3072 = vunpack.c.l.b16 %v1044
    %v3073 = vpack.c.b16 %v3058, %v3057
    %v3074 = vpack.c.b16 %v3060, %v3059
    %v3075 = vpack.c.b16 %v3062, %v3061
    %v3076 = vpack.c.b16 %v3064, %v3063
    %v3077 = vpack.c.b16 %v3066, %v3065
    %v3078 = vpack.c.b16 %v3068, %v3067
    %v3079 = vpack.c.b16 %v3070, %v3069
    %v3080 = vpack.c.b16 %v3072, %v3071
    %3089 = vmatpush.bf16.msra.mxu0 %v3080
    %3090 = vmatpush.bf16.msra.mxu0 %v3079
    %3091 = vmatpush.bf16.msra.mxu0 %v3078
    %3092 = vmatpush.bf16.msra.mxu0 %v3077
    %3093 = vmatpush.bf16.msra.mxu0 %v3076
    %3094 = vmatpush.bf16.msra.mxu0 %v3075
    %3095 = vmatpush.bf16.msra.mxu0 %v3074
    %3096 = vmatpush.bf16.msra.mxu0 %v3073
    %3097 = vmatmul.bf16.gmra.mxu0 %v562
    %v3098 = vpop.f32.mrf.mxu0
    %v3099 = vadd.f32 0.0, %v3098
    %v3100 = vpop.f32.mrf.mxu0
    %3101 = vdwg.mxu0
    %v3118 = vunpack.c.l.b16 %v1045
    %v3119 = vunpack.c.l.b16 %v1046
    %v3120 = vunpack.c.l.b16 %v1047
    %v3121 = vunpack.c.l.b16 %v1048
    %v3122 = vunpack.c.l.b16 %v1049
    %v3123 = vunpack.c.l.b16 %v1050
    %v3124 = vunpack.c.l.b16 %v1051
    %v3125 = vunpack.c.l.b16 %v1052
    %v3126 = vunpack.c.l.b16 %v1053
    %v3127 = vunpack.c.l.b16 %v1054
    %v3128 = vunpack.c.l.b16 %v1055
    %v3129 = vunpack.c.l.b16 %v1056
    %v3130 = vunpack.c.l.b16 %v1057
    %v3131 = vunpack.c.l.b16 %v1058
    %v3132 = vunpack.c.l.b16 %v1059
    %v3133 = vunpack.c.l.b16 %v1060
    %v3134 = vpack.c.b16 %v3119, %v3118
    %v3135 = vpack.c.b16 %v3121, %v3120
    %v3136 = vpack.c.b16 %v3123, %v3122
    %v3137 = vpack.c.b16 %v3125, %v3124
    %v3138 = vpack.c.b16 %v3127, %v3126
    %v3139 = vpack.c.b16 %v3129, %v3128
    %v3140 = vpack.c.b16 %v3131, %v3130
    %v3141 = vpack.c.b16 %v3133, %v3132
    %3150 = vmatpush.bf16.msra.mxu0 %v3141
    %3151 = vmatpush.bf16.msra.mxu0 %v3140
    %3152 = vmatpush.bf16.msra.mxu0 %v3139
    %3153 = vmatpush.bf16.msra.mxu0 %v3138
    %3154 = vmatpush.bf16.msra.mxu0 %v3137
    %3155 = vmatpush.bf16.msra.mxu0 %v3136
    %3156 = vmatpush.bf16.msra.mxu0 %v3135
    %3157 = vmatpush.bf16.msra.mxu0 %v3134
    %3158 = vmatmul.bf16.gmra.mxu0 %v563
    %v3159 = vpop.f32.mrf.mxu0
    %v3160 = vadd.f32 0.0, %v3159
    %v3161 = vpop.f32.mrf.mxu0
    %3162 = vdwg.mxu0
    %v3179 = vunpack.c.l.b16 %v1061
    %v3180 = vunpack.c.l.b16 %v1062
    %v3181 = vunpack.c.l.b16 %v1063
    %v3182 = vunpack.c.l.b16 %v1064
    %v3183 = vunpack.c.l.b16 %v1065
    %v3184 = vunpack.c.l.b16 %v1066
    %v3185 = vunpack.c.l.b16 %v1067
    %v3186 = vunpack.c.l.b16 %v1068
    %v3187 = vunpack.c.l.b16 %v1069
    %v3188 = vunpack.c.l.b16 %v1070
    %v3189 = vunpack.c.l.b16 %v1071
    %v3190 = vunpack.c.l.b16 %v1072
    %v3191 = vunpack.c.l.b16 %v1073
    %v3192 = vunpack.c.l.b16 %v1074
    %v3193 = vunpack.c.l.b16 %v1075
    %v3194 = vunpack.c.l.b16 %v1076
    %v3195 = vpack.c.b16 %v3180, %v3179
    %v3196 = vpack.c.b16 %v3182, %v3181
    %v3197 = vpack.c.b16 %v3184, %v3183
    %v3198 = vpack.c.b16 %v3186, %v3185
    %v3199 = vpack.c.b16 %v3188, %v3187
    %v3200 = vpack.c.b16 %v3190, %v3189
    %v3201 = vpack.c.b16 %v3192, %v3191
    %v3202 = vpack.c.b16 %v3194, %v3193
    %3211 = vmatpush.bf16.msra.mxu0 %v3202
    %3212 = vmatpush.bf16.msra.mxu0 %v3201
    %3213 = vmatpush.bf16.msra.mxu0 %v3200
    %3214 = vmatpush.bf16.msra.mxu0 %v3199
    %3215 = vmatpush.bf16.msra.mxu0 %v3198
    %3216 = vmatpush.bf16.msra.mxu0 %v3197
    %3217 = vmatpush.bf16.msra.mxu0 %v3196
    %3218 = vmatpush.bf16.msra.mxu0 %v3195
    %3219 = vmatmul.bf16.gmra.mxu0 %v564
    %v3220 = vpop.f32.mrf.mxu0
    %v3221 = vadd.f32 0.0, %v3220
    %v3222 = vpop.f32.mrf.mxu0
    %3223 = vdwg.mxu0
    %v3240 = vunpack.c.l.b16 %v1077
    %v3241 = vunpack.c.l.b16 %v1078
    %v3242 = vunpack.c.l.b16 %v1079
    %v3243 = vunpack.c.l.b16 %v1080
    %v3244 = vunpack.c.l.b16 %v1081
    %v3245 = vunpack.c.l.b16 %v1082
    %v3246 = vunpack.c.l.b16 %v1083
    %v3247 = vunpack.c.l.b16 %v1084
    %v3248 = vunpack.c.l.b16 %v1085
    %v3249 = vunpack.c.l.b16 %v1086
    %v3250 = vunpack.c.l.b16 %v1087
    %v3251 = vunpack.c.l.b16 %v1088
    %v3252 = vunpack.c.l.b16 %v1089
    %v3253 = vunpack.c.l.b16 %v1090
    %v3254 = vunpack.c.l.b16 %v1091
    %v3255 = vunpack.c.l.b16 %v1092
    %v3256 = vpack.c.b16 %v3241, %v3240
    %v3257 = vpack.c.b16 %v3243, %v3242
    %v3258 = vpack.c.b16 %v3245, %v3244
    %v3259 = vpack.c.b16 %v3247, %v3246
    %v3260 = vpack.c.b16 %v3249, %v3248
    %v3261 = vpack.c.b16 %v3251, %v3250
    %v3262 = vpack.c.b16 %v3253, %v3252
    %v3263 = vpack.c.b16 %v3255, %v3254
    %3272 = vmatpush.bf16.msra.mxu0 %v3263
    %3273 = vmatpush.bf16.msra.mxu0 %v3262
    %3274 = vmatpush.bf16.msra.mxu0 %v3261
    %3275 = vmatpush.bf16.msra.mxu0 %v3260
    %3276 = vmatpush.bf16.msra.mxu0 %v3259
    %3277 = vmatpush.bf16.msra.mxu0 %v3258
    %3278 = vmatpush.bf16.msra.mxu0 %v3257
    %3279 = vmatpush.bf16.msra.mxu0 %v3256
    %3280 = vmatmul.bf16.gmra.mxu0 %v565
    %v3281 = vpop.f32.mrf.mxu0
    %v3282 = vadd.f32 0.0, %v3281
    %v3283 = vpop.f32.mrf.mxu0
    %3284 = vdwg.mxu0
    %v3301 = vunpack.c.l.b16 %v1093
    %v3302 = vunpack.c.l.b16 %v1094
    %v3303 = vunpack.c.l.b16 %v1095
    %v3304 = vunpack.c.l.b16 %v1096
    %v3305 = vunpack.c.l.b16 %v1097
    %v3306 = vunpack.c.l.b16 %v1098
    %v3307 = vunpack.c.l.b16 %v1099
    %v3308 = vunpack.c.l.b16 %v1100
    %v3309 = vunpack.c.l.b16 %v1101
    %v3310 = vunpack.c.l.b16 %v1102
    %v3311 = vunpack.c.l.b16 %v1103
    %v3312 = vunpack.c.l.b16 %v1104
    %v3313 = vunpack.c.l.b16 %v1105
    %v3314 = vunpack.c.l.b16 %v1106
    %v3315 = vunpack.c.l.b16 %v1107
    %v3316 = vunpack.c.l.b16 %v1108
    %v3317 = vpack.c.b16 %v3302, %v3301
    %v3318 = vpack.c.b16 %v3304, %v3303
    %v3319 = vpack.c.b16 %v3306, %v3305
    %v3320 = vpack.c.b16 %v3308, %v3307
    %v3321 = vpack.c.b16 %v3310, %v3309
    %v3322 = vpack.c.b16 %v3312, %v3311
    %v3323 = vpack.c.b16 %v3314, %v3313
    %v3324 = vpack.c.b16 %v3316, %v3315
    %3333 = vmatpush.bf16.msra.mxu0 %v3324
    %3334 = vmatpush.bf16.msra.mxu0 %v3323
    %3335 = vmatpush.bf16.msra.mxu0 %v3322
    %3336 = vmatpush.bf16.msra.mxu0 %v3321
    %3337 = vmatpush.bf16.msra.mxu0 %v3320
    %3338 = vmatpush.bf16.msra.mxu0 %v3319
    %3339 = vmatpush.bf16.msra.mxu0 %v3318
    %3340 = vmatpush.bf16.msra.mxu0 %v3317
    %3341 = vmatmul.bf16.gmra.mxu0 %v566
    %v3342 = vpop.f32.mrf.mxu0
    %v3343 = vadd.f32 0.0, %v3342
    %v3344 = vpop.f32.mrf.mxu0
    %3345 = vdwg.mxu0
    %v3362 = vunpack.c.l.b16 %v1109
    %v3363 = vunpack.c.l.b16 %v1110
    %v3364 = vunpack.c.l.b16 %v1111
    %v3365 = vunpack.c.l.b16 %v1112
    %v3366 = vunpack.c.l.b16 %v1113
    %v3367 = vunpack.c.l.b16 %v1114
    %v3368 = vunpack.c.l.b16 %v1115
    %v3369 = vunpack.c.l.b16 %v1116
    %v3370 = vunpack.c.l.b16 %v1117
    %v3371 = vunpack.c.l.b16 %v1118
    %v3372 = vunpack.c.l.b16 %v1119
    %v3373 = vunpack.c.l.b16 %v1120
    %v3374 = vunpack.c.l.b16 %v1121
    %v3375 = vunpack.c.l.b16 %v1122
    %v3376 = vunpack.c.l.b16 %v1123
    %v3377 = vunpack.c.l.b16 %v1124
    %v3378 = vpack.c.b16 %v3363, %v3362
    %v3379 = vpack.c.b16 %v3365, %v3364
    %v3380 = vpack.c.b16 %v3367, %v3366
    %v3381 = vpack.c.b16 %v3369, %v3368
    %v3382 = vpack.c.b16 %v3371, %v3370
    %v3383 = vpack.c.b16 %v3373, %v3372
    %v3384 = vpack.c.b16 %v3375, %v3374
    %v3385 = vpack.c.b16 %v3377, %v3376
    %3394 = vmatpush.bf16.msra.mxu0 %v3385
    %3395 = vmatpush.bf16.msra.mxu0 %v3384
    %3396 = vmatpush.bf16.msra.mxu0 %v3383
    %3397 = vmatpush.bf16.msra.mxu0 %v3382
    %3398 = vmatpush.bf16.msra.mxu0 %v3381
    %3399 = vmatpush.bf16.msra.mxu0 %v3380
    %3400 = vmatpush.bf16.msra.mxu0 %v3379
    %3401 = vmatpush.bf16.msra.mxu0 %v3378
    %3402 = vmatmul.bf16.gmra.mxu0 %v567
    %v3403 = vpop.f32.mrf.mxu0
    %v3404 = vadd.f32 0.0, %v3403
    %v3405 = vpop.f32.mrf.mxu0
    %3406 = vdwg.mxu0
    %v3423 = vunpack.c.l.b16 %v1125
    %v3424 = vunpack.c.l.b16 %v1126
    %v3425 = vunpack.c.l.b16 %v1127
    %v3426 = vunpack.c.l.b16 %v1128
    %v3427 = vunpack.c.l.b16 %v1129
    %v3428 = vunpack.c.l.b16 %v1130
    %v3429 = vunpack.c.l.b16 %v1131
    %v3430 = vunpack.c.l.b16 %v1132
    %v3431 = vunpack.c.l.b16 %v1133
    %v3432 = vunpack.c.l.b16 %v1134
    %v3433 = vunpack.c.l.b16 %v1135
    %v3434 = vunpack.c.l.b16 %v1136
    %v3435 = vunpack.c.l.b16 %v1137
    %v3436 = vunpack.c.l.b16 %v1138
    %v3437 = vunpack.c.l.b16 %v1139
    %v3438 = vunpack.c.l.b16 %v1140
    %v3439 = vpack.c.b16 %v3424, %v3423
    %v3440 = vpack.c.b16 %v3426, %v3425
    %v3441 = vpack.c.b16 %v3428, %v3427
    %v3442 = vpack.c.b16 %v3430, %v3429
    %v3443 = vpack.c.b16 %v3432, %v3431
    %v3444 = vpack.c.b16 %v3434, %v3433
    %v3445 = vpack.c.b16 %v3436, %v3435
    %v3446 = vpack.c.b16 %v3438, %v3437
    %3455 = vmatpush.bf16.msra.mxu0 %v3446
    %3456 = vmatpush.bf16.msra.mxu0 %v3445
    %3457 = vmatpush.bf16.msra.mxu0 %v3444
    %3458 = vmatpush.bf16.msra.mxu0 %v3443
    %3459 = vmatpush.bf16.msra.mxu0 %v3442
    %3460 = vmatpush.bf16.msra.mxu0 %v3441
    %3461 = vmatpush.bf16.msra.mxu0 %v3440
    %3462 = vmatpush.bf16.msra.mxu0 %v3439
    %3463 = vmatmul.bf16.gmra.mxu0 %v568
    %v3464 = vpop.f32.mrf.mxu0
    %v3465 = vadd.f32 0.0, %v3464
    %v3466 = vpop.f32.mrf.mxu0
    %3467 = vdwg.mxu0
    %v3484 = vunpack.c.l.b16 %v1141
    %v3485 = vunpack.c.l.b16 %v1142
    %v3486 = vunpack.c.l.b16 %v1143
    %v3487 = vunpack.c.l.b16 %v1144
    %v3488 = vunpack.c.l.b16 %v1145
    %v3489 = vunpack.c.l.b16 %v1146
    %v3490 = vunpack.c.l.b16 %v1147
    %v3491 = vunpack.c.l.b16 %v1148
    %v3492 = vunpack.c.l.b16 %v1149
    %v3493 = vunpack.c.l.b16 %v1150
    %v3494 = vunpack.c.l.b16 %v1151
    %v3495 = vunpack.c.l.b16 %v1152
    %v3496 = vunpack.c.l.b16 %v1153
    %v3497 = vunpack.c.l.b16 %v1154
    %v3498 = vunpack.c.l.b16 %v1155
    %v3499 = vunpack.c.l.b16 %v1156
    %v3500 = vpack.c.b16 %v3485, %v3484
    %v3501 = vpack.c.b16 %v3487, %v3486
    %v3502 = vpack.c.b16 %v3489, %v3488
    %v3503 = vpack.c.b16 %v3491, %v3490
    %v3504 = vpack.c.b16 %v3493, %v3492
    %v3505 = vpack.c.b16 %v3495, %v3494
    %v3506 = vpack.c.b16 %v3497, %v3496
    %v3507 = vpack.c.b16 %v3499, %v3498
    %3516 = vmatpush.bf16.msra.mxu0 %v3507
    %3517 = vmatpush.bf16.msra.mxu0 %v3506
    %3518 = vmatpush.bf16.msra.mxu0 %v3505
    %3519 = vmatpush.bf16.msra.mxu0 %v3504
    %3520 = vmatpush.bf16.msra.mxu0 %v3503
    %3521 = vmatpush.bf16.msra.mxu0 %v3502
    %3522 = vmatpush.bf16.msra.mxu0 %v3501
    %3523 = vmatpush.bf16.msra.mxu0 %v3500
    %3524 = vmatmul.bf16.gmra.mxu0 %v569
    %v3525 = vpop.f32.mrf.mxu0
    %v3526 = vadd.f32 0.0, %v3525
    %v3527 = vpop.f32.mrf.mxu0
    %3528 = vdwg.mxu0
    %v3545 = vunpack.c.l.b16 %v1157
    %v3546 = vunpack.c.l.b16 %v1158
    %v3547 = vunpack.c.l.b16 %v1159
    %v3548 = vunpack.c.l.b16 %v1160
    %v3549 = vunpack.c.l.b16 %v1161
    %v3550 = vunpack.c.l.b16 %v1162
    %v3551 = vunpack.c.l.b16 %v1163
    %v3552 = vunpack.c.l.b16 %v1164
    %v3553 = vunpack.c.l.b16 %v1165
    %v3554 = vunpack.c.l.b16 %v1166
    %v3555 = vunpack.c.l.b16 %v1167
    %v3556 = vunpack.c.l.b16 %v1168
    %v3557 = vunpack.c.l.b16 %v1169
    %v3558 = vunpack.c.l.b16 %v1170
    %v3559 = vunpack.c.l.b16 %v1171
    %v3560 = vunpack.c.l.b16 %v1172
    %v3561 = vpack.c.b16 %v3546, %v3545
    %v3562 = vpack.c.b16 %v3548, %v3547
    %v3563 = vpack.c.b16 %v3550, %v3549
    %v3564 = vpack.c.b16 %v3552, %v3551
    %v3565 = vpack.c.b16 %v3554, %v3553
    %v3566 = vpack.c.b16 %v3556, %v3555
    %v3567 = vpack.c.b16 %v3558, %v3557
    %v3568 = vpack.c.b16 %v3560, %v3559
    %3577 = vmatpush.bf16.msra.mxu0 %v3568
    %3578 = vmatpush.bf16.msra.mxu0 %v3567
    %3579 = vmatpush.bf16.msra.mxu0 %v3566
    %3580 = vmatpush.bf16.msra.mxu0 %v3565
    %3581 = vmatpush.bf16.msra.mxu0 %v3564
    %3582 = vmatpush.bf16.msra.mxu0 %v3563
    %3583 = vmatpush.bf16.msra.mxu0 %v3562
    %3584 = vmatpush.bf16.msra.mxu0 %v3561
    %3585 = vmatmul.bf16.gmra.mxu0 %v570
    %v3586 = vpop.f32.mrf.mxu0
    %v3587 = vadd.f32 0.0, %v3586
    %v3588 = vpop.f32.mrf.mxu0
    %3589 = vdwg.mxu0
    %v3606 = vunpack.c.l.b16 %v1173
    %v3607 = vunpack.c.l.b16 %v1174
    %v3608 = vunpack.c.l.b16 %v1175
    %v3609 = vunpack.c.l.b16 %v1176
    %v3610 = vunpack.c.l.b16 %v1177
    %v3611 = vunpack.c.l.b16 %v1178
    %v3612 = vunpack.c.l.b16 %v1179
    %v3613 = vunpack.c.l.b16 %v1180
    %v3614 = vunpack.c.l.b16 %v1181
    %v3615 = vunpack.c.l.b16 %v1182
    %v3616 = vunpack.c.l.b16 %v1183
    %v3617 = vunpack.c.l.b16 %v1184
    %v3618 = vunpack.c.l.b16 %v1185
    %v3619 = vunpack.c.l.b16 %v1186
    %v3620 = vunpack.c.l.b16 %v1187
    %v3621 = vunpack.c.l.b16 %v1188
    %v3622 = vpack.c.b16 %v3607, %v3606
    %v3623 = vpack.c.b16 %v3609, %v3608
    %v3624 = vpack.c.b16 %v3611, %v3610
    %v3625 = vpack.c.b16 %v3613, %v3612
    %v3626 = vpack.c.b16 %v3615, %v3614
    %v3627 = vpack.c.b16 %v3617, %v3616
    %v3628 = vpack.c.b16 %v3619, %v3618
    %v3629 = vpack.c.b16 %v3621, %v3620
    %3638 = vmatpush.bf16.msra.mxu0 %v3629
    %3639 = vmatpush.bf16.msra.mxu0 %v3628
    %3640 = vmatpush.bf16.msra.mxu0 %v3627
    %3641 = vmatpush.bf16.msra.mxu0 %v3626
    %3642 = vmatpush.bf16.msra.mxu0 %v3625
    %3643 = vmatpush.bf16.msra.mxu0 %v3624
    %3644 = vmatpush.bf16.msra.mxu0 %v3623
    %3645 = vmatpush.bf16.msra.mxu0 %v3622
    %3646 = vmatmul.bf16.gmra.mxu0 %v571
    %v3647 = vpop.f32.mrf.mxu0
    %v3648 = vadd.f32 0.0, %v3647
    %v3649 = vpop.f32.mrf.mxu0
    %3650 = vdwg.mxu0
    %v3667 = vunpack.c.l.b16 %v1189
    %v3668 = vunpack.c.l.b16 %v1190
    %v3669 = vunpack.c.l.b16 %v1191
    %v3670 = vunpack.c.l.b16 %v1192
    %v3671 = vunpack.c.l.b16 %v1193
    %v3672 = vunpack.c.l.b16 %v1194
    %v3673 = vunpack.c.l.b16 %v1195
    %v3674 = vunpack.c.l.b16 %v1196
    %v3675 = vunpack.c.l.b16 %v1197
    %v3676 = vunpack.c.l.b16 %v1198
    %v3677 = vunpack.c.l.b16 %v1199
    %v3678 = vunpack.c.l.b16 %v1200
    %v3679 = vunpack.c.l.b16 %v1201
    %v3680 = vunpack.c.l.b16 %v1202
    %v3681 = vunpack.c.l.b16 %v1203
    %v3682 = vunpack.c.l.b16 %v1204
    %v3683 = vpack.c.b16 %v3668, %v3667
    %v3684 = vpack.c.b16 %v3670, %v3669
    %v3685 = vpack.c.b16 %v3672, %v3671
    %v3686 = vpack.c.b16 %v3674, %v3673
    %v3687 = vpack.c.b16 %v3676, %v3675
    %v3688 = vpack.c.b16 %v3678, %v3677
    %v3689 = vpack.c.b16 %v3680, %v3679
    %v3690 = vpack.c.b16 %v3682, %v3681
    %3699 = vmatpush.bf16.msra.mxu0 %v3690
    %3700 = vmatpush.bf16.msra.mxu0 %v3689
    %3701 = vmatpush.bf16.msra.mxu0 %v3688
    %3702 = vmatpush.bf16.msra.mxu0 %v3687
    %3703 = vmatpush.bf16.msra.mxu0 %v3686
    %3704 = vmatpush.bf16.msra.mxu0 %v3685
    %3705 = vmatpush.bf16.msra.mxu0 %v3684
    %3706 = vmatpush.bf16.msra.mxu0 %v3683
    %3707 = vmatmul.bf16.gmra.mxu0 %v572
    %v3708 = vpop.f32.mrf.mxu0
    %v3709 = vadd.f32 0.0, %v3708
    %v3710 = vpop.f32.mrf.mxu0
    %3711 = vdwg.mxu0
    %v3728 = vunpack.c.l.b16 %v1205
    %v3729 = vunpack.c.l.b16 %v1206
    %v3730 = vunpack.c.l.b16 %v1207
    %v3731 = vunpack.c.l.b16 %v1208
    %v3732 = vunpack.c.l.b16 %v1209
    %v3733 = vunpack.c.l.b16 %v1210
    %v3734 = vunpack.c.l.b16 %v1211
    %v3735 = vunpack.c.l.b16 %v1212
    %v3736 = vunpack.c.l.b16 %v1213
    %v3737 = vunpack.c.l.b16 %v1214
    %v3738 = vunpack.c.l.b16 %v1215
    %v3739 = vunpack.c.l.b16 %v1216
    %v3740 = vunpack.c.l.b16 %v1217
    %v3741 = vunpack.c.l.b16 %v1218
    %v3742 = vunpack.c.l.b16 %v1219
    %v3743 = vunpack.c.l.b16 %v1220
    %v3744 = vpack.c.b16 %v3729, %v3728
    %v3745 = vpack.c.b16 %v3731, %v3730
    %v3746 = vpack.c.b16 %v3733, %v3732
    %v3747 = vpack.c.b16 %v3735, %v3734
    %v3748 = vpack.c.b16 %v3737, %v3736
    %v3749 = vpack.c.b16 %v3739, %v3738
    %v3750 = vpack.c.b16 %v3741, %v3740
    %v3751 = vpack.c.b16 %v3743, %v3742
    %3760 = vmatpush.bf16.msra.mxu0 %v3751
    %3761 = vmatpush.bf16.msra.mxu0 %v3750
    %3762 = vmatpush.bf16.msra.mxu0 %v3749
    %3763 = vmatpush.bf16.msra.mxu0 %v3748
    %3764 = vmatpush.bf16.msra.mxu0 %v3747
    %3765 = vmatpush.bf16.msra.mxu0 %v3746
    %3766 = vmatpush.bf16.msra.mxu0 %v3745
    %3767 = vmatpush.bf16.msra.mxu0 %v3744
    %3768 = vmatmul.bf16.gmra.mxu0 %v573
    %v3769 = vpop.f32.mrf.mxu0
    %v3770 = vadd.f32 0.0, %v3769
    %v3771 = vpop.f32.mrf.mxu0
    %3772 = vdwg.mxu0
    %v3789 = vunpack.c.l.b16 %v1221
    %v3790 = vunpack.c.l.b16 %v1222
    %v3791 = vunpack.c.l.b16 %v1223
    %v3792 = vunpack.c.l.b16 %v1224
    %v3793 = vunpack.c.l.b16 %v1225
    %v3794 = vunpack.c.l.b16 %v1226
    %v3795 = vunpack.c.l.b16 %v1227
    %v3796 = vunpack.c.l.b16 %v1228
    %v3797 = vunpack.c.l.b16 %v1229
    %v3798 = vunpack.c.l.b16 %v1230
    %v3799 = vunpack.c.l.b16 %v1231
    %v3800 = vunpack.c.l.b16 %v1232
    %v3801 = vunpack.c.l.b16 %v1233
    %v3802 = vunpack.c.l.b16 %v1234
    %v3803 = vunpack.c.l.b16 %v1235
    %v3804 = vunpack.c.l.b16 %v1236
    %v3805 = vpack.c.b16 %v3790, %v3789
    %v3806 = vpack.c.b16 %v3792, %v3791
    %v3807 = vpack.c.b16 %v3794, %v3793
    %v3808 = vpack.c.b16 %v3796, %v3795
    %v3809 = vpack.c.b16 %v3798, %v3797
    %v3810 = vpack.c.b16 %v3800, %v3799
    %v3811 = vpack.c.b16 %v3802, %v3801
    %v3812 = vpack.c.b16 %v3804, %v3803
    %3821 = vmatpush.bf16.msra.mxu0 %v3812
    %3822 = vmatpush.bf16.msra.mxu0 %v3811
    %3823 = vmatpush.bf16.msra.mxu0 %v3810
    %3824 = vmatpush.bf16.msra.mxu0 %v3809
    %3825 = vmatpush.bf16.msra.mxu0 %v3808
    %3826 = vmatpush.bf16.msra.mxu0 %v3807
    %3827 = vmatpush.bf16.msra.mxu0 %v3806
    %3828 = vmatpush.bf16.msra.mxu0 %v3805
    %3829 = vmatmul.bf16.gmra.mxu0 %v574
    %v3830 = vpop.f32.mrf.mxu0
    %v3831 = vadd.f32 0.0, %v3830
    %v3832 = vpop.f32.mrf.mxu0
    %3833 = vdwg.mxu0
    %v3850 = vunpack.c.l.b16 %v1237
    %v3851 = vunpack.c.l.b16 %v1238
    %v3852 = vunpack.c.l.b16 %v1239
    %v3853 = vunpack.c.l.b16 %v1240
    %v3854 = vunpack.c.l.b16 %v1241
    %v3855 = vunpack.c.l.b16 %v1242
    %v3856 = vunpack.c.l.b16 %v1243
    %v3857 = vunpack.c.l.b16 %v1244
    %v3858 = vunpack.c.l.b16 %v1245
    %v3859 = vunpack.c.l.b16 %v1246
    %v3860 = vunpack.c.l.b16 %v1247
    %v3861 = vunpack.c.l.b16 %v1248
    %v3862 = vunpack.c.l.b16 %v1249
    %v3863 = vunpack.c.l.b16 %v1250
    %v3864 = vunpack.c.l.b16 %v1251
    %v3865 = vunpack.c.l.b16 %v1252
    %v3866 = vpack.c.b16 %v3851, %v3850
    %v3867 = vpack.c.b16 %v3853, %v3852
    %v3868 = vpack.c.b16 %v3855, %v3854
    %v3869 = vpack.c.b16 %v3857, %v3856
    %v3870 = vpack.c.b16 %v3859, %v3858
    %v3871 = vpack.c.b16 %v3861, %v3860
    %v3872 = vpack.c.b16 %v3863, %v3862
    %v3873 = vpack.c.b16 %v3865, %v3864
    %3882 = vmatpush.bf16.msra.mxu0 %v3873
    %3883 = vmatpush.bf16.msra.mxu0 %v3872
    %3884 = vmatpush.bf16.msra.mxu0 %v3871
    %3885 = vmatpush.bf16.msra.mxu0 %v3870
    %3886 = vmatpush.bf16.msra.mxu0 %v3869
    %3887 = vmatpush.bf16.msra.mxu0 %v3868
    %3888 = vmatpush.bf16.msra.mxu0 %v3867
    %3889 = vmatpush.bf16.msra.mxu0 %v3866
    %3890 = vmatmul.bf16.gmra.mxu0 %v575
    %v3891 = vpop.f32.mrf.mxu0
    %v3892 = vadd.f32 0.0, %v3891
    %v3893 = vpop.f32.mrf.mxu0
    %3894 = vdwg.mxu0
    %v3911 = vunpack.c.l.b16 %v1253
    %v3912 = vunpack.c.l.b16 %v1254
    %v3913 = vunpack.c.l.b16 %v1255
    %v3914 = vunpack.c.l.b16 %v1256
    %v3915 = vunpack.c.l.b16 %v1257
    %v3916 = vunpack.c.l.b16 %v1258
    %v3917 = vunpack.c.l.b16 %v1259
    %v3918 = vunpack.c.l.b16 %v1260
    %v3919 = vunpack.c.l.b16 %v1261
    %v3920 = vunpack.c.l.b16 %v1262
    %v3921 = vunpack.c.l.b16 %v1263
    %v3922 = vunpack.c.l.b16 %v1264
    %v3923 = vunpack.c.l.b16 %v1265
    %v3924 = vunpack.c.l.b16 %v1266
    %v3925 = vunpack.c.l.b16 %v1267
    %v3926 = vunpack.c.l.b16 %v1268
    %v3927 = vpack.c.b16 %v3912, %v3911
    %v3928 = vpack.c.b16 %v3914, %v3913
    %v3929 = vpack.c.b16 %v3916, %v3915
    %v3930 = vpack.c.b16 %v3918, %v3917
    %v3931 = vpack.c.b16 %v3920, %v3919
    %v3932 = vpack.c.b16 %v3922, %v3921
    %v3933 = vpack.c.b16 %v3924, %v3923
    %v3934 = vpack.c.b16 %v3926, %v3925
    %3943 = vmatpush.bf16.msra.mxu0 %v3934
    %3944 = vmatpush.bf16.msra.mxu0 %v3933
    %3945 = vmatpush.bf16.msra.mxu0 %v3932
    %3946 = vmatpush.bf16.msra.mxu0 %v3931
    %3947 = vmatpush.bf16.msra.mxu0 %v3930
    %3948 = vmatpush.bf16.msra.mxu0 %v3929
    %3949 = vmatpush.bf16.msra.mxu0 %v3928
    %3950 = vmatpush.bf16.msra.mxu0 %v3927
    %3951 = vmatmul.bf16.gmra.mxu0 %v576
    %v3952 = vpop.f32.mrf.mxu0
    %v3953 = vadd.f32 0.0, %v3952
    %v3954 = vpop.f32.mrf.mxu0
    %3955 = vdwg.mxu0
    %v3972 = vunpack.c.l.b16 %v1269
    %v3973 = vunpack.c.l.b16 %v1270
    %v3974 = vunpack.c.l.b16 %v1271
    %v3975 = vunpack.c.l.b16 %v1272
    %v3976 = vunpack.c.l.b16 %v1273
    %v3977 = vunpack.c.l.b16 %v1274
    %v3978 = vunpack.c.l.b16 %v1275
    %v3979 = vunpack.c.l.b16 %v1276
    %v3980 = vunpack.c.l.b16 %v1277
    %v3981 = vunpack.c.l.b16 %v1278
    %v3982 = vunpack.c.l.b16 %v1279
    %v3983 = vunpack.c.l.b16 %v1280
    %v3984 = vunpack.c.l.b16 %v1281
    %v3985 = vunpack.c.l.b16 %v1282
    %v3986 = vunpack.c.l.b16 %v1283
    %v3987 = vunpack.c.l.b16 %v1284
    %v3988 = vpack.c.b16 %v3973, %v3972
    %v3989 = vpack.c.b16 %v3975, %v3974
    %v3990 = vpack.c.b16 %v3977, %v3976
    %v3991 = vpack.c.b16 %v3979, %v3978
    %v3992 = vpack.c.b16 %v3981, %v3980
    %v3993 = vpack.c.b16 %v3983, %v3982
    %v3994 = vpack.c.b16 %v3985, %v3984
    %v3995 = vpack.c.b16 %v3987, %v3986
    %4004 = vmatpush.bf16.msra.mxu0 %v3995
    %4005 = vmatpush.bf16.msra.mxu0 %v3994
    %4006 = vmatpush.bf16.msra.mxu0 %v3993
    %4007 = vmatpush.bf16.msra.mxu0 %v3992
    %4008 = vmatpush.bf16.msra.mxu0 %v3991
    %4009 = vmatpush.bf16.msra.mxu0 %v3990
    %4010 = vmatpush.bf16.msra.mxu0 %v3989
    %4011 = vmatpush.bf16.msra.mxu0 %v3988
    %4012 = vmatmul.bf16.gmra.mxu0 %v577
    %v4013 = vpop.f32.mrf.mxu0
    %v4014 = vadd.f32 0.0, %v4013
    %v4015 = vpop.f32.mrf.mxu0
    %4016 = vdwg.mxu0
    %v4033 = vunpack.c.l.b16 %v1285
    %v4034 = vunpack.c.l.b16 %v1286
    %v4035 = vunpack.c.l.b16 %v1287
    %v4036 = vunpack.c.l.b16 %v1288
    %v4037 = vunpack.c.l.b16 %v1289
    %v4038 = vunpack.c.l.b16 %v1290
    %v4039 = vunpack.c.l.b16 %v1291
    %v4040 = vunpack.c.l.b16 %v1292
    %v4041 = vunpack.c.l.b16 %v1293
    %v4042 = vunpack.c.l.b16 %v1294
    %v4043 = vunpack.c.l.b16 %v1295
    %v4044 = vunpack.c.l.b16 %v1296
    %v4045 = vunpack.c.l.b16 %v1297
    %v4046 = vunpack.c.l.b16 %v1298
    %v4047 = vunpack.c.l.b16 %v1299
    %v4048 = vunpack.c.l.b16 %v1300
    %v4049 = vpack.c.b16 %v4034, %v4033
    %v4050 = vpack.c.b16 %v4036, %v4035
    %v4051 = vpack.c.b16 %v4038, %v4037
    %v4052 = vpack.c.b16 %v4040, %v4039
    %v4053 = vpack.c.b16 %v4042, %v4041
    %v4054 = vpack.c.b16 %v4044, %v4043
    %v4055 = vpack.c.b16 %v4046, %v4045
    %v4056 = vpack.c.b16 %v4048, %v4047
    %4065 = vmatpush.bf16.msra.mxu0 %v4056
    %4066 = vmatpush.bf16.msra.mxu0 %v4055
    %4067 = vmatpush.bf16.msra.mxu0 %v4054
    %4068 = vmatpush.bf16.msra.mxu0 %v4053
    %4069 = vmatpush.bf16.msra.mxu0 %v4052
    %4070 = vmatpush.bf16.msra.mxu0 %v4051
    %4071 = vmatpush.bf16.msra.mxu0 %v4050
    %4072 = vmatpush.bf16.msra.mxu0 %v4049
    %4073 = vmatmul.bf16.gmra.mxu0 %v578
    %v4074 = vpop.f32.mrf.mxu0
    %v4075 = vadd.f32 0.0, %v4074
    %v4076 = vpop.f32.mrf.mxu0
    %4077 = vdwg.mxu0
    %v4094 = vunpack.c.l.b16 %v1301
    %v4095 = vunpack.c.l.b16 %v1302
    %v4096 = vunpack.c.l.b16 %v1303
    %v4097 = vunpack.c.l.b16 %v1304
    %v4098 = vunpack.c.l.b16 %v1305
    %v4099 = vunpack.c.l.b16 %v1306
    %v4100 = vunpack.c.l.b16 %v1307
    %v4101 = vunpack.c.l.b16 %v1308
    %v4102 = vunpack.c.l.b16 %v1309
    %v4103 = vunpack.c.l.b16 %v1310
    %v4104 = vunpack.c.l.b16 %v1311
    %v4105 = vunpack.c.l.b16 %v1312
    %v4106 = vunpack.c.l.b16 %v1313
    %v4107 = vunpack.c.l.b16 %v1314
    %v4108 = vunpack.c.l.b16 %v1315
    %v4109 = vunpack.c.l.b16 %v1316
    %v4110 = vpack.c.b16 %v4095, %v4094
    %v4111 = vpack.c.b16 %v4097, %v4096
    %v4112 = vpack.c.b16 %v4099, %v4098
    %v4113 = vpack.c.b16 %v4101, %v4100
    %v4114 = vpack.c.b16 %v4103, %v4102
    %v4115 = vpack.c.b16 %v4105, %v4104
    %v4116 = vpack.c.b16 %v4107, %v4106
    %v4117 = vpack.c.b16 %v4109, %v4108
    %4126 = vmatpush.bf16.msra.mxu0 %v4117
    %4127 = vmatpush.bf16.msra.mxu0 %v4116
    %4128 = vmatpush.bf16.msra.mxu0 %v4115
    %4129 = vmatpush.bf16.msra.mxu0 %v4114
    %4130 = vmatpush.bf16.msra.mxu0 %v4113
    %4131 = vmatpush.bf16.msra.mxu0 %v4112
    %4132 = vmatpush.bf16.msra.mxu0 %v4111
    %4133 = vmatpush.bf16.msra.mxu0 %v4110
    %4134 = vmatmul.bf16.gmra.mxu0 %v579
    %v4135 = vpop.f32.mrf.mxu0
    %v4136 = vadd.f32 0.0, %v4135
    %v4137 = vpop.f32.mrf.mxu0
    %4138 = vdwg.mxu0
    %v4155 = vunpack.c.l.b16 %v1317
    %v4156 = vunpack.c.l.b16 %v1318
    %v4157 = vunpack.c.l.b16 %v1319
    %v4158 = vunpack.c.l.b16 %v1320
    %v4159 = vunpack.c.l.b16 %v1321
    %v4160 = vunpack.c.l.b16 %v1322
    %v4161 = vunpack.c.l.b16 %v1323
    %v4162 = vunpack.c.l.b16 %v1324
    %v4163 = vunpack.c.l.b16 %v1325
    %v4164 = vunpack.c.l.b16 %v1326
    %v4165 = vunpack.c.l.b16 %v1327
    %v4166 = vunpack.c.l.b16 %v1328
    %v4167 = vunpack.c.l.b16 %v1329
    %v4168 = vunpack.c.l.b16 %v1330
    %v4169 = vunpack.c.l.b16 %v1331
    %v4170 = vunpack.c.l.b16 %v1332
    %v4171 = vpack.c.b16 %v4156, %v4155
    %v4172 = vpack.c.b16 %v4158, %v4157
    %v4173 = vpack.c.b16 %v4160, %v4159
    %v4174 = vpack.c.b16 %v4162, %v4161
    %v4175 = vpack.c.b16 %v4164, %v4163
    %v4176 = vpack.c.b16 %v4166, %v4165
    %v4177 = vpack.c.b16 %v4168, %v4167
    %v4178 = vpack.c.b16 %v4170, %v4169
    %4187 = vmatpush.bf16.msra.mxu0 %v4178
    %4188 = vmatpush.bf16.msra.mxu0 %v4177
    %4189 = vmatpush.bf16.msra.mxu0 %v4176
    %4190 = vmatpush.bf16.msra.mxu0 %v4175
    %4191 = vmatpush.bf16.msra.mxu0 %v4174
    %4192 = vmatpush.bf16.msra.mxu0 %v4173
    %4193 = vmatpush.bf16.msra.mxu0 %v4172
    %4194 = vmatpush.bf16.msra.mxu0 %v4171
    %4195 = vmatmul.bf16.gmra.mxu0 %v580
    %v4196 = vpop.f32.mrf.mxu0
    %v4197 = vadd.f32 0.0, %v4196
    %v4198 = vpop.f32.mrf.mxu0
    %4199 = vdwg.mxu0
    %v4200 = vadd.f32 %v1391, %v1452
    %v4201 = vadd.f32 %v4200, %v1513
    %v4202 = vadd.f32 %v4201, %v1574
    %v4203 = vadd.f32 %v4202, %v1635
    %v4204 = vadd.f32 %v4203, %v1696
    %v4205 = vadd.f32 %v4204, %v1757
    %v4206 = vadd.f32 %v4205, %v1818
    %v4207 = vadd.f32 %v4206, %v1879
    %v4208 = vadd.f32 %v4207, %v1940
    %v4209 = vadd.f32 %v4208, %v2001
    %v4210 = vadd.f32 %v4209, %v2062
    %v4211 = vadd.f32 %v4210, %v2123
    %v4212 = vadd.f32 %v4211, %v2184
    %v4213 = vadd.f32 %v4212, %v2245
    %v4214 = vadd.f32 %v4213, %v2306
    %v4215 = vadd.f32 %v4214, %v2367
    %v4216 = vadd.f32 %v4215, %v2428
    %v4217 = vadd.f32 %v4216, %v2489
    %v4218 = vadd.f32 %v4217, %v2550
    %v4219 = vadd.f32 %v4218, %v2611
    %v4220 = vadd.f32 %v4219, %v2672
    %v4221 = vadd.f32 %v4220, %v2733
    %v4222 = vadd.f32 %v4221, %v2794
    %v4223 = vadd.f32 %v4222, %v2855
    %v4224 = vadd.f32 %v4223, %v2916
    %v4225 = vadd.f32 %v4224, %v2977
    %v4226 = vadd.f32 %v4225, %v3038
    %v4227 = vadd.f32 %v4226, %v3099
    %v4228 = vadd.f32 %v4227, %v3160
    %v4229 = vadd.f32 %v4228, %v3221
    %v4230 = vadd.f32 %v4229, %v3282
    %v4231 = vadd.f32 %v4230, %v3343
    %v4232 = vadd.f32 %v4231, %v3404
    %v4233 = vadd.f32 %v4232, %v3465
    %v4234 = vadd.f32 %v4233, %v3526
    %v4235 = vadd.f32 %v4234, %v3587
    %v4236 = vadd.f32 %v4235, %v3648
    %v4237 = vadd.f32 %v4236, %v3709
    %v4238 = vadd.f32 %v4237, %v3770
    %v4239 = vadd.f32 %v4238, %v3831
    %v4240 = vadd.f32 %v4239, %v3892
    %v4241 = vadd.f32 %v4240, %v3953
    %v4242 = vadd.f32 %v4241, %v4014
    %v4243 = vadd.f32 %v4242, %v4075
    %v4244 = vadd.f32 %v4243, %v4136
    %v4245 = vadd.f32 %v4244, %v4197
    %v4246 = vld [vmem:[#allocation8] sm:$0x1]
    %v4248 = vperm.slane %v4246, 0
    %v4250 = vadd.f32 %v4245, %v4248
    %v4251 = vmax.f32 %v4250, 0.0
    %v4252 = vld [vmem:[%s5] sm:$0xff]
    %v4253 = vld [vmem:[%s5 + $0x8] sm:$0xff]
    %v4254 = vld [vmem:[%s5 + $0x10] sm:$0xff]
    %v4255 = vld [vmem:[%s5 + $0x18] sm:$0xff]
    %v4256 = vld [vmem:[%s5 + $0x20] sm:$0xff]
    %v4257 = vld [vmem:[%s5 + $0x28] sm:$0xff]
    %v4258 = vld [vmem:[%s5 + $0x30] sm:$0xff]
    %v4259 = vld [vmem:[%s5 + $0x38] sm:$0xff]
    %v4260 = vld [vmem:[%s5 + $0x40] sm:$0xff]
    %v4261 = vld [vmem:[%s5 + $0x48] sm:$0xff]
    %v4262 = vld [vmem:[%s5 + $0x50] sm:$0xff]
    %v4263 = vld [vmem:[%s5 + $0x58] sm:$0xff]
    %v4264 = vld [vmem:[%s5 + $0x60] sm:$0xff]
    %v4265 = vld [vmem:[%s5 + $0x68] sm:$0xff]
    %v4266 = vld [vmem:[%s5 + $0x70] sm:$0xff]
    %v4267 = vld [vmem:[%s5 + $0x78] sm:$0xff]
    %v4268 = vld [vmem:[#allocation10] sm:$0x1]
    %v4270 = vperm.slane %v4268, 0
    %4272 = vmatpush.msra.mxu0 %v4267
    %4273 = vmatpush.msra.mxu0 %v4266
    %4274 = vmatpush.msra.mxu0 %v4265
    %4275 = vmatpush.msra.mxu0 %v4264
    %4276 = vmatpush.msra.mxu0 %v4263
    %4277 = vmatpush.msra.mxu0 %v4262
    %4278 = vmatpush.msra.mxu0 %v4261
    %4279 = vmatpush.msra.mxu0 %v4260
    %4280 = vmatpush.msra.mxu0 %v4259
    %4281 = vmatpush.msra.mxu0 %v4258
    %4282 = vmatpush.msra.mxu0 %v4257
    %4283 = vmatpush.msra.mxu0 %v4256
    %4284 = vmatpush.msra.mxu0 %v4255
    %4285 = vmatpush.msra.mxu0 %v4254
    %4286 = vmatpush.msra.mxu0 %v4253
    %4287 = vmatpush.msra.mxu0 %v4252
    %4288 = vmatmul.f32.gmra.mxu0 %v4251
    %v4289 = vpop.f32.mrf.mxu0
    %v4290 = vadd.f32 %v4270, %v4289
    %4291 = vdwg.mxu0
    %vm4292 = vcmask 80896
    %v4293 = vsel %vm4292, %v4290, -inf
    %4294 = vmax.xlane.f32.xlu0 %v4293
    %v4295 = vpop.xlane.xlu0 %4294
    %v4296 = vsub.f32 %v4290, %v4295
    %v4297 = vmul.f32 %v4296, 1.442695
    %v4298 = vpow.pop %v4297
    %v4299 = vsel %vm4292, %v4298, 0.0
    %4300 = vadd.xlane.f32.xlu0 %v4299
    %v4301 = vpop.xlane.xlu0 %4300
    %v4302 = vrcp.pop %v4301
    %v4303 = vmul.f32 %v4298, %v4302
    %v4304 = vld [vmem:[#allocation11] sm:$0xff]
    %v4305 = vld [vmem:[#allocation11 + $0x8] sm:$0xff]
    %v4306 = vld [vmem:[#allocation11 + $0x10] sm:$0xff]
    %v4307 = vld [vmem:[#allocation11 + $0x18] sm:$0xff]
    %v4308 = vld [vmem:[#allocation11 + $0x20] sm:$0xff]
    %v4309 = vld [vmem:[#allocation11 + $0x28] sm:$0xff]
    %v4310 = vld [vmem:[#allocation11 + $0x30] sm:$0xff]
    %v4311 = vld [vmem:[#allocation11 + $0x38] sm:$0xff]
    %v4312 = vld [vmem:[#allocation11 + $0x40] sm:$0xff]
    %v4313 = vld [vmem:[#allocation11 + $0x48] sm:$0xff]
    %v4314 = vld [vmem:[#allocation11 + $0x50] sm:$0xff]
    %v4315 = vld [vmem:[#allocation11 + $0x58] sm:$0xff]
    %v4316 = vld [vmem:[#allocation11 + $0x60] sm:$0x3]
    %v4317 = vld [vmem:[#allocation11 + $0x68] sm:$0x3]
    %v4318 = vld [vmem:[#allocation11 + $0x70] sm:$0x3]
    %v4319 = vld [vmem:[#allocation11 + $0x78] sm:$0x3]
    %v4320 = vld [vmem:[#allocation11 + $0x80] sm:$0x3]
    %v4321 = vld [vmem:[#allocation11 + $0x88] sm:$0x3]
    %v4322 = vld [vmem:[#allocation11 + $0x90] sm:$0x3]
    %v4323 = vld [vmem:[#allocation11 + $0x98] sm:$0x3]
    %v4324 = vld [vmem:[#allocation11 + $0xa0] sm:$0x3]
    %v4325 = vld [vmem:[#allocation11 + $0xa8] sm:$0x3]
    %v4326 = vld [vmem:[#allocation11 + $0xb0] sm:$0x3]
    %v4327 = vld [vmem:[#allocation11 + $0xb8] sm:$0x3]
    %v4328 = vld [vmem:[#allocation13] sm:$0xff]
    %v4329 = vld [vmem:[#allocation13 + $0x8] sm:$0xf]
    %v4332 = vperm.slane %v4328, 0
    %v4333 = vperm.slane %v4328, 1
    %v4334 = vperm.slane %v4328, 2
    %v4335 = vperm.slane %v4328, 3
    %v4336 = vperm.slane %v4328, 4
    %v4337 = vperm.slane %v4328, 5
    %v4338 = vperm.slane %v4328, 6
    %v4339 = vperm.slane %v4328, 7
    %v4340 = vperm.slane %v4329, 0
    %v4341 = vperm.slane %v4329, 1
    %v4342 = vperm.slane %v4329, 2
    %v4343 = vperm.slane %v4329, 3
    %v4357 = vsel %vm4292, %v4303, 0
    %vm4359 = vcmask 1041408
    %v4361 = vsel %vm4359, %v4316, 0
    %v4364 = vsel %vm4359, %v4317, 0
    %v4367 = vsel %vm4359, %v4318, 0
    %v4370 = vsel %vm4359, %v4319, 0
    %v4373 = vsel %vm4359, %v4320, 0
    %v4376 = vsel %vm4359, %v4321, 0
    %v4379 = vsel %vm4359, %v4322, 0
    %v4382 = vsel %vm4359, %v4323, 0
    %v4385 = vsel %vm4359, %v4324, 0
    %v4388 = vsel %vm4359, %v4325, 0
    %v4391 = vsel %vm4359, %v4326, 0
    %v4394 = vsel %vm4359, %v4327, 0
    %4396 = vmatpush.msra.mxu0 0.0
    %4397 = vmatpush.msra.mxu0 0.0
    %4398 = vmatpush.msra.mxu0 0.0
    %4399 = vmatpush.msra.mxu0 0.0
    %4400 = vmatpush.msra.mxu0 0.0
    %4401 = vmatpush.msra.mxu0 0.0
    %4402 = vmatpush.msra.mxu0 0.0
    %4403 = vmatpush.msra.mxu0 0.0
    %4404 = vmatpush.msra.mxu0 0.0
    %4405 = vmatpush.msra.mxu0 0.0
    %4406 = vmatpush.msra.mxu0 0.0
    %4407 = vmatpush.msra.mxu0 0.0
    %4408 = vmatpush.msra.mxu0 0.0
    %4409 = vmatpush.msra.mxu0 0.0
    %4410 = vmatpush.msra.mxu0 %v4361
    %4411 = vmatpush.msra.mxu0 %v4304
    %4412 = vmatmul.f32.gmra.mxu0 %v4357
    %v4413 = vpop.f32.mrf.mxu0
    %v4414 = vadd.f32 %v4332, %v4413
    %4415 = vdwg.mxu0
    %4416 = vmatpush.msra.mxu0 0.0
    %4417 = vmatpush.msra.mxu0 0.0
    %4418 = vmatpush.msra.mxu0 0.0
    %4419 = vmatpush.msra.mxu0 0.0
    %4420 = vmatpush.msra.mxu0 0.0
    %4421 = vmatpush.msra.mxu0 0.0
    %4422 = vmatpush.msra.mxu0 0.0
    %4423 = vmatpush.msra.mxu0 0.0
    %4424 = vmatpush.msra.mxu0 0.0
    %4425 = vmatpush.msra.mxu0 0.0
    %4426 = vmatpush.msra.mxu0 0.0
    %4427 = vmatpush.msra.mxu0 0.0
    %4428 = vmatpush.msra.mxu0 0.0
    %4429 = vmatpush.msra.mxu0 0.0
    %4430 = vmatpush.msra.mxu0 %v4364
    %4431 = vmatpush.msra.mxu0 %v4305
    %4432 = vmatmul.f32.gmra.mxu0 %v4357
    %v4433 = vpop.f32.mrf.mxu0
    %v4434 = vadd.f32 %v4333, %v4433
    %4435 = vdwg.mxu0
    %4436 = vmatpush.msra.mxu0 0.0
    %4437 = vmatpush.msra.mxu0 0.0
    %4438 = vmatpush.msra.mxu0 0.0
    %4439 = vmatpush.msra.mxu0 0.0
    %4440 = vmatpush.msra.mxu0 0.0
    %4441 = vmatpush.msra.mxu0 0.0
    %4442 = vmatpush.msra.mxu0 0.0
    %4443 = vmatpush.msra.mxu0 0.0
    %4444 = vmatpush.msra.mxu0 0.0
    %4445 = vmatpush.msra.mxu0 0.0
    %4446 = vmatpush.msra.mxu0 0.0
    %4447 = vmatpush.msra.mxu0 0.0
    %4448 = vmatpush.msra.mxu0 0.0
    %4449 = vmatpush.msra.mxu0 0.0
    %4450 = vmatpush.msra.mxu0 %v4367
    %4451 = vmatpush.msra.mxu0 %v4306
    %4452 = vmatmul.f32.gmra.mxu0 %v4357
    %v4453 = vpop.f32.mrf.mxu0
    %v4454 = vadd.f32 %v4334, %v4453
    %4455 = vdwg.mxu0
    %4456 = vmatpush.msra.mxu0 0.0
    %4457 = vmatpush.msra.mxu0 0.0
    %4458 = vmatpush.msra.mxu0 0.0
    %4459 = vmatpush.msra.mxu0 0.0
    %4460 = vmatpush.msra.mxu0 0.0
    %4461 = vmatpush.msra.mxu0 0.0
    %4462 = vmatpush.msra.mxu0 0.0
    %4463 = vmatpush.msra.mxu0 0.0
    %4464 = vmatpush.msra.mxu0 0.0
    %4465 = vmatpush.msra.mxu0 0.0
    %4466 = vmatpush.msra.mxu0 0.0
    %4467 = vmatpush.msra.mxu0 0.0
    %4468 = vmatpush.msra.mxu0 0.0
    %4469 = vmatpush.msra.mxu0 0.0
    %4470 = vmatpush.msra.mxu0 %v4370
    %4471 = vmatpush.msra.mxu0 %v4307
    %4472 = vmatmul.f32.gmra.mxu0 %v4357
    %v4473 = vpop.f32.mrf.mxu0
    %v4474 = vadd.f32 %v4335, %v4473
    %4475 = vdwg.mxu0
    %4476 = vmatpush.msra.mxu0 0.0
    %4477 = vmatpush.msra.mxu0 0.0
    %4478 = vmatpush.msra.mxu0 0.0
    %4479 = vmatpush.msra.mxu0 0.0
    %4480 = vmatpush.msra.mxu0 0.0
    %4481 = vmatpush.msra.mxu0 0.0
    %4482 = vmatpush.msra.mxu0 0.0
    %4483 = vmatpush.msra.mxu0 0.0
    %4484 = vmatpush.msra.mxu0 0.0
    %4485 = vmatpush.msra.mxu0 0.0
    %4486 = vmatpush.msra.mxu0 0.0
    %4487 = vmatpush.msra.mxu0 0.0
    %4488 = vmatpush.msra.mxu0 0.0
    %4489 = vmatpush.msra.mxu0 0.0
    %4490 = vmatpush.msra.mxu0 %v4373
    %4491 = vmatpush.msra.mxu0 %v4308
    %4492 = vmatmul.f32.gmra.mxu0 %v4357
    %v4493 = vpop.f32.mrf.mxu0
    %v4494 = vadd.f32 %v4336, %v4493
    %4495 = vdwg.mxu0
    %4496 = vmatpush.msra.mxu0 0.0
    %4497 = vmatpush.msra.mxu0 0.0
    %4498 = vmatpush.msra.mxu0 0.0
    %4499 = vmatpush.msra.mxu0 0.0
    %4500 = vmatpush.msra.mxu0 0.0
    %4501 = vmatpush.msra.mxu0 0.0
    %4502 = vmatpush.msra.mxu0 0.0
    %4503 = vmatpush.msra.mxu0 0.0
    %4504 = vmatpush.msra.mxu0 0.0
    %4505 = vmatpush.msra.mxu0 0.0
    %4506 = vmatpush.msra.mxu0 0.0
    %4507 = vmatpush.msra.mxu0 0.0
    %4508 = vmatpush.msra.mxu0 0.0
    %4509 = vmatpush.msra.mxu0 0.0
    %4510 = vmatpush.msra.mxu0 %v4376
    %4511 = vmatpush.msra.mxu0 %v4309
    %4512 = vmatmul.f32.gmra.mxu0 %v4357
    %v4513 = vpop.f32.mrf.mxu0
    %v4514 = vadd.f32 %v4337, %v4513
    %4515 = vdwg.mxu0
    %4516 = vmatpush.msra.mxu0 0.0
    %4517 = vmatpush.msra.mxu0 0.0
    %4518 = vmatpush.msra.mxu0 0.0
    %4519 = vmatpush.msra.mxu0 0.0
    %4520 = vmatpush.msra.mxu0 0.0
    %4521 = vmatpush.msra.mxu0 0.0
    %4522 = vmatpush.msra.mxu0 0.0
    %4523 = vmatpush.msra.mxu0 0.0
    %4524 = vmatpush.msra.mxu0 0.0
    %4525 = vmatpush.msra.mxu0 0.0
    %4526 = vmatpush.msra.mxu0 0.0
    %4527 = vmatpush.msra.mxu0 0.0
    %4528 = vmatpush.msra.mxu0 0.0
    %4529 = vmatpush.msra.mxu0 0.0
    %4530 = vmatpush.msra.mxu0 %v4379
    %4531 = vmatpush.msra.mxu0 %v4310
    %4532 = vmatmul.f32.gmra.mxu0 %v4357
    %v4533 = vpop.f32.mrf.mxu0
    %v4534 = vadd.f32 %v4338, %v4533
    %4535 = vdwg.mxu0
    %4536 = vmatpush.msra.mxu0 0.0
    %4537 = vmatpush.msra.mxu0 0.0
    %4538 = vmatpush.msra.mxu0 0.0
    %4539 = vmatpush.msra.mxu0 0.0
    %4540 = vmatpush.msra.mxu0 0.0
    %4541 = vmatpush.msra.mxu0 0.0
    %4542 = vmatpush.msra.mxu0 0.0
    %4543 = vmatpush.msra.mxu0 0.0
    %4544 = vmatpush.msra.mxu0 0.0
    %4545 = vmatpush.msra.mxu0 0.0
    %4546 = vmatpush.msra.mxu0 0.0
    %4547 = vmatpush.msra.mxu0 0.0
    %4548 = vmatpush.msra.mxu0 0.0
    %4549 = vmatpush.msra.mxu0 0.0
    %4550 = vmatpush.msra.mxu0 %v4382
    %4551 = vmatpush.msra.mxu0 %v4311
    %4552 = vmatmul.f32.gmra.mxu0 %v4357
    %v4553 = vpop.f32.mrf.mxu0
    %v4554 = vadd.f32 %v4339, %v4553
    %4555 = vdwg.mxu0
    %4556 = vmatpush.msra.mxu0 0.0
    %4557 = vmatpush.msra.mxu0 0.0
    %4558 = vmatpush.msra.mxu0 0.0
    %4559 = vmatpush.msra.mxu0 0.0
    %4560 = vmatpush.msra.mxu0 0.0
    %4561 = vmatpush.msra.mxu0 0.0
    %4562 = vmatpush.msra.mxu0 0.0
    %4563 = vmatpush.msra.mxu0 0.0
    %4564 = vmatpush.msra.mxu0 0.0
    %4565 = vmatpush.msra.mxu0 0.0
    %4566 = vmatpush.msra.mxu0 0.0
    %4567 = vmatpush.msra.mxu0 0.0
    %4568 = vmatpush.msra.mxu0 0.0
    %4569 = vmatpush.msra.mxu0 0.0
    %4570 = vmatpush.msra.mxu0 %v4385
    %4571 = vmatpush.msra.mxu0 %v4312
    %4572 = vmatmul.f32.gmra.mxu0 %v4357
    %v4573 = vpop.f32.mrf.mxu0
    %v4574 = vadd.f32 %v4340, %v4573
    %4575 = vdwg.mxu0
    %4576 = vmatpush.msra.mxu0 0.0
    %4577 = vmatpush.msra.mxu0 0.0
    %4578 = vmatpush.msra.mxu0 0.0
    %4579 = vmatpush.msra.mxu0 0.0
    %4580 = vmatpush.msra.mxu0 0.0
    %4581 = vmatpush.msra.mxu0 0.0
    %4582 = vmatpush.msra.mxu0 0.0
    %4583 = vmatpush.msra.mxu0 0.0
    %4584 = vmatpush.msra.mxu0 0.0
    %4585 = vmatpush.msra.mxu0 0.0
    %4586 = vmatpush.msra.mxu0 0.0
    %4587 = vmatpush.msra.mxu0 0.0
    %4588 = vmatpush.msra.mxu0 0.0
    %4589 = vmatpush.msra.mxu0 0.0
    %4590 = vmatpush.msra.mxu0 %v4388
    %4591 = vmatpush.msra.mxu0 %v4313
    %4592 = vmatmul.f32.gmra.mxu0 %v4357
    %v4593 = vpop.f32.mrf.mxu0
    %v4594 = vadd.f32 %v4341, %v4593
    %4595 = vdwg.mxu0
    %4596 = vmatpush.msra.mxu0 0.0
    %4597 = vmatpush.msra.mxu0 0.0
    %4598 = vmatpush.msra.mxu0 0.0
    %4599 = vmatpush.msra.mxu0 0.0
    %4600 = vmatpush.msra.mxu0 0.0
    %4601 = vmatpush.msra.mxu0 0.0
    %4602 = vmatpush.msra.mxu0 0.0
    %4603 = vmatpush.msra.mxu0 0.0
    %4604 = vmatpush.msra.mxu0 0.0
    %4605 = vmatpush.msra.mxu0 0.0
    %4606 = vmatpush.msra.mxu0 0.0
    %4607 = vmatpush.msra.mxu0 0.0
    %4608 = vmatpush.msra.mxu0 0.0
    %4609 = vmatpush.msra.mxu0 0.0
    %4610 = vmatpush.msra.mxu0 %v4391
    %4611 = vmatpush.msra.mxu0 %v4314
    %4612 = vmatmul.f32.gmra.mxu0 %v4357
    %v4613 = vpop.f32.mrf.mxu0
    %v4614 = vadd.f32 %v4342, %v4613
    %4615 = vdwg.mxu0
    %4616 = vmatpush.msra.mxu0 0.0
    %4617 = vmatpush.msra.mxu0 0.0
    %4618 = vmatpush.msra.mxu0 0.0
    %4619 = vmatpush.msra.mxu0 0.0
    %4620 = vmatpush.msra.mxu0 0.0
    %4621 = vmatpush.msra.mxu0 0.0
    %4622 = vmatpush.msra.mxu0 0.0
    %4623 = vmatpush.msra.mxu0 0.0
    %4624 = vmatpush.msra.mxu0 0.0
    %4625 = vmatpush.msra.mxu0 0.0
    %4626 = vmatpush.msra.mxu0 0.0
    %4627 = vmatpush.msra.mxu0 0.0
    %4628 = vmatpush.msra.mxu0 0.0
    %4629 = vmatpush.msra.mxu0 0.0
    %4630 = vmatpush.msra.mxu0 %v4394
    %4631 = vmatpush.msra.mxu0 %v4315
    %4632 = vmatmul.f32.gmra.mxu0 %v4357
    %v4633 = vpop.f32.mrf.mxu0
    %v4634 = vadd.f32 %v4343, %v4633
    %4635 = vdwg.mxu0
    %v4636 = vpack.c.bf16 %v4434, %v4414
    %v4637 = vpack.c.bf16 %v4474, %v4454
    %v4638 = vpack.c.bf16 %v4514, %v4494
    %v4639 = vpack.c.bf16 %v4554, %v4534
    %v4640 = vpack.c.bf16 %v4594, %v4574
    %v4641 = vpack.c.bf16 %v4634, %v4614
    %4642 = vst [vmem:[#allocation14] sm:$0xff] %v4636
    %4643 = vst [vmem:[#allocation14 + $0x8] sm:$0xff] %v4637
    %4644 = vst [vmem:[#allocation14 + $0x10] sm:$0xff] %v4638
    %4645 = vst [vmem:[#allocation14 + $0x18] sm:$0xff] %v4639
    %4646 = vst [vmem:[#allocation14 + $0x20] sm:$0xff] %v4640
    %4647 = vst [vmem:[#allocation14 + $0x28] sm:$0xff] %v4641
    // Predicated region
    $region66: #{tpu_custom_call.1} parent=1 // pred_check
      _
    $region67: #{tpu_custom_call.1} parent=1 // pred_check_branch
      %4649 = sbr.rel (0) target = $region69
    $region68: #{tpu_custom_call.1} parent=1 // pred_region
      %4651 = vsyncadd [#allocation4], 0
      %s4653 = sshll.u32 [#allocation14], 4
      %s4654 = int_to_ptr.vmem [resolvable:$true] %s4653
      %s4655 = sshll.u32 %s9, 4
      %s4656 = int_to_ptr.hbm [resolvable:$true] %s4655
      %4658 = dma.vmem_to_hbm [thread:$0]  %s4654, 768, %s4656, [#allocation4]
    $region69: #{tpu_custom_call.1} parent=1 // pred_fallthru
      _
    // Predicated region
    $region70: #{tpu_custom_call.1} parent=1 // pred_check
      _
    $region71: #{tpu_custom_call.1} parent=1 // pred_check_branch
      %4660 = sbr.rel (0) target = $region73
    $region72: #{tpu_custom_call.1} parent=1 // pred_region
      %4662 = dma.done [#allocation4], 768
    $region73: #{tpu_custom_call.1} parent=1 // pred_fallthru
      _
    %4663 = vsyncpa [#allocation3], 1
    %4664 = vsyncpa [#allocation6], 1
    %4665 = vsyncpa [#allocation9], 1
    %4666 = vsyncpa [#allocation12], 1
    %4667 = vsyncpa [#allocation4], 1

</llo_original>
